<compile_context>
chip_gen: v6e
topology: v6e:2x2x1
jax: 0.10.0
libtpu: 0.0.40
codegen_flags: <defaults>
</compile_context>

<pallas_src>
import functools
import numpy as np
import jax
import jax.numpy as jnp
from jax import lax
from jax.experimental import pallas as pl
from jax.experimental.pallas import tpu as pltpu

PAD = -1
NEG_INF = -1e9
LN_EPS = 1e-5

# Budgets fit the smallest default scoped-VMEM limit (16 MiB on v5e).
_MHA_VMEM_BUDGET = 8 * 1024 * 1024
_ROW_VMEM_BUDGET = 12 * 1024 * 1024


# --------------------------- tiling helpers ----------------------------------

def _row_tile(m, per_row_bytes, cap=1024, budget=_ROW_VMEM_BUDGET):
    """Row tile for flattened (rows, D) kernels.

    Returns the full extent when it fits (block == full array is always a legal
    block shape); otherwise the largest multiple of 8 <= cap that stays inside
    the VMEM budget (a pl.cdiv grid handles the ragged tail)."""
    if m <= cap and m * per_row_bytes <= budget:
        return m
    tm = min(cap, m, max(8, budget // max(per_row_bytes, 1)))
    return max(8, (tm // 8) * 8)


def _mha_batch_tile(b, lq, lk, d_model, n_head, d_k, d_v,
                    budget=_MHA_VMEM_BUDGET):
    """Largest divisor of the batch whose fused-MHA working set fits the budget."""
    dq, dv = n_head * d_k, n_head * d_v
    per_batch = (2 * 2 * (lq + lk) * d_model      # bf16 activation blocks, 2x buffered
                 + 2 * 2 * lq * d_model           # bf16 output block, 2x buffered
                 + 4 * lq * (2 * dq + dv)         # f32 q/k/v
                 + 4 * 4 * lq * lk                # f32 scores / softmax temps
                 + 2 * lq * dv                    # bf16 ctx scratch
                 + 8 * (lq + lk))                 # masks / bias
    for bt in range(b, 0, -1):
        if b % bt == 0 and bt * per_batch <= budget:
            return bt
    return 1


# --------------------------- in-kernel helpers --------------------------------

def _attention_heads(q, k, v, bias, ctx_ref, *, n_head, d_k, d_v, scale):
    """Per-head scaled-dot-product attention, batched over the batch tile with a
    single-batch-dim dot_general; each head's context is written directly into
    the merged-head VMEM scratch (no lane-axis concat)."""
    bt, lq, _ = q.shape
    for h in range(n_head):                                    # static & small
        qh = q[:, :, h * d_k:(h + 1) * d_k].astype(jnp.bfloat16)
        kh = k[:, :, h * d_k:(h + 1) * d_k].astype(jnp.bfloat16)
        vh = v[:, :, h * d_v:(h + 1) * d_v].astype(jnp.bfloat16)
        s = jnp.einsum('bqd,bkd->bqk', qh, kh,
                       preferred_element_type=jnp.float32) * scale + bias
        s = s - jnp.max(s, axis=-1, keepdims=True)
        e = jnp.exp(s)
        p = e * pl.reciprocal(jnp.sum(e, axis=-1, keepdims=True), approx=True)
        ctx_h = jnp.einsum('bqk,bkd->bqd', p.astype(jnp.bfloat16), vh,
                           preferred_element_type=jnp.float32)
        ctx_ref[:, h * d_v:(h + 1) * d_v] = (
            ctx_h.reshape(bt * lq, d_v).astype(ctx_ref.dtype))


def _proj_residual_ln_store(ctx_ref, wo_ref, bo_ref, resid, g_ref, beta_ref,
                            qkeep, o_ref):
    """Output projection + residual + LayerNorm + pad-row zeroing + bf16 store."""
    out = jnp.dot(ctx_ref[...], wo_ref[...],
                  preferred_element_type=jnp.float32) + bo_ref[...]
    y = out + resid
    mu = jnp.mean(y, axis=-1, keepdims=True)
    var = jnp.mean(jnp.square(y - mu), axis=-1, keepdims=True)
    y = (y - mu) * lax.rsqrt(var + LN_EPS) * g_ref[...] + beta_ref[...]
    bt, lq, d = o_ref.shape
    o_ref[...] = (y.reshape(bt, lq, d) * qkeep).astype(o_ref.dtype)


# --------------------------- Pallas kernels ----------------------------------

def _mha_self_kernel(x_ref, kpad_ref, qkeep_ref, wqkv_ref, bqkv_ref,
                     wo_ref, bo_ref, g_ref, beta_ref, o_ref, ctx_ref,
                     *, n_head, d_k, d_v, scale, causal):
    """Fused self-attention sublayer over a (Bt, L, D) batch tile:
       fused QKV proj -> per-head attention -> out proj -> +residual -> LN -> pad-zero."""
    bt, l, d = x_ref.shape
    dq = n_head * d_k
    x2 = x_ref[...].reshape(bt * l, d)                        # bf16 rows (also residual)
    qkv = jnp.dot(x2, wqkv_ref[...],
                  preferred_element_type=jnp.float32) + bqkv_ref[...]
    q = qkv[:, :dq].reshape(bt, l, dq)
    k = qkv[:, dq:2 * dq].reshape(bt, l, dq)
    v = qkv[:, 2 * dq:].reshape(bt, l, n_head * d_v)
    bias = jnp.broadcast_to(kpad_ref[...], (bt, l, l))        # key-pad additive bias
    if causal:
        r = lax.broadcasted_iota(jnp.int32, (l, l), 0)
        c = lax.broadcasted_iota(jnp.int32, (l, l), 1)
        bias = bias + jnp.where(c > r, jnp.float32(NEG_INF),
                                jnp.float32(0.0))[None]
    _attention_heads(q, k, v, bias, ctx_ref,
                     n_head=n_head, d_k=d_k, d_v=d_v, scale=scale)
    _proj_residual_ln_store(ctx_ref, wo_ref, bo_ref, x2.astype(jnp.float32),
                            g_ref, beta_ref, qkeep_ref[...], o_ref)


def _mha_cross_kernel(q_ref, kv_ref, kpad_ref, qkeep_ref, wq_ref, bq_ref,
                      wkv_ref, bkv_ref, wo_ref, bo_ref, g_ref, beta_ref,
                      o_ref, ctx_ref, *, n_head, d_k, d_v, scale):
    """Fused decoder cross-attention sublayer over a (Bt, Lq, D) batch tile."""
    bt, lq, d = q_ref.shape
    lk = kv_ref.shape[1]
    dq = n_head * d_k
    xq2 = q_ref[...].reshape(bt * lq, d)                      # bf16 rows (residual)
    xkv2 = kv_ref[...].reshape(bt * lk, d)
    q = (jnp.dot(xq2, wq_ref[...], preferred_element_type=jnp.float32)
         + bq_ref[...]).reshape(bt, lq, dq)
    kv = jnp.dot(xkv2, wkv_ref[...],
                 preferred_element_type=jnp.float32) + bkv_ref[...]
    k = kv[:, :dq].reshape(bt, lk, dq)
    v = kv[:, dq:].reshape(bt, lk, n_head * d_v)
    bias = jnp.broadcast_to(kpad_ref[...], (bt, lq, lk))
    _attention_heads(q, k, v, bias, ctx_ref,
                     n_head=n_head, d_k=d_k, d_v=d_v, scale=scale)
    _proj_residual_ln_store(ctx_ref, wo_ref, bo_ref, xq2.astype(jnp.float32),
                            g_ref, beta_ref, qkeep_ref[...], o_ref)


def _ffn_kernel(x_ref, keep_ref, w1_ref, b1_ref, w2_ref, b2_ref,
                g_ref, beta_ref, o_ref):
    """Fused FFN sublayer: relu(x@w1+b1)@w2+b2 + residual + LN + pad-zero."""
    x = x_ref[...]                                            # (tm, D) bf16
    h = jnp.dot(x, w1_ref[...], preferred_element_type=jnp.float32) + b1_ref[...]
    h = jnp.maximum(h, 0.0)
    out = jnp.dot(h.astype(jnp.bfloat16), w2_ref[...],
                  preferred_element_type=jnp.float32) + b2_ref[...]
    y = out + x.astype(jnp.float32)
    mu = jnp.mean(y, axis=-1, keepdims=True)
    var = jnp.mean(jnp.square(y - mu), axis=-1, keepdims=True)
    y = (y - mu) * lax.rsqrt(var + LN_EPS) * g_ref[...] + beta_ref[...]
    o_ref[...] = (y * keep_ref[...]).astype(o_ref.dtype)


def _embed_kernel(x_ref, pe_ref, w_ref, b_ref, o_ref):
    # flattened rows: (tm, Din) @ (Din, D) + b + positional encoding, fused.
    h = jnp.dot(x_ref[...], w_ref[...], preferred_element_type=jnp.float32)
    o_ref[...] = (h + b_ref[...] + pe_ref[...]).astype(o_ref.dtype)


# --------------------------- pallas_call wrappers -----------------------------

def embed(x, pos_enc, w, b):
    B, L, Din = x.shape
    D = w.shape[1]
    M = B * L
    per_row = 2 * 2 * Din + 2 * 2 * D + 4 * D
    tm = _row_tile(M, per_row)
    x2 = x.reshape(M, Din).astype(jnp.bfloat16)
    pe2 = pos_enc.reshape(M, D).astype(jnp.float32)
    out = pl.pallas_call(
        _embed_kernel,
        out_shape=jax.ShapeDtypeStruct((M, D), jnp.bfloat16),
        grid=(pl.cdiv(M, tm),),
        in_specs=[
            pl.BlockSpec((tm, Din), lambda i: (i, 0)),
            pl.BlockSpec((tm, D), lambda i: (i, 0)),
            pl.BlockSpec((Din, D), lambda i: (0, 0)),
            pl.BlockSpec((1, D), lambda i: (0, 0)),
        ],
        out_specs=pl.BlockSpec((tm, D), lambda i: (i, 0)),
        compiler_params=pltpu.CompilerParams(dimension_semantics=("parallel",)),
    )(x2, pe2, w, b.reshape(1, D))
    return out.reshape(B, L, D)


def mha_self_sublayer(p, x, kpad_bias, q_keep, cfg, causal):
    B, L, D = x.shape
    H, d_k, d_v = cfg['n_head'], cfg['d_k'], cfg['d_v']
    dq, dv = H * d_k, H * d_v
    Bt = _mha_batch_tile(B, L, L, D, H, d_k, d_v)
    kernel = functools.partial(_mha_self_kernel, n_head=H, d_k=d_k, d_v=d_v,
                               scale=1.0 / float(np.sqrt(d_k)), causal=causal)
    return pl.pallas_call(
        kernel,
        out_shape=jax.ShapeDtypeStruct((B, L, D), jnp.bfloat16),
        grid=(B // Bt,),
        in_specs=[
            pl.BlockSpec((Bt, L, D), lambda b: (b, 0, 0)),
            pl.BlockSpec((Bt, 1, L), lambda b: (b, 0, 0)),
            pl.BlockSpec((Bt, L, 1), lambda b: (b, 0, 0)),
            pl.BlockSpec((D, 2 * dq + dv), lambda b: (0, 0)),
            pl.BlockSpec((1, 2 * dq + dv), lambda b: (0, 0)),
            pl.BlockSpec((dv, D), lambda b: (0, 0)),
            pl.BlockSpec((1, D), lambda b: (0, 0)),
            pl.BlockSpec((1, D), lambda b: (0, 0)),
            pl.BlockSpec((1, D), lambda b: (0, 0)),
        ],
        out_specs=pl.BlockSpec((Bt, L, D), lambda b: (b, 0, 0)),
        scratch_shapes=[pltpu.VMEM((Bt * L, dv), jnp.bfloat16)],
        compiler_params=pltpu.CompilerParams(dimension_semantics=("parallel",)),
    )(x, kpad_bias, q_keep,
      p['wqkv'], p['bqkv'].reshape(1, 2 * dq + dv),
      p['wo'], p['bo'].reshape(1, D),
      p['ln_g'].reshape(1, D), p['ln_b'].reshape(1, D))


def mha_cross_sublayer(p, x_q, x_kv, kpad_bias, q_keep, cfg):
    B, Lq, D = x_q.shape
    Lk = x_kv.shape[1]
    H, d_k, d_v = cfg['n_head'], cfg['d_k'], cfg['d_v']
    dq, dv = H * d_k, H * d_v
    Bt = _mha_batch_tile(B, Lq, Lk, D, H, d_k, d_v)
    kernel = functools.partial(_mha_cross_kernel, n_head=H, d_k=d_k, d_v=d_v,
                               scale=1.0 / float(np.sqrt(d_k)))
    return pl.pallas_call(
        kernel,
        out_shape=jax.ShapeDtypeStruct((B, Lq, D), jnp.bfloat16),
        grid=(B // Bt,),
        in_specs=[
            pl.BlockSpec((Bt, Lq, D), lambda b: (b, 0, 0)),
            pl.BlockSpec((Bt, Lk, D), lambda b: (b, 0, 0)),
            pl.BlockSpec((Bt, 1, Lk), lambda b: (b, 0, 0)),
            pl.BlockSpec((Bt, Lq, 1), lambda b: (b, 0, 0)),
            pl.BlockSpec((D, dq), lambda b: (0, 0)),
            pl.BlockSpec((1, dq), lambda b: (0, 0)),
            pl.BlockSpec((D, dq + dv), lambda b: (0, 0)),
            pl.BlockSpec((1, dq + dv), lambda b: (0, 0)),
            pl.BlockSpec((dv, D), lambda b: (0, 0)),
            pl.BlockSpec((1, D), lambda b: (0, 0)),
            pl.BlockSpec((1, D), lambda b: (0, 0)),
            pl.BlockSpec((1, D), lambda b: (0, 0)),
        ],
        out_specs=pl.BlockSpec((Bt, Lq, D), lambda b: (b, 0, 0)),
        scratch_shapes=[pltpu.VMEM((Bt * Lq, dv), jnp.bfloat16)],
        compiler_params=pltpu.CompilerParams(dimension_semantics=("parallel",)),
    )(x_q, x_kv, kpad_bias, q_keep,
      p['wq'], p['bq'].reshape(1, dq),
      p['wkv'], p['bkv'].reshape(1, dq + dv),
      p['wo'], p['bo'].reshape(1, D),
      p['ln_g'].reshape(1, D), p['ln_b'].reshape(1, D))


def ffn_sublayer(p, x, q_keep):
    B, L, D = x.shape
    Dh = p['w1'].shape[1]
    M = B * L
    per_row = 2 * 2 * D * 2 + 4 * Dh + 8 * D      # bf16 i/o 2x buffered + f32 temps
    tm = _row_tile(M, per_row)
    x2 = x.reshape(M, D)
    keep2 = q_keep.reshape(M, 1)
    out = pl.pallas_call(
        _ffn_kernel,
        out_shape=jax.ShapeDtypeStruct((M, D), jnp.bfloat16),
        grid=(pl.cdiv(M, tm),),
        in_specs=[
            pl.BlockSpec((tm, D), lambda i: (i, 0)),
            pl.BlockSpec((tm, 1), lambda i: (i, 0)),
            pl.BlockSpec((D, Dh), lambda i: (0, 0)),
            pl.BlockSpec((1, Dh), lambda i: (0, 0)),
            pl.BlockSpec((Dh, D), lambda i: (0, 0)),
            pl.BlockSpec((1, D), lambda i: (0, 0)),
            pl.BlockSpec((1, D), lambda i: (0, 0)),
            pl.BlockSpec((1, D), lambda i: (0, 0)),
        ],
        out_specs=pl.BlockSpec((tm, D), lambda i: (i, 0)),
        compiler_params=pltpu.CompilerParams(dimension_semantics=("parallel",)),
    )(x2, keep2, p['w1'], p['b1'].reshape(1, Dh), p['w2'],
      p['b2'].reshape(1, D), p['ln_g'].reshape(1, D), p['ln_b'].reshape(1, D))
    return out.reshape(B, L, D)


# --------------------------- model structure ----------------------------------

def get_sinusoid_encoding_table(n_position, d_hid, padding_idx=None):
    def cal_angle(position, hid_idx):
        return position / np.power(10000, 2 * (hid_idx // 2) / d_hid)
    table = np.array([[cal_angle(p, j) for j in range(d_hid)]
                      for p in range(n_position)])
    table[:, 0::2] = np.sin(table[:, 0::2])
    table[:, 1::2] = np.cos(table[:, 1::2])
    if padding_idx is not None:
        table[padding_idx] = 0.0
    return jnp.asarray(table, dtype=jnp.float32)


def encoder_forward(p, cfg, src_seq, src_pos, use_mask=False):
    kpad = jnp.where(src_pos == PAD, jnp.float32(NEG_INF),
                     jnp.float32(0.0))[:, None, :]                # (B,1,Ls)
    qkeep = (src_pos != PAD).astype(jnp.float32)[:, :, None]      # (B,Ls,1)
    # TODO(synk): data-dependent positional-table gather stays in plain JAX.
    pe = p['pos_table'][src_pos + 1]
    x = embed(src_seq, pe, p['emb_w'], p['emb_b'])
    for lp in p['layers']:
        x = mha_self_sublayer(lp['slf_attn'], x, kpad, qkeep, cfg,
                              causal=use_mask)
        x = ffn_sublayer(lp['ffn'], x, qkeep)
    return x


def decoder_forward(p, cfg, tgt_seq, tgt_pos, src_pos, enc_output, use_mask=True):
    slf_kpad = jnp.where(tgt_pos == PAD, jnp.float32(NEG_INF),
                         jnp.float32(0.0))[:, None, :]            # (B,1,Lt)
    enc_kpad = jnp.where(src_pos == PAD, jnp.float32(NEG_INF),
                         jnp.float32(0.0))[:, None, :]            # (B,1,Ls)
    qkeep = (tgt_pos != PAD).astype(jnp.float32)[:, :, None]      # (B,Lt,1)
    pe = p['pos_table'][tgt_pos + 1]
    x = embed(tgt_seq, pe, p['emb_w'], p['emb_b'])
    for lp in p['layers']:
        x = mha_self_sublayer(lp['slf_attn'], x, slf_kpad, qkeep, cfg,
                              causal=use_mask)
        x = mha_cross_sublayer(lp['enc_attn'], x, enc_output, enc_kpad, qkeep,
                               cfg)
        x = ffn_sublayer(lp['ffn'], x, qkeep)
    return x


def transformer_forward(params, src_seq, src_pos, tgt_seq, tgt_pos, *,
                        cfg_enc, cfg_dec, use_mask_enc=False, use_mask_dec=True):
    enc_output = encoder_forward(params['encoder'], cfg_enc, src_seq, src_pos,
                                 use_mask=use_mask_enc)
    dec_output = decoder_forward(params['decoder'], cfg_dec, tgt_seq, tgt_pos,
                                 src_pos, enc_output, use_mask=use_mask_dec)
    return dec_output.astype(jnp.float32)


# --------------------------- parameter init ----------------------------------

def init_linear_params(key, d_in, d_out):
    kw, kb = jax.random.split(key)
    std = float(np.sqrt(2.0 / (d_in + d_out)))
    w = std * jax.random.normal(kw, (d_in, d_out), jnp.float32)
    b = 0.01 * jax.random.normal(kb, (d_out,), jnp.float32)
    return w, b


def init_mha_params(key, d_model, n_head, d_k, d_v):
    ks = jax.random.split(key, 4)
    wq, bq = init_linear_params(ks[0], d_model, n_head * d_k)
    wk, bk = init_linear_params(ks[1], d_model, n_head * d_k)
    wv, bv = init_linear_params(ks[2], d_model, n_head * d_v)
    wo, bo = init_linear_params(ks[3], n_head * d_v, d_model)
    bf = jnp.bfloat16
    return dict(
        # fused q|k|v projection for self-attention (one MXU pass over x)
        wqkv=jnp.concatenate([wq, wk, wv], axis=1).astype(bf),
        bqkv=jnp.concatenate([bq, bk, bv], axis=0),
        # split q and k|v projections for decoder cross-attention
        wq=wq.astype(bf), bq=bq,
        wkv=jnp.concatenate([wk, wv], axis=1).astype(bf),
        bkv=jnp.concatenate([bk, bv], axis=0),
        wo=wo.astype(bf), bo=bo,
        ln_g=jnp.ones((d_model,), jnp.float32),
        ln_b=jnp.zeros((d_model,), jnp.float32))


def init_ffn_params(key, d_model, d_inner):
    k1, k2 = jax.random.split(key)
    w1, b1 = init_linear_params(k1, d_model, d_inner)
    w2, b2 = init_linear_params(k2, d_inner, d_model)
    return dict(w1=w1.astype(jnp.bfloat16), b1=b1,
                w2=w2.astype(jnp.bfloat16), b2=b2,
                ln_g=jnp.ones((d_model,), jnp.float32),
                ln_b=jnp.zeros((d_model,), jnp.float32))


def init_encdec_params(key, d_in, len_max, cfg, decoder=False):
    keys = jax.random.split(key, 2 + cfg['n_layers'])
    emb_w, emb_b = init_linear_params(keys[0], d_in, cfg['d_model'])
    layers = []
    for li in range(cfg['n_layers']):
        lkeys = jax.random.split(keys[2 + li], 3)
        layer = dict(
            slf_attn=init_mha_params(lkeys[0], cfg['d_model'], cfg['n_head'],
                                     cfg['d_k'], cfg['d_v']),
            ffn=init_ffn_params(lkeys[2], cfg['d_model'], cfg['d_inner']),
        )
        if decoder:
            layer['enc_attn'] = init_mha_params(lkeys[1], cfg['d_model'],
                                                cfg['n_head'], cfg['d_k'],
                                                cfg['d_v'])
        layers.append(layer)
    return dict(emb_w=emb_w.astype(jnp.bfloat16), emb_b=emb_b,
                pos_table=get_sinusoid_encoding_table(len_max + 1,
                                                      cfg['d_model'],
                                                      padding_idx=0),
                layers=layers)


# --------------------------------- main ---------------------------------------

if __name__ == "__main__":
    # small shapes: batch=2, src len=8, tgt len=8, d_model=32
    B, L_SRC, L_TGT = 2, 8, 8
    D_SRC, D_TGT = 6, 5
    LEN_MAX = 16
    cfg = dict(n_layers=2, n_head=2, d_k=16, d_v=16, d_model=32, d_inner=64)
    cfg_enc = cfg
    cfg_dec = cfg

    root = jax.random.PRNGKey(0)
    k_enc, k_dec, k_src, k_tgt = jax.random.split(root, 4)

    params = dict(
        encoder=init_encdec_params(k_enc, D_SRC, LEN_MAX, cfg_enc, decoder=False),
        decoder=init_encdec_params(k_dec, D_TGT, LEN_MAX, cfg_dec, decoder=True),
    )

    # vector_input=True for both encoder and decoder (Linear embeddings).
    src_seq = jax.random.normal(k_src, (B, L_SRC, D_SRC), jnp.float32)
    tgt_seq = jax.random.normal(k_tgt, (B, L_TGT, D_TGT), jnp.float32)
    # positions 0..L-1, with the last two positions of batch 1 padded (=-1)
    src_pos = jnp.broadcast_to(jnp.arange(L_SRC, dtype=jnp.int32), (B, L_SRC))
    tgt_pos = jnp.broadcast_to(jnp.arange(L_TGT, dtype=jnp.int32), (B, L_TGT))
    src_pos = src_pos.at[1, -2:].set(PAD)
    tgt_pos = tgt_pos.at[1, -2:].set(PAD)

    fwd = jax.jit(functools.partial(transformer_forward,
                                    cfg_enc=cfg_enc, cfg_dec=cfg_dec,
                                    use_mask_enc=False, use_mask_dec=True))
    dec_output = fwd(params, src_seq, src_pos, tgt_seq, tgt_pos)
    dec_output = jax.block_until_ready(dec_output)

    assert dec_output.shape == (B, L_TGT, cfg['d_model'])
    assert bool(jnp.all(jnp.isfinite(dec_output)))
    print("KERNEL_OK")
</pallas_src>

<mosaic_0001>
module attributes {stable_mosaic.version = 11 : i64} {
  func.func @_embed_kernel(%arg0: i32, %arg1: memref<16x6xbf16, #tpu.memory_space<vmem>>, %arg2: memref<16x32xf32, #tpu.memory_space<vmem>>, %arg3: memref<6x32xbf16, #tpu.memory_space<vmem>>, %arg4: memref<1x32xf32, #tpu.memory_space<vmem>>, %arg5: memref<16x32xbf16, #tpu.memory_space<vmem>>) attributes {dimension_semantics = [#tpu.dimension_semantics<parallel>], iteration_bounds = array<i64: 1>, scalar_prefetch = 0 : i64, scratch_operands = 0 : i64, tpu.core_type = #tpu.core_type<tc>, window_params = [{transform_indices = @transform_0, window_bounds = array<i64: 16, 6>}, {transform_indices = @transform_1, window_bounds = array<i64: 16, 32>}, {pipeline_mode = #tpu.pipeline_mode<synchronous>, transform_indices = @transform_2, window_bounds = array<i64: 6, 32>}, {pipeline_mode = #tpu.pipeline_mode<synchronous>, transform_indices = @transform_3, window_bounds = array<i64: 1, 32>}, {transform_indices = @transform_4, window_bounds = array<i64: 16, 32>}]} {
    %c0 = arith.constant 0 : index
    %c0_0 = arith.constant 0 : index
    %0 = vector.load %arg1[%c0, %c0_0] : memref<16x6xbf16, #tpu.memory_space<vmem>>, vector<16x6xbf16>
    %c0_1 = arith.constant 0 : index
    %c0_2 = arith.constant 0 : index
    %1 = vector.load %arg3[%c0_1, %c0_2] : memref<6x32xbf16, #tpu.memory_space<vmem>>, vector<6x32xbf16>
    %cst = arith.constant dense<0.000000e+00> : vector<16x32xf32>
    %2 = tpu.matmul %0, %1, %cst {dimension_numbers = #tpu.dot_dimension_numbers<[1], [0], [0], [1], [0, 0, 1, 1], [], []>} : vector<16x6xbf16>, vector<6x32xbf16>, vector<16x32xf32> -> vector<16x32xf32>
    %c0_3 = arith.constant 0 : index
    %c0_4 = arith.constant 0 : index
    %3 = vector.load %arg4[%c0_3, %c0_4] : memref<1x32xf32, #tpu.memory_space<vmem>>, vector<1x32xf32>
    %4 = vector.broadcast %3 : vector<1x32xf32> to vector<16x32xf32>
    %5 = arith.addf %2, %4 : vector<16x32xf32>
    %c0_5 = arith.constant 0 : index
    %c0_6 = arith.constant 0 : index
    %6 = vector.load %arg2[%c0_5, %c0_6] : memref<16x32xf32, #tpu.memory_space<vmem>>, vector<16x32xf32>
    %7 = arith.addf %5, %6 : vector<16x32xf32>
    %8 = arith.truncf %7 : vector<16x32xf32> to vector<16x32xbf16>
    %c0_7 = arith.constant 0 : index
    %c0_8 = arith.constant 0 : index
    %9 = vector.load %arg5[%c0_7, %c0_8] : memref<16x32xbf16, #tpu.memory_space<vmem>>, vector<16x32xbf16>
    tpu.vector_store %arg5[%c0_7, %c0_8], %8 {strides = array<i32>} : memref<16x32xbf16, #tpu.memory_space<vmem>>, vector<16x32xbf16>,
    return
  }
  func.func @transform_0(%arg0: i32) -> (i32, i32) {
    %c0_i32 = arith.constant 0 : i32
    %c0_i32_0 = arith.constant 0 : i32
    return %arg0, %c0_i32 : i32, i32
  }
  func.func @transform_1(%arg0: i32) -> (i32, i32) {
    %c0_i32 = arith.constant 0 : i32
    %c0_i32_0 = arith.constant 0 : i32
    return %arg0, %c0_i32 : i32, i32
  }
  func.func @transform_2(%arg0: i32) -> (i32, i32) {
    %c0_i32 = arith.constant 0 : i32
    %c0_i32_0 = arith.constant 0 : i32
    %c0_i32_1 = arith.constant 0 : i32
    return %c0_i32, %c0_i32_0 : i32, i32
  }
  func.func @transform_3(%arg0: i32) -> (i32, i32) {
    %c0_i32 = arith.constant 0 : i32
    %c0_i32_0 = arith.constant 0 : i32
    %c0_i32_1 = arith.constant 0 : i32
    return %c0_i32, %c0_i32_0 : i32, i32
  }
  func.func @transform_4(%arg0: i32) -> (i32, i32) {
    %c0_i32 = arith.constant 0 : i32
    %c0_i32_0 = arith.constant 0 : i32
    return %arg0, %c0_i32 : i32, i32
  }
}

module attributes {stable_mosaic.version = 11 : i64} {
  func.func @_mha_self_kernel(%arg0: i32, %arg1: memref<2x8x32xbf16, #tpu.memory_space<vmem>>, %arg2: memref<2x1x8xf32, #tpu.memory_space<vmem>>, %arg3: memref<2x8x1xf32, #tpu.memory_space<vmem>>, %arg4: memref<32x96xbf16, #tpu.memory_space<vmem>>, %arg5: memref<1x96xf32, #tpu.memory_space<vmem>>, %arg6: memref<32x32xbf16, #tpu.memory_space<vmem>>, %arg7: memref<1x32xf32, #tpu.memory_space<vmem>>, %arg8: memref<1x32xf32, #tpu.memory_space<vmem>>, %arg9: memref<1x32xf32, #tpu.memory_space<vmem>>, %arg10: memref<2x8x32xbf16, #tpu.memory_space<vmem>>, %arg11: memref<16x32xbf16, #tpu.memory_space<vmem>>) attributes {dimension_semantics = [#tpu.dimension_semantics<parallel>], iteration_bounds = array<i64: 1>, scalar_prefetch = 0 : i64, scratch_operands = 1 : i64, tpu.core_type = #tpu.core_type<tc>, window_params = [{transform_indices = @transform_0, window_bounds = array<i64: 2, 8, 32>}, {transform_indices = @transform_1, window_bounds = array<i64: 2, 1, 8>}, {transform_indices = @transform_2, window_bounds = array<i64: 2, 8, 1>}, {pipeline_mode = #tpu.pipeline_mode<synchronous>, transform_indices = @transform_3, window_bounds = array<i64: 32, 96>}, {pipeline_mode = #tpu.pipeline_mode<synchronous>, transform_indices = @transform_4, window_bounds = array<i64: 1, 96>}, {pipeline_mode = #tpu.pipeline_mode<synchronous>, transform_indices = @transform_5, window_bounds = array<i64: 32, 32>}, {pipeline_mode = #tpu.pipeline_mode<synchronous>, transform_indices = @transform_6, window_bounds = array<i64: 1, 32>}, {pipeline_mode = #tpu.pipeline_mode<synchronous>, transform_indices = @transform_7, window_bounds = array<i64: 1, 32>}, {pipeline_mode = #tpu.pipeline_mode<synchronous>, transform_indices = @transform_8, window_bounds = array<i64: 1, 32>}, {transform_indices = @transform_9, window_bounds = array<i64: 2, 8, 32>}]} {
    %c0 = arith.constant 0 : index
    %c0_0 = arith.constant 0 : index
    %c0_1 = arith.constant 0 : index
    %0 = vector.load %arg1[%c0, %c0_0, %c0_1] : memref<2x8x32xbf16, #tpu.memory_space<vmem>>, vector<2x8x32xbf16>
    %1 = vector.shape_cast %0 : vector<2x8x32xbf16> to vector<16x32xbf16>
    %c0_2 = arith.constant 0 : index
    %c0_3 = arith.constant 0 : index
    %2 = vector.load %arg4[%c0_2, %c0_3] : memref<32x96xbf16, #tpu.memory_space<vmem>>, vector<32x96xbf16>
    %cst = arith.constant dense<0.000000e+00> : vector<16x96xf32>
    %3 = tpu.matmul %1, %2, %cst {dimension_numbers = #tpu.dot_dimension_numbers<[1], [0], [0], [1], [0, 0, 1, 1], [], []>} : vector<16x32xbf16>, vector<32x96xbf16>, vector<16x96xf32> -> vector<16x96xf32>
    %c0_4 = arith.constant 0 : index
    %c0_5 = arith.constant 0 : index
    %4 = vector.load %arg5[%c0_4, %c0_5] : memref<1x96xf32, #tpu.memory_space<vmem>>, vector<1x96xf32>
    %5 = vector.broadcast %4 : vector<1x96xf32> to vector<16x96xf32>
    %6 = arith.addf %3, %5 : vector<16x96xf32>
    %7 = vector.extract_strided_slice %6 {offsets = [0, 0], sizes = [16, 32], strides = [1, 1]} : vector<16x96xf32> to vector<16x32xf32>
    %8 = vector.shape_cast %7 : vector<16x32xf32> to vector<2x8x32xf32>
    %9 = vector.extract_strided_slice %6 {offsets = [0, 32], sizes = [16, 32], strides = [1, 1]} : vector<16x96xf32> to vector<16x32xf32>
    %10 = vector.shape_cast %9 : vector<16x32xf32> to vector<2x8x32xf32>
    %11 = vector.extract_strided_slice %6 {offsets = [0, 64], sizes = [16, 32], strides = [1, 1]} : vector<16x96xf32> to vector<16x32xf32>
    %12 = vector.shape_cast %11 : vector<16x32xf32> to vector<2x8x32xf32>
    %c0_6 = arith.constant 0 : index
    %c0_7 = arith.constant 0 : index
    %c0_8 = arith.constant 0 : index
    %13 = vector.load %arg2[%c0_6, %c0_7, %c0_8] : memref<2x1x8xf32, #tpu.memory_space<vmem>>, vector<2x1x8xf32>
    %14 = vector.shape_cast %13 : vector<2x1x8xf32> to vector<2x1x8xf32>
    %15 = vector.broadcast %14 : vector<2x1x8xf32> to vector<2x8x8xf32>
    %16 = vector.extract_strided_slice %8 {offsets = [0, 0, 0], sizes = [2, 8, 16], strides = [1, 1, 1]} : vector<2x8x32xf32> to vector<2x8x16xf32>
    %17 = arith.truncf %16 : vector<2x8x16xf32> to vector<2x8x16xbf16>
    %18 = vector.extract_strided_slice %10 {offsets = [0, 0, 0], sizes = [2, 8, 16], strides = [1, 1, 1]} : vector<2x8x32xf32> to vector<2x8x16xf32>
    %19 = arith.truncf %18 : vector<2x8x16xf32> to vector<2x8x16xbf16>
    %20 = vector.extract_strided_slice %12 {offsets = [0, 0, 0], sizes = [2, 8, 16], strides = [1, 1, 1]} : vector<2x8x32xf32> to vector<2x8x16xf32>
    %21 = arith.truncf %20 : vector<2x8x16xf32> to vector<2x8x16xbf16>
    "tpu.trace_start"() <{level = 10 : i32, message = "bqd,bkd->bqk"}> : () -> ()
    %cst_9 = arith.constant dense<0.000000e+00> : vector<2x8x8xf32>
    %22 = tpu.matmul %17, %19, %cst_9 {dimension_numbers = #tpu.dot_dimension_numbers<[2], [2], [1], [1], [0, 0, 0, 1, 1, 1], [0], [0]>} : vector<2x8x16xbf16>, vector<2x8x16xbf16>, vector<2x8x8xf32> -> vector<2x8x8xf32>
    "tpu.trace_stop"() : () -> ()
    %cst_10 = arith.constant 2.500000e-01 : f32
    %23 = vector.broadcast %cst_10 : f32 to vector<2x8x8xf32>
    %24 = arith.mulf %22, %23 : vector<2x8x8xf32>
    %25 = arith.addf %24, %15 : vector<2x8x8xf32>
    %cst_11 = arith.constant dense<0xFF800000> : vector<2x8xf32>
    %26 = vector.multi_reduction <maximumf>, %25, %cst_11 [2] : vector<2x8x8xf32> to vector<2x8xf32>
    %27 = vector.shape_cast %26 : vector<2x8xf32> to vector<2x8x1xf32>
    %28 = vector.broadcast %27 : vector<2x8x1xf32> to vector<2x8x8xf32>
    %29 = arith.subf %25, %28 : vector<2x8x8xf32>
    %30 = math.exp %29 : vector<2x8x8xf32>
    %cst_12 = arith.constant dense<0.000000e+00> : vector<2x8xf32>
    %31 = vector.multi_reduction <add>, %30, %cst_12 [2] : vector<2x8x8xf32> to vector<2x8xf32>
    %32 = vector.shape_cast %31 : vector<2x8xf32> to vector<2x8x1xf32>
    %33 = tpu.reciprocal %32 {approx = true} : vector<2x8x1xf32> -> vector<2x8x1xf32>
    %34 = vector.broadcast %33 : vector<2x8x1xf32> to vector<2x8x8xf32>
    %35 = arith.mulf %30, %34 : vector<2x8x8xf32>
    %36 = arith.truncf %35 : vector<2x8x8xf32> to vector<2x8x8xbf16>
    "tpu.trace_start"() <{level = 10 : i32, message = "bqk,bkd->bqd"}> : () -> ()
    %cst_13 = arith.constant dense<0.000000e+00> : vector<2x8x16xf32>
    %37 = tpu.matmul %36, %21, %cst_13 {dimension_numbers = #tpu.dot_dimension_numbers<[2], [1], [1], [2], [0, 0, 0, 1, 1, 2], [0], [0]>} : vector<2x8x8xbf16>, vector<2x8x16xbf16>, vector<2x8x16xf32> -> vector<2x8x16xf32>
    "tpu.trace_stop"() : () -> ()
    %38 = vector.shape_cast %37 : vector<2x8x16xf32> to vector<16x16xf32>
    %39 = arith.truncf %38 : vector<16x16xf32> to vector<16x16xbf16>
    %c0_14 = arith.constant 0 : index
    %c0_15 = arith.constant 0 : index
    %40 = vector.load %arg11[%c0_14, %c0_15] : memref<16x32xbf16, #tpu.memory_space<vmem>>, vector<16x16xbf16>
    tpu.vector_store %arg11[%c0_14, %c0_15], %39 {strides = array<i32>} : memref<16x32xbf16, #tpu.memory_space<vmem>>, vector<16x16xbf16>,
    %41 = vector.extract_strided_slice %8 {offsets = [0, 0, 16], sizes = [2, 8, 16], strides = [1, 1, 1]} : vector<2x8x32xf32> to vector<2x8x16xf32>
    %42 = arith.truncf %41 : vector<2x8x16xf32> to vector<2x8x16xbf16>
    %43 = vector.extract_strided_slice %10 {offsets = [0, 0, 16], sizes = [2, 8, 16], strides = [1, 1, 1]} : vector<2x8x32xf32> to vector<2x8x16xf32>
    %44 = arith.truncf %43 : vector<2x8x16xf32> to vector<2x8x16xbf16>
    %45 = vector.extract_strided_slice %12 {offsets = [0, 0, 16], sizes = [2, 8, 16], strides = [1, 1, 1]} : vector<2x8x32xf32> to vector<2x8x16xf32>
    %46 = arith.truncf %45 : vector<2x8x16xf32> to vector<2x8x16xbf16>
    "tpu.trace_start"() <{level = 10 : i32, message = "bqd,bkd->bqk"}> : () -> ()
    %cst_16 = arith.constant dense<0.000000e+00> : vector<2x8x8xf32>
    %47 = tpu.matmul %42, %44, %cst_16 {dimension_numbers = #tpu.dot_dimension_numbers<[2], [2], [1], [1], [0, 0, 0, 1, 1, 1], [0], [0]>} : vector<2x8x16xbf16>, vector<2x8x16xbf16>, vector<2x8x8xf32> -> vector<2x8x8xf32>
    "tpu.trace_stop"() : () -> ()
    %cst_17 = arith.constant 2.500000e-01 : f32
    %48 = vector.broadcast %cst_17 : f32 to vector<2x8x8xf32>
    %49 = arith.mulf %47, %48 : vector<2x8x8xf32>
    %50 = arith.addf %49, %15 : vector<2x8x8xf32>
    %cst_18 = arith.constant dense<0xFF800000> : vector<2x8xf32>
    %51 = vector.multi_reduction <maximumf>, %50, %cst_18 [2] : vector<2x8x8xf32> to vector<2x8xf32>
    %52 = vector.shape_cast %51 : vector<2x8xf32> to vector<2x8x1xf32>
    %53 = vector.broadcast %52 : vector<2x8x1xf32> to vector<2x8x8xf32>
    %54 = arith.subf %50, %53 : vector<2x8x8xf32>
    %55 = math.exp %54 : vector<2x8x8xf32>
    %cst_19 = arith.constant dense<0.000000e+00> : vector<2x8xf32>
    %56 = vector.multi_reduction <add>, %55, %cst_19 [2] : vector<2x8x8xf32> to vector<2x8xf32>
    %57 = vector.shape_cast %56 : vector<2x8xf32> to vector<2x8x1xf32>
    %58 = tpu.reciprocal %57 {approx = true} : vector<2x8x1xf32> -> vector<2x8x1xf32>
    %59 = vector.broadcast %58 : vector<2x8x1xf32> to vector<2x8x8xf32>
    %60 = arith.mulf %55, %59 : vector<2x8x8xf32>
    %61 = arith.truncf %60 : vector<2x8x8xf32> to vector<2x8x8xbf16>
    "tpu.trace_start"() <{level = 10 : i32, message = "bqk,bkd->bqd"}> : () -> ()
    %cst_20 = arith.constant dense<0.000000e+00> : vector<2x8x16xf32>
    %62 = tpu.matmul %61, %46, %cst_20 {dimension_numbers = #tpu.dot_dimension_numbers<[2], [1], [1], [2], [0, 0, 0, 1, 1, 2], [0], [0]>} : vector<2x8x8xbf16>, vector<2x8x16xbf16>, vector<2x8x16xf32> -> vector<2x8x16xf32>
    "tpu.trace_stop"() : () -> ()
    %63 = vector.shape_cast %62 : vector<2x8x16xf32> to vector<16x16xf32>
    %64 = arith.truncf %63 : vector<16x16xf32> to vector<16x16xbf16>
    %c0_21 = arith.constant 0 : index
    %c16 = arith.constant 16 : index
    %65 = vector.load %arg11[%c0_21, %c16] : memref<16x32xbf16, #tpu.memory_space<vmem>>, vector<16x16xbf16>
    tpu.vector_store %arg11[%c0_21, %c16], %64 {strides = array<i32>} : memref<16x32xbf16, #tpu.memory_space<vmem>>, vector<16x16xbf16>,
    %66 = arith.extf %1 : vector<16x32xbf16> to vector<16x32xf32>
    %c0_22 = arith.constant 0 : index
    %c0_23 = arith.constant 0 : index
    %c0_24 = arith.constant 0 : index
    %67 = vector.load %arg3[%c0_22, %c0_23, %c0_24] : memref<2x8x1xf32, #tpu.memory_space<vmem>>, vector<2x8x1xf32>
    %c0_25 = arith.constant 0 : index
    %c0_26 = arith.constant 0 : index
    %68 = vector.load %arg11[%c0_25, %c0_26] : memref<16x32xbf16, #tpu.memory_space<vmem>>, vector<16x32xbf16>
    %c0_27 = arith.constant 0 : index
    %c0_28 = arith.constant 0 : index
    %69 = vector.load %arg6[%c0_27, %c0_28] : memref<32x32xbf16, #tpu.memory_space<vmem>>, vector<32x32xbf16>
    %cst_29 = arith.constant dense<0.000000e+00> : vector<16x32xf32>
    %70 = tpu.matmul %68, %69, %cst_29 {dimension_numbers = #tpu.dot_dimension_numbers<[1], [0], [0], [1], [0, 0, 1, 1], [], []>} : vector<16x32xbf16>, vector<32x32xbf16>, vector<16x32xf32> -> vector<16x32xf32>
    %c0_30 = arith.constant 0 : index
    %c0_31 = arith.constant 0 : index
    %71 = vector.load %arg7[%c0_30, %c0_31] : memref<1x32xf32, #tpu.memory_space<vmem>>, vector<1x32xf32>
    %72 = vector.broadcast %71 : vector<1x32xf32> to vector<16x32xf32>
    %73 = arith.addf %70, %72 : vector<16x32xf32>
    %74 = arith.addf %73, %66 : vector<16x32xf32>
    %cst_32 = arith.constant dense<0.000000e+00> : vector<16xf32>
    %75 = vector.multi_reduction <add>, %74, %cst_32 [1] : vector<16x32xf32> to vector<16xf32>
    %76 = vector.shape_cast %75 : vector<16xf32> to vector<16x1xf32>
    %cst_33 = arith.constant 3.200000e+01 : f32
    %77 = vector.broadcast %cst_33 : f32 to vector<16x1xf32>
    %78 = arith.divf %76, %77 : vector<16x1xf32>
    %79 = vector.broadcast %78 : vector<16x1xf32> to vector<16x32xf32>
    %80 = arith.subf %74, %79 : vector<16x32xf32>
    %81 = arith.mulf %80, %80 : vector<16x32xf32>
    %cst_34 = arith.constant dense<0.000000e+00> : vector<16xf32>
    %82 = vector.multi_reduction <add>, %81, %cst_34 [1] : vector<16x32xf32> to vector<16xf32>
    %83 = vector.shape_cast %82 : vector<16xf32> to vector<16x1xf32>
    %cst_35 = arith.constant 3.200000e+01 : f32
    %84 = vector.broadcast %cst_35 : f32 to vector<16x1xf32>
    %85 = arith.divf %83, %84 : vector<16x1xf32>
    %86 = vector.broadcast %78 : vector<16x1xf32> to vector<16x32xf32>
    %87 = arith.subf %74, %86 : vector<16x32xf32>
    %cst_36 = arith.constant 9.99999974E-6 : f32
    %88 = vector.broadcast %cst_36 : f32 to vector<16x1xf32>
    %89 = arith.addf %85, %88 : vector<16x1xf32>
    %90 = math.rsqrt %89 : vector<16x1xf32>
    %91 = vector.broadcast %90 : vector<16x1xf32> to vector<16x32xf32>
    %92 = arith.mulf %87, %91 : vector<16x32xf32>
    %c0_37 = arith.constant 0 : index
    %c0_38 = arith.constant 0 : index
    %93 = vector.load %arg8[%c0_37, %c0_38] : memref<1x32xf32, #tpu.memory_space<vmem>>, vector<1x32xf32>
    %94 = vector.broadcast %93 : vector<1x32xf32> to vector<16x32xf32>
    %95 = arith.mulf %92, %94 : vector<16x32xf32>
    %c0_39 = arith.constant 0 : index
    %c0_40 = arith.constant 0 : index
    %96 = vector.load %arg9[%c0_39, %c0_40] : memref<1x32xf32, #tpu.memory_space<vmem>>, vector<1x32xf32>
    %97 = vector.broadcast %96 : vector<1x32xf32> to vector<16x32xf32>
    %98 = arith.addf %95, %97 : vector<16x32xf32>
    %99 = vector.shape_cast %98 : vector<16x32xf32> to vector<2x8x32xf32>
    %100 = vector.broadcast %67 : vector<2x8x1xf32> to vector<2x8x32xf32>
    %101 = arith.mulf %99, %100 : vector<2x8x32xf32>
    %102 = arith.truncf %101 : vector<2x8x32xf32> to vector<2x8x32xbf16>
    %c0_41 = arith.constant 0 : index
    %c0_42 = arith.constant 0 : index
    %c0_43 = arith.constant 0 : index
    %103 = vector.load %arg10[%c0_41, %c0_42, %c0_43] : memref<2x8x32xbf16, #tpu.memory_space<vmem>>, vector<2x8x32xbf16>
    tpu.vector_store %arg10[%c0_41, %c0_42, %c0_43], %102 {strides = array<i32>} : memref<2x8x32xbf16, #tpu.memory_space<vmem>>, vector<2x8x32xbf16>,
    return
  }
  func.func @transform_0(%arg0: i32) -> (i32, i32, i32) {
    %c0_i32 = arith.constant 0 : i32
    %c0_i32_0 = arith.constant 0 : i32
    %c0_i32_1 = arith.constant 0 : i32
    return %arg0, %c0_i32, %c0_i32_0 : i32, i32, i32
  }
  func.func @transform_1(%arg0: i32) -> (i32, i32, i32) {
    %c0_i32 = arith.constant 0 : i32
    %c0_i32_0 = arith.constant 0 : i32
    %c0_i32_1 = arith.constant 0 : i32
    return %arg0, %c0_i32, %c0_i32_0 : i32, i32, i32
  }
  func.func @transform_2(%arg0: i32) -> (i32, i32, i32) {
    %c0_i32 = arith.constant 0 : i32
    %c0_i32_0 = arith.constant 0 : i32
    %c0_i32_1 = arith.constant 0 : i32
    return %arg0, %c0_i32, %c0_i32_0 : i32, i32, i32
  }
  func.func @transform_3(%arg0: i32) -> (i32, i32) {
    %c0_i32 = arith.constant 0 : i32
    %c0_i32_0 = arith.constant 0 : i32
    %c0_i32_1 = arith.constant 0 : i32
    return %c0_i32, %c0_i32_0 : i32, i32
  }
  func.func @transform_4(%arg0: i32) -> (i32, i32) {
    %c0_i32 = arith.constant 0 : i32
    %c0_i32_0 = arith.constant 0 : i32
    %c0_i32_1 = arith.constant 0 : i32
    return %c0_i32, %c0_i32_0 : i32, i32
  }
  func.func @transform_5(%arg0: i32) -> (i32, i32) {
    %c0_i32 = arith.constant 0 : i32
    %c0_i32_0 = arith.constant 0 : i32
    %c0_i32_1 = arith.constant 0 : i32
    return %c0_i32, %c0_i32_0 : i32, i32
  }
  func.func @transform_6(%arg0: i32) -> (i32, i32) {
    %c0_i32 = arith.constant 0 : i32
    %c0_i32_0 = arith.constant 0 : i32
    %c0_i32_1 = arith.constant 0 : i32
    return %c0_i32, %c0_i32_0 : i32, i32
  }
  func.func @transform_7(%arg0: i32) -> (i32, i32) {
    %c0_i32 = arith.constant 0 : i32
    %c0_i32_0 = arith.constant 0 : i32
    %c0_i32_1 = arith.constant 0 : i32
    return %c0_i32, %c0_i32_0 : i32, i32
  }
  func.func @transform_8(%arg0: i32) -> (i32, i32) {
    %c0_i32 = arith.constant 0 : i32
    %c0_i32_0 = arith.constant 0 : i32
    %c0_i32_1 = arith.constant 0 : i32
    return %c0_i32, %c0_i32_0 : i32, i32
  }
  func.func @transform_9(%arg0: i32) -> (i32, i32, i32) {
    %c0_i32 = arith.constant 0 : i32
    %c0_i32_0 = arith.constant 0 : i32
    %c0_i32_1 = arith.constant 0 : i32
    return %arg0, %c0_i32, %c0_i32_0 : i32, i32, i32
  }
}

module attributes {stable_mosaic.version = 11 : i64} {
  func.func @_ffn_kernel(%arg0: i32, %arg1: memref<16x32xbf16, #tpu.memory_space<vmem>>, %arg2: memref<16x1xf32, #tpu.memory_space<vmem>>, %arg3: memref<32x64xbf16, #tpu.memory_space<vmem>>, %arg4: memref<1x64xf32, #tpu.memory_space<vmem>>, %arg5: memref<64x32xbf16, #tpu.memory_space<vmem>>, %arg6: memref<1x32xf32, #tpu.memory_space<vmem>>, %arg7: memref<1x32xf32, #tpu.memory_space<vmem>>, %arg8: memref<1x32xf32, #tpu.memory_space<vmem>>, %arg9: memref<16x32xbf16, #tpu.memory_space<vmem>>) attributes {dimension_semantics = [#tpu.dimension_semantics<parallel>], iteration_bounds = array<i64: 1>, scalar_prefetch = 0 : i64, scratch_operands = 0 : i64, tpu.core_type = #tpu.core_type<tc>, window_params = [{transform_indices = @transform_0, window_bounds = array<i64: 16, 32>}, {transform_indices = @transform_1, window_bounds = array<i64: 16, 1>}, {pipeline_mode = #tpu.pipeline_mode<synchronous>, transform_indices = @transform_2, window_bounds = array<i64: 32, 64>}, {pipeline_mode = #tpu.pipeline_mode<synchronous>, transform_indices = @transform_3, window_bounds = array<i64: 1, 64>}, {pipeline_mode = #tpu.pipeline_mode<synchronous>, transform_indices = @transform_4, window_bounds = array<i64: 64, 32>}, {pipeline_mode = #tpu.pipeline_mode<synchronous>, transform_indices = @transform_5, window_bounds = array<i64: 1, 32>}, {pipeline_mode = #tpu.pipeline_mode<synchronous>, transform_indices = @transform_6, window_bounds = array<i64: 1, 32>}, {pipeline_mode = #tpu.pipeline_mode<synchronous>, transform_indices = @transform_7, window_bounds = array<i64: 1, 32>}, {transform_indices = @transform_8, window_bounds = array<i64: 16, 32>}]} {
    %c0 = arith.constant 0 : index
    %c0_0 = arith.constant 0 : index
    %0 = vector.load %arg1[%c0, %c0_0] : memref<16x32xbf16, #tpu.memory_space<vmem>>, vector<16x32xbf16>
    %c0_1 = arith.constant 0 : index
    %c0_2 = arith.constant 0 : index
    %1 = vector.load %arg3[%c0_1, %c0_2] : memref<32x64xbf16, #tpu.memory_space<vmem>>, vector<32x64xbf16>
    %cst = arith.constant dense<0.000000e+00> : vector<16x64xf32>
    %2 = tpu.matmul %0, %1, %cst {dimension_numbers = #tpu.dot_dimension_numbers<[1], [0], [0], [1], [0, 0, 1, 1], [], []>} : vector<16x32xbf16>, vector<32x64xbf16>, vector<16x64xf32> -> vector<16x64xf32>
    %c0_3 = arith.constant 0 : index
    %c0_4 = arith.constant 0 : index
    %3 = vector.load %arg4[%c0_3, %c0_4] : memref<1x64xf32, #tpu.memory_space<vmem>>, vector<1x64xf32>
    %4 = vector.broadcast %3 : vector<1x64xf32> to vector<16x64xf32>
    %5 = arith.addf %2, %4 : vector<16x64xf32>
    %cst_5 = arith.constant 0.000000e+00 : f32
    %6 = vector.broadcast %cst_5 : f32 to vector<16x64xf32>
    %7 = arith.maximumf %5, %6 : vector<16x64xf32>
    %8 = arith.truncf %7 : vector<16x64xf32> to vector<16x64xbf16>
    %c0_6 = arith.constant 0 : index
    %c0_7 = arith.constant 0 : index
    %9 = vector.load %arg5[%c0_6, %c0_7] : memref<64x32xbf16, #tpu.memory_space<vmem>>, vector<64x32xbf16>
    %cst_8 = arith.constant dense<0.000000e+00> : vector<16x32xf32>
    %10 = tpu.matmul %8, %9, %cst_8 {dimension_numbers = #tpu.dot_dimension_numbers<[1], [0], [0], [1], [0, 0, 1, 1], [], []>} : vector<16x64xbf16>, vector<64x32xbf16>, vector<16x32xf32> -> vector<16x32xf32>
    %c0_9 = arith.constant 0 : index
    %c0_10 = arith.constant 0 : index
    %11 = vector.load %arg6[%c0_9, %c0_10] : memref<1x32xf32, #tpu.memory_space<vmem>>, vector<1x32xf32>
    %12 = vector.broadcast %11 : vector<1x32xf32> to vector<16x32xf32>
    %13 = arith.addf %10, %12 : vector<16x32xf32>
    %14 = arith.extf %0 : vector<16x32xbf16> to vector<16x32xf32>
    %15 = arith.addf %13, %14 : vector<16x32xf32>
    %cst_11 = arith.constant dense<0.000000e+00> : vector<16xf32>
    %16 = vector.multi_reduction <add>, %15, %cst_11 [1] : vector<16x32xf32> to vector<16xf32>
    %17 = vector.shape_cast %16 : vector<16xf32> to vector<16x1xf32>
    %cst_12 = arith.constant 3.200000e+01 : f32
    %18 = vector.broadcast %cst_12 : f32 to vector<16x1xf32>
    %19 = arith.divf %17, %18 : vector<16x1xf32>
    %20 = vector.broadcast %19 : vector<16x1xf32> to vector<16x32xf32>
    %21 = arith.subf %15, %20 : vector<16x32xf32>
    %22 = arith.mulf %21, %21 : vector<16x32xf32>
    %cst_13 = arith.constant dense<0.000000e+00> : vector<16xf32>
    %23 = vector.multi_reduction <add>, %22, %cst_13 [1] : vector<16x32xf32> to vector<16xf32>
    %24 = vector.shape_cast %23 : vector<16xf32> to vector<16x1xf32>
    %cst_14 = arith.constant 3.200000e+01 : f32
    %25 = vector.broadcast %cst_14 : f32 to vector<16x1xf32>
    %26 = arith.divf %24, %25 : vector<16x1xf32>
    %27 = vector.broadcast %19 : vector<16x1xf32> to vector<16x32xf32>
    %28 = arith.subf %15, %27 : vector<16x32xf32>
    %cst_15 = arith.constant 9.99999974E-6 : f32
    %29 = vector.broadcast %cst_15 : f32 to vector<16x1xf32>
    %30 = arith.addf %26, %29 : vector<16x1xf32>
    %31 = math.rsqrt %30 : vector<16x1xf32>
    %32 = vector.broadcast %31 : vector<16x1xf32> to vector<16x32xf32>
    %33 = arith.mulf %28, %32 : vector<16x32xf32>
    %c0_16 = arith.constant 0 : index
    %c0_17 = arith.constant 0 : index
    %34 = vector.load %arg7[%c0_16, %c0_17] : memref<1x32xf32, #tpu.memory_space<vmem>>, vector<1x32xf32>
    %35 = vector.broadcast %34 : vector<1x32xf32> to vector<16x32xf32>
    %36 = arith.mulf %33, %35 : vector<16x32xf32>
    %c0_18 = arith.constant 0 : index
    %c0_19 = arith.constant 0 : index
    %37 = vector.load %arg8[%c0_18, %c0_19] : memref<1x32xf32, #tpu.memory_space<vmem>>, vector<1x32xf32>
    %38 = vector.broadcast %37 : vector<1x32xf32> to vector<16x32xf32>
    %39 = arith.addf %36, %38 : vector<16x32xf32>
    %c0_20 = arith.constant 0 : index
    %c0_21 = arith.constant 0 : index
    %40 = vector.load %arg2[%c0_20, %c0_21] : memref<16x1xf32, #tpu.memory_space<vmem>>, vector<16x1xf32>
    %41 = vector.broadcast %40 : vector<16x1xf32> to vector<16x32xf32>
    %42 = arith.mulf %39, %41 : vector<16x32xf32>
    %43 = arith.truncf %42 : vector<16x32xf32> to vector<16x32xbf16>
    %c0_22 = arith.constant 0 : index
    %c0_23 = arith.constant 0 : index
    %44 = vector.load %arg9[%c0_22, %c0_23] : memref<16x32xbf16, #tpu.memory_space<vmem>>, vector<16x32xbf16>
    tpu.vector_store %arg9[%c0_22, %c0_23], %43 {strides = array<i32>} : memref<16x32xbf16, #tpu.memory_space<vmem>>, vector<16x32xbf16>,
    return
  }
  func.func @transform_0(%arg0: i32) -> (i32, i32) {
    %c0_i32 = arith.constant 0 : i32
    %c0_i32_0 = arith.constant 0 : i32
    return %arg0, %c0_i32 : i32, i32
  }
  func.func @transform_1(%arg0: i32) -> (i32, i32) {
    %c0_i32 = arith.constant 0 : i32
    %c0_i32_0 = arith.constant 0 : i32
    return %arg0, %c0_i32 : i32, i32
  }
  func.func @transform_2(%arg0: i32) -> (i32, i32) {
    %c0_i32 = arith.constant 0 : i32
    %c0_i32_0 = arith.constant 0 : i32
    %c0_i32_1 = arith.constant 0 : i32
    return %c0_i32, %c0_i32_0 : i32, i32
  }
  func.func @transform_3(%arg0: i32) -> (i32, i32) {
    %c0_i32 = arith.constant 0 : i32
    %c0_i32_0 = arith.constant 0 : i32
    %c0_i32_1 = arith.constant 0 : i32
    return %c0_i32, %c0_i32_0 : i32, i32
  }
  func.func @transform_4(%arg0: i32) -> (i32, i32) {
    %c0_i32 = arith.constant 0 : i32
    %c0_i32_0 = arith.constant 0 : i32
    %c0_i32_1 = arith.constant 0 : i32
    return %c0_i32, %c0_i32_0 : i32, i32
  }
  func.func @transform_5(%arg0: i32) -> (i32, i32) {
    %c0_i32 = arith.constant 0 : i32
    %c0_i32_0 = arith.constant 0 : i32
    %c0_i32_1 = arith.constant 0 : i32
    return %c0_i32, %c0_i32_0 : i32, i32
  }
  func.func @transform_6(%arg0: i32) -> (i32, i32) {
    %c0_i32 = arith.constant 0 : i32
    %c0_i32_0 = arith.constant 0 : i32
    %c0_i32_1 = arith.constant 0 : i32
    return %c0_i32, %c0_i32_0 : i32, i32
  }
  func.func @transform_7(%arg0: i32) -> (i32, i32) {
    %c0_i32 = arith.constant 0 : i32
    %c0_i32_0 = arith.constant 0 : i32
    %c0_i32_1 = arith.constant 0 : i32
    return %c0_i32, %c0_i32_0 : i32, i32
  }
  func.func @transform_8(%arg0: i32) -> (i32, i32) {
    %c0_i32 = arith.constant 0 : i32
    %c0_i32_0 = arith.constant 0 : i32
    return %arg0, %c0_i32 : i32, i32
  }
}

module attributes {stable_mosaic.version = 11 : i64} {
  func.func @_embed_kernel(%arg0: i32, %arg1: memref<16x5xbf16, #tpu.memory_space<vmem>>, %arg2: memref<16x32xf32, #tpu.memory_space<vmem>>, %arg3: memref<5x32xbf16, #tpu.memory_space<vmem>>, %arg4: memref<1x32xf32, #tpu.memory_space<vmem>>, %arg5: memref<16x32xbf16, #tpu.memory_space<vmem>>) attributes {dimension_semantics = [#tpu.dimension_semantics<parallel>], iteration_bounds = array<i64: 1>, scalar_prefetch = 0 : i64, scratch_operands = 0 : i64, tpu.core_type = #tpu.core_type<tc>, window_params = [{transform_indices = @transform_0, window_bounds = array<i64: 16, 5>}, {transform_indices = @transform_1, window_bounds = array<i64: 16, 32>}, {pipeline_mode = #tpu.pipeline_mode<synchronous>, transform_indices = @transform_2, window_bounds = array<i64: 5, 32>}, {pipeline_mode = #tpu.pipeline_mode<synchronous>, transform_indices = @transform_3, window_bounds = array<i64: 1, 32>}, {transform_indices = @transform_4, window_bounds = array<i64: 16, 32>}]} {
    %c0 = arith.constant 0 : index
    %c0_0 = arith.constant 0 : index
    %0 = vector.load %arg1[%c0, %c0_0] : memref<16x5xbf16, #tpu.memory_space<vmem>>, vector<16x5xbf16>
    %c0_1 = arith.constant 0 : index
    %c0_2 = arith.constant 0 : index
    %1 = vector.load %arg3[%c0_1, %c0_2] : memref<5x32xbf16, #tpu.memory_space<vmem>>, vector<5x32xbf16>
    %cst = arith.constant dense<0.000000e+00> : vector<16x32xf32>
    %2 = tpu.matmul %0, %1, %cst {dimension_numbers = #tpu.dot_dimension_numbers<[1], [0], [0], [1], [0, 0, 1, 1], [], []>} : vector<16x5xbf16>, vector<5x32xbf16>, vector<16x32xf32> -> vector<16x32xf32>
    %c0_3 = arith.constant 0 : index
    %c0_4 = arith.constant 0 : index
    %3 = vector.load %arg4[%c0_3, %c0_4] : memref<1x32xf32, #tpu.memory_space<vmem>>, vector<1x32xf32>
    %4 = vector.broadcast %3 : vector<1x32xf32> to vector<16x32xf32>
    %5 = arith.addf %2, %4 : vector<16x32xf32>
    %c0_5 = arith.constant 0 : index
    %c0_6 = arith.constant 0 : index
    %6 = vector.load %arg2[%c0_5, %c0_6] : memref<16x32xf32, #tpu.memory_space<vmem>>, vector<16x32xf32>
    %7 = arith.addf %5, %6 : vector<16x32xf32>
    %8 = arith.truncf %7 : vector<16x32xf32> to vector<16x32xbf16>
    %c0_7 = arith.constant 0 : index
    %c0_8 = arith.constant 0 : index
    %9 = vector.load %arg5[%c0_7, %c0_8] : memref<16x32xbf16, #tpu.memory_space<vmem>>, vector<16x32xbf16>
    tpu.vector_store %arg5[%c0_7, %c0_8], %8 {strides = array<i32>} : memref<16x32xbf16, #tpu.memory_space<vmem>>, vector<16x32xbf16>,
    return
  }
  func.func @transform_0(%arg0: i32) -> (i32, i32) {
    %c0_i32 = arith.constant 0 : i32
    %c0_i32_0 = arith.constant 0 : i32
    return %arg0, %c0_i32 : i32, i32
  }
  func.func @transform_1(%arg0: i32) -> (i32, i32) {
    %c0_i32 = arith.constant 0 : i32
    %c0_i32_0 = arith.constant 0 : i32
    return %arg0, %c0_i32 : i32, i32
  }
  func.func @transform_2(%arg0: i32) -> (i32, i32) {
    %c0_i32 = arith.constant 0 : i32
    %c0_i32_0 = arith.constant 0 : i32
    %c0_i32_1 = arith.constant 0 : i32
    return %c0_i32, %c0_i32_0 : i32, i32
  }
  func.func @transform_3(%arg0: i32) -> (i32, i32) {
    %c0_i32 = arith.constant 0 : i32
    %c0_i32_0 = arith.constant 0 : i32
    %c0_i32_1 = arith.constant 0 : i32
    return %c0_i32, %c0_i32_0 : i32, i32
  }
  func.func @transform_4(%arg0: i32) -> (i32, i32) {
    %c0_i32 = arith.constant 0 : i32
    %c0_i32_0 = arith.constant 0 : i32
    return %arg0, %c0_i32 : i32, i32
  }
}

module attributes {stable_mosaic.version = 11 : i64} {
  func.func @_mha_self_kernel(%arg0: i32, %arg1: memref<2x8x32xbf16, #tpu.memory_space<vmem>>, %arg2: memref<2x1x8xf32, #tpu.memory_space<vmem>>, %arg3: memref<2x8x1xf32, #tpu.memory_space<vmem>>, %arg4: memref<32x96xbf16, #tpu.memory_space<vmem>>, %arg5: memref<1x96xf32, #tpu.memory_space<vmem>>, %arg6: memref<32x32xbf16, #tpu.memory_space<vmem>>, %arg7: memref<1x32xf32, #tpu.memory_space<vmem>>, %arg8: memref<1x32xf32, #tpu.memory_space<vmem>>, %arg9: memref<1x32xf32, #tpu.memory_space<vmem>>, %arg10: memref<2x8x32xbf16, #tpu.memory_space<vmem>>, %arg11: memref<16x32xbf16, #tpu.memory_space<vmem>>) attributes {dimension_semantics = [#tpu.dimension_semantics<parallel>], iteration_bounds = array<i64: 1>, scalar_prefetch = 0 : i64, scratch_operands = 1 : i64, tpu.core_type = #tpu.core_type<tc>, window_params = [{transform_indices = @transform_0, window_bounds = array<i64: 2, 8, 32>}, {transform_indices = @transform_1, window_bounds = array<i64: 2, 1, 8>}, {transform_indices = @transform_2, window_bounds = array<i64: 2, 8, 1>}, {pipeline_mode = #tpu.pipeline_mode<synchronous>, transform_indices = @transform_3, window_bounds = array<i64: 32, 96>}, {pipeline_mode = #tpu.pipeline_mode<synchronous>, transform_indices = @transform_4, window_bounds = array<i64: 1, 96>}, {pipeline_mode = #tpu.pipeline_mode<synchronous>, transform_indices = @transform_5, window_bounds = array<i64: 32, 32>}, {pipeline_mode = #tpu.pipeline_mode<synchronous>, transform_indices = @transform_6, window_bounds = array<i64: 1, 32>}, {pipeline_mode = #tpu.pipeline_mode<synchronous>, transform_indices = @transform_7, window_bounds = array<i64: 1, 32>}, {pipeline_mode = #tpu.pipeline_mode<synchronous>, transform_indices = @transform_8, window_bounds = array<i64: 1, 32>}, {transform_indices = @transform_9, window_bounds = array<i64: 2, 8, 32>}]} {
    %c0 = arith.constant 0 : index
    %c0_0 = arith.constant 0 : index
    %c0_1 = arith.constant 0 : index
    %0 = vector.load %arg1[%c0, %c0_0, %c0_1] : memref<2x8x32xbf16, #tpu.memory_space<vmem>>, vector<2x8x32xbf16>
    %1 = vector.shape_cast %0 : vector<2x8x32xbf16> to vector<16x32xbf16>
    %c0_2 = arith.constant 0 : index
    %c0_3 = arith.constant 0 : index
    %2 = vector.load %arg4[%c0_2, %c0_3] : memref<32x96xbf16, #tpu.memory_space<vmem>>, vector<32x96xbf16>
    %cst = arith.constant dense<0.000000e+00> : vector<16x96xf32>
    %3 = tpu.matmul %1, %2, %cst {dimension_numbers = #tpu.dot_dimension_numbers<[1], [0], [0], [1], [0, 0, 1, 1], [], []>} : vector<16x32xbf16>, vector<32x96xbf16>, vector<16x96xf32> -> vector<16x96xf32>
    %c0_4 = arith.constant 0 : index
    %c0_5 = arith.constant 0 : index
    %4 = vector.load %arg5[%c0_4, %c0_5] : memref<1x96xf32, #tpu.memory_space<vmem>>, vector<1x96xf32>
    %5 = vector.broadcast %4 : vector<1x96xf32> to vector<16x96xf32>
    %6 = arith.addf %3, %5 : vector<16x96xf32>
    %7 = vector.extract_strided_slice %6 {offsets = [0, 0], sizes = [16, 32], strides = [1, 1]} : vector<16x96xf32> to vector<16x32xf32>
    %8 = vector.shape_cast %7 : vector<16x32xf32> to vector<2x8x32xf32>
    %9 = vector.extract_strided_slice %6 {offsets = [0, 32], sizes = [16, 32], strides = [1, 1]} : vector<16x96xf32> to vector<16x32xf32>
    %10 = vector.shape_cast %9 : vector<16x32xf32> to vector<2x8x32xf32>
    %11 = vector.extract_strided_slice %6 {offsets = [0, 64], sizes = [16, 32], strides = [1, 1]} : vector<16x96xf32> to vector<16x32xf32>
    %12 = vector.shape_cast %11 : vector<16x32xf32> to vector<2x8x32xf32>
    %c0_6 = arith.constant 0 : index
    %c0_7 = arith.constant 0 : index
    %c0_8 = arith.constant 0 : index
    %13 = vector.load %arg2[%c0_6, %c0_7, %c0_8] : memref<2x1x8xf32, #tpu.memory_space<vmem>>, vector<2x1x8xf32>
    %14 = vector.shape_cast %13 : vector<2x1x8xf32> to vector<2x1x8xf32>
    %15 = vector.broadcast %14 : vector<2x1x8xf32> to vector<2x8x8xf32>
    %16 = tpu.iota {dimensions = array<i32: 0>} : vector<8x8xi32>
    %17 = tpu.iota {dimensions = array<i32: 1>} : vector<8x8xi32>
    %18 = arith.cmpi sgt, %17, %16 : vector<8x8xi32>
    %cst_9 = arith.constant -1.000000e+09 : f32
    %cst_10 = arith.constant 0.000000e+00 : f32
    %19 = vector.broadcast %cst_9 : f32 to vector<8x8xf32>
    %20 = vector.broadcast %cst_10 : f32 to vector<8x8xf32>
    %21 = arith.select %18, %19, %20 : vector<8x8xi1>, vector<8x8xf32>
    %22 = vector.shape_cast %21 : vector<8x8xf32> to vector<1x8x8xf32>
    %23 = vector.broadcast %22 : vector<1x8x8xf32> to vector<2x8x8xf32>
    %24 = arith.addf %15, %23 : vector<2x8x8xf32>
    %25 = vector.extract_strided_slice %8 {offsets = [0, 0, 0], sizes = [2, 8, 16], strides = [1, 1, 1]} : vector<2x8x32xf32> to vector<2x8x16xf32>
    %26 = arith.truncf %25 : vector<2x8x16xf32> to vector<2x8x16xbf16>
    %27 = vector.extract_strided_slice %10 {offsets = [0, 0, 0], sizes = [2, 8, 16], strides = [1, 1, 1]} : vector<2x8x32xf32> to vector<2x8x16xf32>
    %28 = arith.truncf %27 : vector<2x8x16xf32> to vector<2x8x16xbf16>
    %29 = vector.extract_strided_slice %12 {offsets = [0, 0, 0], sizes = [2, 8, 16], strides = [1, 1, 1]} : vector<2x8x32xf32> to vector<2x8x16xf32>
    %30 = arith.truncf %29 : vector<2x8x16xf32> to vector<2x8x16xbf16>
    "tpu.trace_start"() <{level = 10 : i32, message = "bqd,bkd->bqk"}> : () -> ()
    %cst_11 = arith.constant dense<0.000000e+00> : vector<2x8x8xf32>
    %31 = tpu.matmul %26, %28, %cst_11 {dimension_numbers = #tpu.dot_dimension_numbers<[2], [2], [1], [1], [0, 0, 0, 1, 1, 1], [0], [0]>} : vector<2x8x16xbf16>, vector<2x8x16xbf16>, vector<2x8x8xf32> -> vector<2x8x8xf32>
    "tpu.trace_stop"() : () -> ()
    %cst_12 = arith.constant 2.500000e-01 : f32
    %32 = vector.broadcast %cst_12 : f32 to vector<2x8x8xf32>
    %33 = arith.mulf %31, %32 : vector<2x8x8xf32>
    %34 = arith.addf %33, %24 : vector<2x8x8xf32>
    %cst_13 = arith.constant dense<0xFF800000> : vector<2x8xf32>
    %35 = vector.multi_reduction <maximumf>, %34, %cst_13 [2] : vector<2x8x8xf32> to vector<2x8xf32>
    %36 = vector.shape_cast %35 : vector<2x8xf32> to vector<2x8x1xf32>
    %37 = vector.broadcast %36 : vector<2x8x1xf32> to vector<2x8x8xf32>
    %38 = arith.subf %34, %37 : vector<2x8x8xf32>
    %39 = math.exp %38 : vector<2x8x8xf32>
    %cst_14 = arith.constant dense<0.000000e+00> : vector<2x8xf32>
    %40 = vector.multi_reduction <add>, %39, %cst_14 [2] : vector<2x8x8xf32> to vector<2x8xf32>
    %41 = vector.shape_cast %40 : vector<2x8xf32> to vector<2x8x1xf32>
    %42 = tpu.reciprocal %41 {approx = true} : vector<2x8x1xf32> -> vector<2x8x1xf32>
    %43 = vector.broadcast %42 : vector<2x8x1xf32> to vector<2x8x8xf32>
    %44 = arith.mulf %39, %43 : vector<2x8x8xf32>
    %45 = arith.truncf %44 : vector<2x8x8xf32> to vector<2x8x8xbf16>
    "tpu.trace_start"() <{level = 10 : i32, message = "bqk,bkd->bqd"}> : () -> ()
    %cst_15 = arith.constant dense<0.000000e+00> : vector<2x8x16xf32>
    %46 = tpu.matmul %45, %30, %cst_15 {dimension_numbers = #tpu.dot_dimension_numbers<[2], [1], [1], [2], [0, 0, 0, 1, 1, 2], [0], [0]>} : vector<2x8x8xbf16>, vector<2x8x16xbf16>, vector<2x8x16xf32> -> vector<2x8x16xf32>
    "tpu.trace_stop"() : () -> ()
    %47 = vector.shape_cast %46 : vector<2x8x16xf32> to vector<16x16xf32>
    %48 = arith.truncf %47 : vector<16x16xf32> to vector<16x16xbf16>
    %c0_16 = arith.constant 0 : index
    %c0_17 = arith.constant 0 : index
    %49 = vector.load %arg11[%c0_16, %c0_17] : memref<16x32xbf16, #tpu.memory_space<vmem>>, vector<16x16xbf16>
    tpu.vector_store %arg11[%c0_16, %c0_17], %48 {strides = array<i32>} : memref<16x32xbf16, #tpu.memory_space<vmem>>, vector<16x16xbf16>,
    %50 = vector.extract_strided_slice %8 {offsets = [0, 0, 16], sizes = [2, 8, 16], strides = [1, 1, 1]} : vector<2x8x32xf32> to vector<2x8x16xf32>
    %51 = arith.truncf %50 : vector<2x8x16xf32> to vector<2x8x16xbf16>
    %52 = vector.extract_strided_slice %10 {offsets = [0, 0, 16], sizes = [2, 8, 16], strides = [1, 1, 1]} : vector<2x8x32xf32> to vector<2x8x16xf32>
    %53 = arith.truncf %52 : vector<2x8x16xf32> to vector<2x8x16xbf16>
    %54 = vector.extract_strided_slice %12 {offsets = [0, 0, 16], sizes = [2, 8, 16], strides = [1, 1, 1]} : vector<2x8x32xf32> to vector<2x8x16xf32>
    %55 = arith.truncf %54 : vector<2x8x16xf32> to vector<2x8x16xbf16>
    "tpu.trace_start"() <{level = 10 : i32, message = "bqd,bkd->bqk"}> : () -> ()
    %cst_18 = arith.constant dense<0.000000e+00> : vector<2x8x8xf32>
    %56 = tpu.matmul %51, %53, %cst_18 {dimension_numbers = #tpu.dot_dimension_numbers<[2], [2], [1], [1], [0, 0, 0, 1, 1, 1], [0], [0]>} : vector<2x8x16xbf16>, vector<2x8x16xbf16>, vector<2x8x8xf32> -> vector<2x8x8xf32>
    "tpu.trace_stop"() : () -> ()
    %cst_19 = arith.constant 2.500000e-01 : f32
    %57 = vector.broadcast %cst_19 : f32 to vector<2x8x8xf32>
    %58 = arith.mulf %56, %57 : vector<2x8x8xf32>
    %59 = arith.addf %58, %24 : vector<2x8x8xf32>
    %cst_20 = arith.constant dense<0xFF800000> : vector<2x8xf32>
    %60 = vector.multi_reduction <maximumf>, %59, %cst_20 [2] : vector<2x8x8xf32> to vector<2x8xf32>
    %61 = vector.shape_cast %60 : vector<2x8xf32> to vector<2x8x1xf32>
    %62 = vector.broadcast %61 : vector<2x8x1xf32> to vector<2x8x8xf32>
    %63 = arith.subf %59, %62 : vector<2x8x8xf32>
    %64 = math.exp %63 : vector<2x8x8xf32>
    %cst_21 = arith.constant dense<0.000000e+00> : vector<2x8xf32>
    %65 = vector.multi_reduction <add>, %64, %cst_21 [2] : vector<2x8x8xf32> to vector<2x8xf32>
    %66 = vector.shape_cast %65 : vector<2x8xf32> to vector<2x8x1xf32>
    %67 = tpu.reciprocal %66 {approx = true} : vector<2x8x1xf32> -> vector<2x8x1xf32>
    %68 = vector.broadcast %67 : vector<2x8x1xf32> to vector<2x8x8xf32>
    %69 = arith.mulf %64, %68 : vector<2x8x8xf32>
    %70 = arith.truncf %69 : vector<2x8x8xf32> to vector<2x8x8xbf16>
    "tpu.trace_start"() <{level = 10 : i32, message = "bqk,bkd->bqd"}> : () -> ()
    %cst_22 = arith.constant dense<0.000000e+00> : vector<2x8x16xf32>
    %71 = tpu.matmul %70, %55, %cst_22 {dimension_numbers = #tpu.dot_dimension_numbers<[2], [1], [1], [2], [0, 0, 0, 1, 1, 2], [0], [0]>} : vector<2x8x8xbf16>, vector<2x8x16xbf16>, vector<2x8x16xf32> -> vector<2x8x16xf32>
    "tpu.trace_stop"() : () -> ()
    %72 = vector.shape_cast %71 : vector<2x8x16xf32> to vector<16x16xf32>
    %73 = arith.truncf %72 : vector<16x16xf32> to vector<16x16xbf16>
    %c0_23 = arith.constant 0 : index
    %c16 = arith.constant 16 : index
    %74 = vector.load %arg11[%c0_23, %c16] : memref<16x32xbf16, #tpu.memory_space<vmem>>, vector<16x16xbf16>
    tpu.vector_store %arg11[%c0_23, %c16], %73 {strides = array<i32>} : memref<16x32xbf16, #tpu.memory_space<vmem>>, vector<16x16xbf16>,
    %75 = arith.extf %1 : vector<16x32xbf16> to vector<16x32xf32>
    %c0_24 = arith.constant 0 : index
    %c0_25 = arith.constant 0 : index
    %c0_26 = arith.constant 0 : index
    %76 = vector.load %arg3[%c0_24, %c0_25, %c0_26] : memref<2x8x1xf32, #tpu.memory_space<vmem>>, vector<2x8x1xf32>
    %c0_27 = arith.constant 0 : index
    %c0_28 = arith.constant 0 : index
    %77 = vector.load %arg11[%c0_27, %c0_28] : memref<16x32xbf16, #tpu.memory_space<vmem>>, vector<16x32xbf16>
    %c0_29 = arith.constant 0 : index
    %c0_30 = arith.constant 0 : index
    %78 = vector.load %arg6[%c0_29, %c0_30] : memref<32x32xbf16, #tpu.memory_space<vmem>>, vector<32x32xbf16>
    %cst_31 = arith.constant dense<0.000000e+00> : vector<16x32xf32>
    %79 = tpu.matmul %77, %78, %cst_31 {dimension_numbers = #tpu.dot_dimension_numbers<[1], [0], [0], [1], [0, 0, 1, 1], [], []>} : vector<16x32xbf16>, vector<32x32xbf16>, vector<16x32xf32> -> vector<16x32xf32>
    %c0_32 = arith.constant 0 : index
    %c0_33 = arith.constant 0 : index
    %80 = vector.load %arg7[%c0_32, %c0_33] : memref<1x32xf32, #tpu.memory_space<vmem>>, vector<1x32xf32>
    %81 = vector.broadcast %80 : vector<1x32xf32> to vector<16x32xf32>
    %82 = arith.addf %79, %81 : vector<16x32xf32>
    %83 = arith.addf %82, %75 : vector<16x32xf32>
    %cst_34 = arith.constant dense<0.000000e+00> : vector<16xf32>
    %84 = vector.multi_reduction <add>, %83, %cst_34 [1] : vector<16x32xf32> to vector<16xf32>
    %85 = vector.shape_cast %84 : vector<16xf32> to vector<16x1xf32>
    %cst_35 = arith.constant 3.200000e+01 : f32
    %86 = vector.broadcast %cst_35 : f32 to vector<16x1xf32>
    %87 = arith.divf %85, %86 : vector<16x1xf32>
    %88 = vector.broadcast %87 : vector<16x1xf32> to vector<16x32xf32>
    %89 = arith.subf %83, %88 : vector<16x32xf32>
    %90 = arith.mulf %89, %89 : vector<16x32xf32>
    %cst_36 = arith.constant dense<0.000000e+00> : vector<16xf32>
    %91 = vector.multi_reduction <add>, %90, %cst_36 [1] : vector<16x32xf32> to vector<16xf32>
    %92 = vector.shape_cast %91 : vector<16xf32> to vector<16x1xf32>
    %cst_37 = arith.constant 3.200000e+01 : f32
    %93 = vector.broadcast %cst_37 : f32 to vector<16x1xf32>
    %94 = arith.divf %92, %93 : vector<16x1xf32>
    %95 = vector.broadcast %87 : vector<16x1xf32> to vector<16x32xf32>
    %96 = arith.subf %83, %95 : vector<16x32xf32>
    %cst_38 = arith.constant 9.99999974E-6 : f32
    %97 = vector.broadcast %cst_38 : f32 to vector<16x1xf32>
    %98 = arith.addf %94, %97 : vector<16x1xf32>
    %99 = math.rsqrt %98 : vector<16x1xf32>
    %100 = vector.broadcast %99 : vector<16x1xf32> to vector<16x32xf32>
    %101 = arith.mulf %96, %100 : vector<16x32xf32>
    %c0_39 = arith.constant 0 : index
    %c0_40 = arith.constant 0 : index
    %102 = vector.load %arg8[%c0_39, %c0_40] : memref<1x32xf32, #tpu.memory_space<vmem>>, vector<1x32xf32>
    %103 = vector.broadcast %102 : vector<1x32xf32> to vector<16x32xf32>
    %104 = arith.mulf %101, %103 : vector<16x32xf32>
    %c0_41 = arith.constant 0 : index
    %c0_42 = arith.constant 0 : index
    %105 = vector.load %arg9[%c0_41, %c0_42] : memref<1x32xf32, #tpu.memory_space<vmem>>, vector<1x32xf32>
    %106 = vector.broadcast %105 : vector<1x32xf32> to vector<16x32xf32>
    %107 = arith.addf %104, %106 : vector<16x32xf32>
    %108 = vector.shape_cast %107 : vector<16x32xf32> to vector<2x8x32xf32>
    %109 = vector.broadcast %76 : vector<2x8x1xf32> to vector<2x8x32xf32>
    %110 = arith.mulf %108, %109 : vector<2x8x32xf32>
    %111 = arith.truncf %110 : vector<2x8x32xf32> to vector<2x8x32xbf16>
    %c0_43 = arith.constant 0 : index
    %c0_44 = arith.constant 0 : index
    %c0_45 = arith.constant 0 : index
    %112 = vector.load %arg10[%c0_43, %c0_44, %c0_45] : memref<2x8x32xbf16, #tpu.memory_space<vmem>>, vector<2x8x32xbf16>
    tpu.vector_store %arg10[%c0_43, %c0_44, %c0_45], %111 {strides = array<i32>} : memref<2x8x32xbf16, #tpu.memory_space<vmem>>, vector<2x8x32xbf16>,
    return
  }
  func.func @transform_0(%arg0: i32) -> (i32, i32, i32) {
    %c0_i32 = arith.constant 0 : i32
    %c0_i32_0 = arith.constant 0 : i32
    %c0_i32_1 = arith.constant 0 : i32
    return %arg0, %c0_i32, %c0_i32_0 : i32, i32, i32
  }
  func.func @transform_1(%arg0: i32) -> (i32, i32, i32) {
    %c0_i32 = arith.constant 0 : i32
    %c0_i32_0 = arith.constant 0 : i32
    %c0_i32_1 = arith.constant 0 : i32
    return %arg0, %c0_i32, %c0_i32_0 : i32, i32, i32
  }
  func.func @transform_2(%arg0: i32) -> (i32, i32, i32) {
    %c0_i32 = arith.constant 0 : i32
    %c0_i32_0 = arith.constant 0 : i32
    %c0_i32_1 = arith.constant 0 : i32
    return %arg0, %c0_i32, %c0_i32_0 : i32, i32, i32
  }
  func.func @transform_3(%arg0: i32) -> (i32, i32) {
    %c0_i32 = arith.constant 0 : i32
    %c0_i32_0 = arith.constant 0 : i32
    %c0_i32_1 = arith.constant 0 : i32
    return %c0_i32, %c0_i32_0 : i32, i32
  }
  func.func @transform_4(%arg0: i32) -> (i32, i32) {
    %c0_i32 = arith.constant 0 : i32
    %c0_i32_0 = arith.constant 0 : i32
    %c0_i32_1 = arith.constant 0 : i32
    return %c0_i32, %c0_i32_0 : i32, i32
  }
  func.func @transform_5(%arg0: i32) -> (i32, i32) {
    %c0_i32 = arith.constant 0 : i32
    %c0_i32_0 = arith.constant 0 : i32
    %c0_i32_1 = arith.constant 0 : i32
    return %c0_i32, %c0_i32_0 : i32, i32
  }
  func.func @transform_6(%arg0: i32) -> (i32, i32) {
    %c0_i32 = arith.constant 0 : i32
    %c0_i32_0 = arith.constant 0 : i32
    %c0_i32_1 = arith.constant 0 : i32
    return %c0_i32, %c0_i32_0 : i32, i32
  }
  func.func @transform_7(%arg0: i32) -> (i32, i32) {
    %c0_i32 = arith.constant 0 : i32
    %c0_i32_0 = arith.constant 0 : i32
    %c0_i32_1 = arith.constant 0 : i32
    return %c0_i32, %c0_i32_0 : i32, i32
  }
  func.func @transform_8(%arg0: i32) -> (i32, i32) {
    %c0_i32 = arith.constant 0 : i32
    %c0_i32_0 = arith.constant 0 : i32
    %c0_i32_1 = arith.constant 0 : i32
    return %c0_i32, %c0_i32_0 : i32, i32
  }
  func.func @transform_9(%arg0: i32) -> (i32, i32, i32) {
    %c0_i32 = arith.constant 0 : i32
    %c0_i32_0 = arith.constant 0 : i32
    %c0_i32_1 = arith.constant 0 : i32
    return %arg0, %c0_i32, %c0_i32_0 : i32, i32, i32
  }
}

module attributes {stable_mosaic.version = 11 : i64} {
  func.func @_mha_cross_kernel(%arg0: i32, %arg1: memref<2x8x32xbf16, #tpu.memory_space<vmem>>, %arg2: memref<2x8x32xbf16, #tpu.memory_space<vmem>>, %arg3: memref<2x1x8xf32, #tpu.memory_space<vmem>>, %arg4: memref<2x8x1xf32, #tpu.memory_space<vmem>>, %arg5: memref<32x32xbf16, #tpu.memory_space<vmem>>, %arg6: memref<1x32xf32, #tpu.memory_space<vmem>>, %arg7: memref<32x64xbf16, #tpu.memory_space<vmem>>, %arg8: memref<1x64xf32, #tpu.memory_space<vmem>>, %arg9: memref<32x32xbf16, #tpu.memory_space<vmem>>, %arg10: memref<1x32xf32, #tpu.memory_space<vmem>>, %arg11: memref<1x32xf32, #tpu.memory_space<vmem>>, %arg12: memref<1x32xf32, #tpu.memory_space<vmem>>, %arg13: memref<2x8x32xbf16, #tpu.memory_space<vmem>>, %arg14: memref<16x32xbf16, #tpu.memory_space<vmem>>) attributes {dimension_semantics = [#tpu.dimension_semantics<parallel>], iteration_bounds = array<i64: 1>, scalar_prefetch = 0 : i64, scratch_operands = 1 : i64, tpu.core_type = #tpu.core_type<tc>, window_params = [{transform_indices = @transform_0, window_bounds = array<i64: 2, 8, 32>}, {transform_indices = @transform_1, window_bounds = array<i64: 2, 8, 32>}, {transform_indices = @transform_2, window_bounds = array<i64: 2, 1, 8>}, {transform_indices = @transform_3, window_bounds = array<i64: 2, 8, 1>}, {pipeline_mode = #tpu.pipeline_mode<synchronous>, transform_indices = @transform_4, window_bounds = array<i64: 32, 32>}, {pipeline_mode = #tpu.pipeline_mode<synchronous>, transform_indices = @transform_5, window_bounds = array<i64: 1, 32>}, {pipeline_mode = #tpu.pipeline_mode<synchronous>, transform_indices = @transform_6, window_bounds = array<i64: 32, 64>}, {pipeline_mode = #tpu.pipeline_mode<synchronous>, transform_indices = @transform_7, window_bounds = array<i64: 1, 64>}, {pipeline_mode = #tpu.pipeline_mode<synchronous>, transform_indices = @transform_8, window_bounds = array<i64: 32, 32>}, {pipeline_mode = #tpu.pipeline_mode<synchronous>, transform_indices = @transform_9, window_bounds = array<i64: 1, 32>}, {pipeline_mode = #tpu.pipeline_mode<synchronous>, transform_indices = @transform_10, window_bounds = array<i64: 1, 32>}, {pipeline_mode = #tpu.pipeline_mode<synchronous>, transform_indices = @transform_11, window_bounds = array<i64: 1, 32>}, {transform_indices = @transform_12, window_bounds = array<i64: 2, 8, 32>}]} {
    %c0 = arith.constant 0 : index
    %c0_0 = arith.constant 0 : index
    %c0_1 = arith.constant 0 : index
    %0 = vector.load %arg1[%c0, %c0_0, %c0_1] : memref<2x8x32xbf16, #tpu.memory_space<vmem>>, vector<2x8x32xbf16>
    %1 = vector.shape_cast %0 : vector<2x8x32xbf16> to vector<16x32xbf16>
    %c0_2 = arith.constant 0 : index
    %c0_3 = arith.constant 0 : index
    %c0_4 = arith.constant 0 : index
    %2 = vector.load %arg2[%c0_2, %c0_3, %c0_4] : memref<2x8x32xbf16, #tpu.memory_space<vmem>>, vector<2x8x32xbf16>
    %3 = vector.shape_cast %2 : vector<2x8x32xbf16> to vector<16x32xbf16>
    %c0_5 = arith.constant 0 : index
    %c0_6 = arith.constant 0 : index
    %4 = vector.load %arg5[%c0_5, %c0_6] : memref<32x32xbf16, #tpu.memory_space<vmem>>, vector<32x32xbf16>
    %cst = arith.constant dense<0.000000e+00> : vector<16x32xf32>
    %5 = tpu.matmul %1, %4, %cst {dimension_numbers = #tpu.dot_dimension_numbers<[1], [0], [0], [1], [0, 0, 1, 1], [], []>} : vector<16x32xbf16>, vector<32x32xbf16>, vector<16x32xf32> -> vector<16x32xf32>
    %c0_7 = arith.constant 0 : index
    %c0_8 = arith.constant 0 : index
    %6 = vector.load %arg6[%c0_7, %c0_8] : memref<1x32xf32, #tpu.memory_space<vmem>>, vector<1x32xf32>
    %7 = vector.broadcast %6 : vector<1x32xf32> to vector<16x32xf32>
    %8 = arith.addf %5, %7 : vector<16x32xf32>
    %9 = vector.shape_cast %8 : vector<16x32xf32> to vector<2x8x32xf32>
    %c0_9 = arith.constant 0 : index
    %c0_10 = arith.constant 0 : index
    %10 = vector.load %arg7[%c0_9, %c0_10] : memref<32x64xbf16, #tpu.memory_space<vmem>>, vector<32x64xbf16>
    %cst_11 = arith.constant dense<0.000000e+00> : vector<16x64xf32>
    %11 = tpu.matmul %3, %10, %cst_11 {dimension_numbers = #tpu.dot_dimension_numbers<[1], [0], [0], [1], [0, 0, 1, 1], [], []>} : vector<16x32xbf16>, vector<32x64xbf16>, vector<16x64xf32> -> vector<16x64xf32>
    %c0_12 = arith.constant 0 : index
    %c0_13 = arith.constant 0 : index
    %12 = vector.load %arg8[%c0_12, %c0_13] : memref<1x64xf32, #tpu.memory_space<vmem>>, vector<1x64xf32>
    %13 = vector.broadcast %12 : vector<1x64xf32> to vector<16x64xf32>
    %14 = arith.addf %11, %13 : vector<16x64xf32>
    %15 = vector.extract_strided_slice %14 {offsets = [0, 0], sizes = [16, 32], strides = [1, 1]} : vector<16x64xf32> to vector<16x32xf32>
    %16 = vector.shape_cast %15 : vector<16x32xf32> to vector<2x8x32xf32>
    %17 = vector.extract_strided_slice %14 {offsets = [0, 32], sizes = [16, 32], strides = [1, 1]} : vector<16x64xf32> to vector<16x32xf32>
    %18 = vector.shape_cast %17 : vector<16x32xf32> to vector<2x8x32xf32>
    %c0_14 = arith.constant 0 : index
    %c0_15 = arith.constant 0 : index
    %c0_16 = arith.constant 0 : index
    %19 = vector.load %arg3[%c0_14, %c0_15, %c0_16] : memref<2x1x8xf32, #tpu.memory_space<vmem>>, vector<2x1x8xf32>
    %20 = vector.shape_cast %19 : vector<2x1x8xf32> to vector<2x1x8xf32>
    %21 = vector.broadcast %20 : vector<2x1x8xf32> to vector<2x8x8xf32>
    %22 = vector.extract_strided_slice %9 {offsets = [0, 0, 0], sizes = [2, 8, 16], strides = [1, 1, 1]} : vector<2x8x32xf32> to vector<2x8x16xf32>
    %23 = arith.truncf %22 : vector<2x8x16xf32> to vector<2x8x16xbf16>
    %24 = vector.extract_strided_slice %16 {offsets = [0, 0, 0], sizes = [2, 8, 16], strides = [1, 1, 1]} : vector<2x8x32xf32> to vector<2x8x16xf32>
    %25 = arith.truncf %24 : vector<2x8x16xf32> to vector<2x8x16xbf16>
    %26 = vector.extract_strided_slice %18 {offsets = [0, 0, 0], sizes = [2, 8, 16], strides = [1, 1, 1]} : vector<2x8x32xf32> to vector<2x8x16xf32>
    %27 = arith.truncf %26 : vector<2x8x16xf32> to vector<2x8x16xbf16>
    "tpu.trace_start"() <{level = 10 : i32, message = "bqd,bkd->bqk"}> : () -> ()
    %cst_17 = arith.constant dense<0.000000e+00> : vector<2x8x8xf32>
    %28 = tpu.matmul %23, %25, %cst_17 {dimension_numbers = #tpu.dot_dimension_numbers<[2], [2], [1], [1], [0, 0, 0, 1, 1, 1], [0], [0]>} : vector<2x8x16xbf16>, vector<2x8x16xbf16>, vector<2x8x8xf32> -> vector<2x8x8xf32>
    "tpu.trace_stop"() : () -> ()
    %cst_18 = arith.constant 2.500000e-01 : f32
    %29 = vector.broadcast %cst_18 : f32 to vector<2x8x8xf32>
    %30 = arith.mulf %28, %29 : vector<2x8x8xf32>
    %31 = arith.addf %30, %21 : vector<2x8x8xf32>
    %cst_19 = arith.constant dense<0xFF800000> : vector<2x8xf32>
    %32 = vector.multi_reduction <maximumf>, %31, %cst_19 [2] : vector<2x8x8xf32> to vector<2x8xf32>
    %33 = vector.shape_cast %32 : vector<2x8xf32> to vector<2x8x1xf32>
    %34 = vector.broadcast %33 : vector<2x8x1xf32> to vector<2x8x8xf32>
    %35 = arith.subf %31, %34 : vector<2x8x8xf32>
    %36 = math.exp %35 : vector<2x8x8xf32>
    %cst_20 = arith.constant dense<0.000000e+00> : vector<2x8xf32>
    %37 = vector.multi_reduction <add>, %36, %cst_20 [2] : vector<2x8x8xf32> to vector<2x8xf32>
    %38 = vector.shape_cast %37 : vector<2x8xf32> to vector<2x8x1xf32>
    %39 = tpu.reciprocal %38 {approx = true} : vector<2x8x1xf32> -> vector<2x8x1xf32>
    %40 = vector.broadcast %39 : vector<2x8x1xf32> to vector<2x8x8xf32>
    %41 = arith.mulf %36, %40 : vector<2x8x8xf32>
    %42 = arith.truncf %41 : vector<2x8x8xf32> to vector<2x8x8xbf16>
    "tpu.trace_start"() <{level = 10 : i32, message = "bqk,bkd->bqd"}> : () -> ()
    %cst_21 = arith.constant dense<0.000000e+00> : vector<2x8x16xf32>
    %43 = tpu.matmul %42, %27, %cst_21 {dimension_numbers = #tpu.dot_dimension_numbers<[2], [1], [1], [2], [0, 0, 0, 1, 1, 2], [0], [0]>} : vector<2x8x8xbf16>, vector<2x8x16xbf16>, vector<2x8x16xf32> -> vector<2x8x16xf32>
    "tpu.trace_stop"() : () -> ()
    %44 = vector.shape_cast %43 : vector<2x8x16xf32> to vector<16x16xf32>
    %45 = arith.truncf %44 : vector<16x16xf32> to vector<16x16xbf16>
    %c0_22 = arith.constant 0 : index
    %c0_23 = arith.constant 0 : index
    %46 = vector.load %arg14[%c0_22, %c0_23] : memref<16x32xbf16, #tpu.memory_space<vmem>>, vector<16x16xbf16>
    tpu.vector_store %arg14[%c0_22, %c0_23], %45 {strides = array<i32>} : memref<16x32xbf16, #tpu.memory_space<vmem>>, vector<16x16xbf16>,
    %47 = vector.extract_strided_slice %9 {offsets = [0, 0, 16], sizes = [2, 8, 16], strides = [1, 1, 1]} : vector<2x8x32xf32> to vector<2x8x16xf32>
    %48 = arith.truncf %47 : vector<2x8x16xf32> to vector<2x8x16xbf16>
    %49 = vector.extract_strided_slice %16 {offsets = [0, 0, 16], sizes = [2, 8, 16], strides = [1, 1, 1]} : vector<2x8x32xf32> to vector<2x8x16xf32>
    %50 = arith.truncf %49 : vector<2x8x16xf32> to vector<2x8x16xbf16>
    %51 = vector.extract_strided_slice %18 {offsets = [0, 0, 16], sizes = [2, 8, 16], strides = [1, 1, 1]} : vector<2x8x32xf32> to vector<2x8x16xf32>
    %52 = arith.truncf %51 : vector<2x8x16xf32> to vector<2x8x16xbf16>
    "tpu.trace_start"() <{level = 10 : i32, message = "bqd,bkd->bqk"}> : () -> ()
    %cst_24 = arith.constant dense<0.000000e+00> : vector<2x8x8xf32>
    %53 = tpu.matmul %48, %50, %cst_24 {dimension_numbers = #tpu.dot_dimension_numbers<[2], [2], [1], [1], [0, 0, 0, 1, 1, 1], [0], [0]>} : vector<2x8x16xbf16>, vector<2x8x16xbf16>, vector<2x8x8xf32> -> vector<2x8x8xf32>
    "tpu.trace_stop"() : () -> ()
    %cst_25 = arith.constant 2.500000e-01 : f32
    %54 = vector.broadcast %cst_25 : f32 to vector<2x8x8xf32>
    %55 = arith.mulf %53, %54 : vector<2x8x8xf32>
    %56 = arith.addf %55, %21 : vector<2x8x8xf32>
    %cst_26 = arith.constant dense<0xFF800000> : vector<2x8xf32>
    %57 = vector.multi_reduction <maximumf>, %56, %cst_26 [2] : vector<2x8x8xf32> to vector<2x8xf32>
    %58 = vector.shape_cast %57 : vector<2x8xf32> to vector<2x8x1xf32>
    %59 = vector.broadcast %58 : vector<2x8x1xf32> to vector<2x8x8xf32>
    %60 = arith.subf %56, %59 : vector<2x8x8xf32>
    %61 = math.exp %60 : vector<2x8x8xf32>
    %cst_27 = arith.constant dense<0.000000e+00> : vector<2x8xf32>
    %62 = vector.multi_reduction <add>, %61, %cst_27 [2] : vector<2x8x8xf32> to vector<2x8xf32>
    %63 = vector.shape_cast %62 : vector<2x8xf32> to vector<2x8x1xf32>
    %64 = tpu.reciprocal %63 {approx = true} : vector<2x8x1xf32> -> vector<2x8x1xf32>
    %65 = vector.broadcast %64 : vector<2x8x1xf32> to vector<2x8x8xf32>
    %66 = arith.mulf %61, %65 : vector<2x8x8xf32>
    %67 = arith.truncf %66 : vector<2x8x8xf32> to vector<2x8x8xbf16>
    "tpu.trace_start"() <{level = 10 : i32, message = "bqk,bkd->bqd"}> : () -> ()
    %cst_28 = arith.constant dense<0.000000e+00> : vector<2x8x16xf32>
    %68 = tpu.matmul %67, %52, %cst_28 {dimension_numbers = #tpu.dot_dimension_numbers<[2], [1], [1], [2], [0, 0, 0, 1, 1, 2], [0], [0]>} : vector<2x8x8xbf16>, vector<2x8x16xbf16>, vector<2x8x16xf32> -> vector<2x8x16xf32>
    "tpu.trace_stop"() : () -> ()
    %69 = vector.shape_cast %68 : vector<2x8x16xf32> to vector<16x16xf32>
    %70 = arith.truncf %69 : vector<16x16xf32> to vector<16x16xbf16>
    %c0_29 = arith.constant 0 : index
    %c16 = arith.constant 16 : index
    %71 = vector.load %arg14[%c0_29, %c16] : memref<16x32xbf16, #tpu.memory_space<vmem>>, vector<16x16xbf16>
    tpu.vector_store %arg14[%c0_29, %c16], %70 {strides = array<i32>} : memref<16x32xbf16, #tpu.memory_space<vmem>>, vector<16x16xbf16>,
    %72 = arith.extf %1 : vector<16x32xbf16> to vector<16x32xf32>
    %c0_30 = arith.constant 0 : index
    %c0_31 = arith.constant 0 : index
    %c0_32 = arith.constant 0 : index
    %73 = vector.load %arg4[%c0_30, %c0_31, %c0_32] : memref<2x8x1xf32, #tpu.memory_space<vmem>>, vector<2x8x1xf32>
    %c0_33 = arith.constant 0 : index
    %c0_34 = arith.constant 0 : index
    %74 = vector.load %arg14[%c0_33, %c0_34] : memref<16x32xbf16, #tpu.memory_space<vmem>>, vector<16x32xbf16>
    %c0_35 = arith.constant 0 : index
    %c0_36 = arith.constant 0 : index
    %75 = vector.load %arg9[%c0_35, %c0_36] : memref<32x32xbf16, #tpu.memory_space<vmem>>, vector<32x32xbf16>
    %cst_37 = arith.constant dense<0.000000e+00> : vector<16x32xf32>
    %76 = tpu.matmul %74, %75, %cst_37 {dimension_numbers = #tpu.dot_dimension_numbers<[1], [0], [0], [1], [0, 0, 1, 1], [], []>} : vector<16x32xbf16>, vector<32x32xbf16>, vector<16x32xf32> -> vector<16x32xf32>
    %c0_38 = arith.constant 0 : index
    %c0_39 = arith.constant 0 : index
    %77 = vector.load %arg10[%c0_38, %c0_39] : memref<1x32xf32, #tpu.memory_space<vmem>>, vector<1x32xf32>
    %78 = vector.broadcast %77 : vector<1x32xf32> to vector<16x32xf32>
    %79 = arith.addf %76, %78 : vector<16x32xf32>
    %80 = arith.addf %79, %72 : vector<16x32xf32>
    %cst_40 = arith.constant dense<0.000000e+00> : vector<16xf32>
    %81 = vector.multi_reduction <add>, %80, %cst_40 [1] : vector<16x32xf32> to vector<16xf32>
    %82 = vector.shape_cast %81 : vector<16xf32> to vector<16x1xf32>
    %cst_41 = arith.constant 3.200000e+01 : f32
    %83 = vector.broadcast %cst_41 : f32 to vector<16x1xf32>
    %84 = arith.divf %82, %83 : vector<16x1xf32>
    %85 = vector.broadcast %84 : vector<16x1xf32> to vector<16x32xf32>
    %86 = arith.subf %80, %85 : vector<16x32xf32>
    %87 = arith.mulf %86, %86 : vector<16x32xf32>
    %cst_42 = arith.constant dense<0.000000e+00> : vector<16xf32>
    %88 = vector.multi_reduction <add>, %87, %cst_42 [1] : vector<16x32xf32> to vector<16xf32>
    %89 = vector.shape_cast %88 : vector<16xf32> to vector<16x1xf32>
    %cst_43 = arith.constant 3.200000e+01 : f32
    %90 = vector.broadcast %cst_43 : f32 to vector<16x1xf32>
    %91 = arith.divf %89, %90 : vector<16x1xf32>
    %92 = vector.broadcast %84 : vector<16x1xf32> to vector<16x32xf32>
    %93 = arith.subf %80, %92 : vector<16x32xf32>
    %cst_44 = arith.constant 9.99999974E-6 : f32
    %94 = vector.broadcast %cst_44 : f32 to vector<16x1xf32>
    %95 = arith.addf %91, %94 : vector<16x1xf32>
    %96 = math.rsqrt %95 : vector<16x1xf32>
    %97 = vector.broadcast %96 : vector<16x1xf32> to vector<16x32xf32>
    %98 = arith.mulf %93, %97 : vector<16x32xf32>
    %c0_45 = arith.constant 0 : index
    %c0_46 = arith.constant 0 : index
    %99 = vector.load %arg11[%c0_45, %c0_46] : memref<1x32xf32, #tpu.memory_space<vmem>>, vector<1x32xf32>
    %100 = vector.broadcast %99 : vector<1x32xf32> to vector<16x32xf32>
    %101 = arith.mulf %98, %100 : vector<16x32xf32>
    %c0_47 = arith.constant 0 : index
    %c0_48 = arith.constant 0 : index
    %102 = vector.load %arg12[%c0_47, %c0_48] : memref<1x32xf32, #tpu.memory_space<vmem>>, vector<1x32xf32>
    %103 = vector.broadcast %102 : vector<1x32xf32> to vector<16x32xf32>
    %104 = arith.addf %101, %103 : vector<16x32xf32>
    %105 = vector.shape_cast %104 : vector<16x32xf32> to vector<2x8x32xf32>
    %106 = vector.broadcast %73 : vector<2x8x1xf32> to vector<2x8x32xf32>
    %107 = arith.mulf %105, %106 : vector<2x8x32xf32>
    %108 = arith.truncf %107 : vector<2x8x32xf32> to vector<2x8x32xbf16>
    %c0_49 = arith.constant 0 : index
    %c0_50 = arith.constant 0 : index
    %c0_51 = arith.constant 0 : index
    %109 = vector.load %arg13[%c0_49, %c0_50, %c0_51] : memref<2x8x32xbf16, #tpu.memory_space<vmem>>, vector<2x8x32xbf16>
    tpu.vector_store %arg13[%c0_49, %c0_50, %c0_51], %108 {strides = array<i32>} : memref<2x8x32xbf16, #tpu.memory_space<vmem>>, vector<2x8x32xbf16>,
    return
  }
  func.func @transform_0(%arg0: i32) -> (i32, i32, i32) {
    %c0_i32 = arith.constant 0 : i32
    %c0_i32_0 = arith.constant 0 : i32
    %c0_i32_1 = arith.constant 0 : i32
    return %arg0, %c0_i32, %c0_i32_0 : i32, i32, i32
  }
  func.func @transform_1(%arg0: i32) -> (i32, i32, i32) {
    %c0_i32 = arith.constant 0 : i32
    %c0_i32_0 = arith.constant 0 : i32
    %c0_i32_1 = arith.constant 0 : i32
    return %arg0, %c0_i32, %c0_i32_0 : i32, i32, i32
  }
  func.func @transform_2(%arg0: i32) -> (i32, i32, i32) {
    %c0_i32 = arith.constant 0 : i32
    %c0_i32_0 = arith.constant 0 : i32
    %c0_i32_1 = arith.constant 0 : i32
    return %arg0, %c0_i32, %c0_i32_0 : i32, i32, i32
  }
  func.func @transform_3(%arg0: i32) -> (i32, i32, i32) {
    %c0_i32 = arith.constant 0 : i32
    %c0_i32_0 = arith.constant 0 : i32
    %c0_i32_1 = arith.constant 0 : i32
    return %arg0, %c0_i32, %c0_i32_0 : i32, i32, i32
  }
  func.func @transform_4(%arg0: i32) -> (i32, i32) {
    %c0_i32 = arith.constant 0 : i32
    %c0_i32_0 = arith.constant 0 : i32
    %c0_i32_1 = arith.constant 0 : i32
    return %c0_i32, %c0_i32_0 : i32, i32
  }
  func.func @transform_5(%arg0: i32) -> (i32, i32) {
    %c0_i32 = arith.constant 0 : i32
    %c0_i32_0 = arith.constant 0 : i32
    %c0_i32_1 = arith.constant 0 : i32
    return %c0_i32, %c0_i32_0 : i32, i32
  }
  func.func @transform_6(%arg0: i32) -> (i32, i32) {
    %c0_i32 = arith.constant 0 : i32
    %c0_i32_0 = arith.constant 0 : i32
    %c0_i32_1 = arith.constant 0 : i32
    return %c0_i32, %c0_i32_0 : i32, i32
  }
  func.func @transform_7(%arg0: i32) -> (i32, i32) {
    %c0_i32 = arith.constant 0 : i32
    %c0_i32_0 = arith.constant 0 : i32
    %c0_i32_1 = arith.constant 0 : i32
    return %c0_i32, %c0_i32_0 : i32, i32
  }
  func.func @transform_8(%arg0: i32) -> (i32, i32) {
    %c0_i32 = arith.constant 0 : i32
    %c0_i32_0 = arith.constant 0 : i32
    %c0_i32_1 = arith.constant 0 : i32
    return %c0_i32, %c0_i32_0 : i32, i32
  }
  func.func @transform_9(%arg0: i32) -> (i32, i32) {
    %c0_i32 = arith.constant 0 : i32
    %c0_i32_0 = arith.constant 0 : i32
    %c0_i32_1 = arith.constant 0 : i32
    return %c0_i32, %c0_i32_0 : i32, i32
  }
  func.func @transform_10(%arg0: i32) -> (i32, i32) {
    %c0_i32 = arith.constant 0 : i32
    %c0_i32_0 = arith.constant 0 : i32
    %c0_i32_1 = arith.constant 0 : i32
    return %c0_i32, %c0_i32_0 : i32, i32
  }
  func.func @transform_11(%arg0: i32) -> (i32, i32) {
    %c0_i32 = arith.constant 0 : i32
    %c0_i32_0 = arith.constant 0 : i32
    %c0_i32_1 = arith.constant 0 : i32
    return %c0_i32, %c0_i32_0 : i32, i32
  }
  func.func @transform_12(%arg0: i32) -> (i32, i32, i32) {
    %c0_i32 = arith.constant 0 : i32
    %c0_i32_0 = arith.constant 0 : i32
    %c0_i32_1 = arith.constant 0 : i32
    return %arg0, %c0_i32, %c0_i32_0 : i32, i32, i32
  }
}

</mosaic_0001>

<llo_original>
// kernel: transformer_forward.12
$region0: #{transformer_forward.12}
  #allocation0 [shape = 'u32[]', space=smem, size = 0x4, offset = 0x4, fixed_abs, tag = 'smem constant byte address 0x4 - core index']
  #allocation1 [shape = 'u32[144,128]{1,0:T(1,128)}', space=vmem, size = 0x12000, scoped, tag = 'internal scratch']
  %s0 = inlined_call_operand.vmem [shape: bf16[16,6], index: 0, kind: input, shape index: {}]
  %s1 = inlined_call_operand.vmem [shape: f32[16,32], index: 1, kind: input, shape index: {}]
  %s2 = inlined_call_operand.vmem [shape: bf16[6,32], index: 2, kind: input, shape index: {}]
  %s3 = inlined_call_operand.vmem [shape: f32[1,32], index: 3, kind: input, shape index: {}]
  %s4 = inlined_call_operand.vmem [shape: bf16[16,32], index: 4, kind: output, shape index: {}]
  %s5 = sld [smem:[#allocation0]]
  $region26: #{transformer_forward.12} parent=0
    _
  %s7 = ssub.s32 1, %s5
  %s8 = scalar_select 0, %s7, %s5
  // Predicated region
  $region2: #{transformer_forward.12} parent=0 // pred_check
    _
  $region3: #{transformer_forward.12} parent=0 // pred_check_branch
    %10 = sbr.rel (0) target = $region5
  $region4: #{transformer_forward.12} parent=0 // pred_region
    _
  $region5: #{transformer_forward.12} parent=0 // pred_fallthru
    _
  // Predicated region
  $region6: #{transformer_forward.12} parent=0 // pred_check
    _
  $region7: #{transformer_forward.12} parent=0 // pred_check_branch
    %12 = sbr.rel (0) target = $region9
  $region8: #{transformer_forward.12} parent=0 // pred_region
    _
  $region9: #{transformer_forward.12} parent=0 // pred_fallthru
    _
  // Predicated region
  $region10: #{transformer_forward.12} parent=0 // pred_check
    _
  $region11: #{transformer_forward.12} parent=0 // pred_check_branch
    %14 = sbr.rel (0) target = $region13
  $region12: #{transformer_forward.12} parent=0 // pred_region
    _
  $region13: #{transformer_forward.12} parent=0 // pred_fallthru
    _
  // Predicated region
  $region14: #{transformer_forward.12} parent=0 // pred_check
    _
  $region15: #{transformer_forward.12} parent=0 // pred_check_branch
    %16 = sbr.rel (0) target = $region17
  $region16: #{transformer_forward.12} parent=0 // pred_region
    _
  $region17: #{transformer_forward.12} parent=0 // pred_fallthru
    _
  %v18 = vld [vmem:[%s0] sm:$0xf]
  %v19 = vld [vmem:[%s0 + $0x4] sm:$0xf]
  %v20 = vld [vmem:[%s2] sm:$0x7]
  %v21 = vld [vmem:[%s3] sm:$0x1]
  %v23 = vlaneseq
  %v24 = vshrl.u32 %v23, 7
  %v25 = vsub.s32 0, %v24
  %v26 = vrot.slane %v21, %v25
  %v30 = vunpack.c.l.b16 %v18
  %v31 = vunpack.c.l.b16 %v19
  %v32 = vpack.c.b16 %v31, %v30
  %vm33 = vcmask 48128
  %v35 = vsel %vm33, %v32, 0
  %vm37 = vcmask 1042432
  %v39 = vsel %vm37, %v20, 0
  %41 = vmatprep.subr.bf16.mxu0 0
  %42 = vmatpush1.bf16.msra.mxu0 0
  %43 = vmatprep.subr.bf16.mxu0 0
  %44 = vmatpush1.bf16.msra.mxu0 0
  %45 = vmatprep.subr.bf16.mxu0 0
  %46 = vmatpush1.bf16.msra.mxu0 0
  %47 = vmatprep.subr.bf16.mxu0 0
  %48 = vmatpush1.bf16.msra.mxu0 0
  %49 = vmatprep.subr.bf16.mxu0 0
  %50 = vmatpush1.bf16.msra.mxu0 0
  %51 = vmatprep.subr.bf16.mxu0 0
  %52 = vmatpush1.bf16.msra.mxu0 0
  %53 = vmatprep.subr.bf16.mxu0 0
  %54 = vmatpush1.bf16.msra.mxu0 0
  %55 = vmatprep.subr.bf16.mxu0 0
  %56 = vmatpush1.bf16.msra.mxu0 %v39
  %57 = vmatprep.subr.bf16.mxu0 0
  %58 = vmatpush2.bf16.msra.mxu0 0
  %59 = vmatprep.subr.bf16.mxu0 0
  %60 = vmatpush2.bf16.msra.mxu0 0
  %61 = vmatprep.subr.bf16.mxu0 0
  %62 = vmatpush2.bf16.msra.mxu0 0
  %63 = vmatprep.subr.bf16.mxu0 0
  %64 = vmatpush2.bf16.msra.mxu0 0
  %65 = vmatprep.subr.bf16.mxu0 0
  %66 = vmatpush2.bf16.msra.mxu0 0
  %67 = vmatprep.subr.bf16.mxu0 0
  %68 = vmatpush2.bf16.msra.mxu0 0
  %69 = vmatprep.subr.bf16.mxu0 0
  %70 = vmatpush2.bf16.msra.mxu0 0
  %71 = vmatprep.subr.bf16.mxu0 0
  %72 = vmatpush2.bf16.msra.mxu0 0
  %73 = vmatprep.mubr.bf16.mxu0 0
  %74 = vmatmul.mubr.bf16.gmra.mxu0 %v35
  %v75 = vpop.f32.mrf.mxu0
  %v76 = vadd.f32 %v26, %v75
  %v77 = vpop.f32.mrf.mxu0
  %v78 = vpop.f32.mrf.mxu0
  %v79 = vadd.f32 %v26, %v78
  %v80 = vpop.f32.mrf.mxu0
  %81 = vdwg.mxu0
  %v82 = vld [vmem:[%s1] sm:$0xff]
  %v83 = vld [vmem:[%s1 + $0x8] sm:$0xff]
  %v84 = vadd.f32 %v76, %v82
  %v85 = vadd.f32 %v79, %v83
  %v86 = vpack.c.bf16 %v85, %v84
  %v88 = vunpack.c.l.b16 %v86
  %v89 = vunpack.c.h.b16 %v86
  %v90 = vpack.c.b16 %v88, %v88
  %v91 = vpack.c.b16 %v89, %v89
  %vm94 = vcmask 257024
  %95 = vst.msk [vmem:[%s4] sm:$0xf] %vm94, %v90
  %96 = vst.msk [vmem:[%s4 + $0x4] sm:$0xf] %vm94, %v91
  // Predicated region
  $region18: #{transformer_forward.12} parent=0 // pred_check
    _
  $region19: #{transformer_forward.12} parent=0 // pred_check_branch
    %98 = sbr.rel (0) target = $region21
  $region20: #{transformer_forward.12} parent=0 // pred_region
    _
  $region21: #{transformer_forward.12} parent=0 // pred_fallthru
    _
  // Predicated region
  $region22: #{transformer_forward.12} parent=0 // pred_check
    _
  $region23: #{transformer_forward.12} parent=0 // pred_check_branch
    %100 = sbr.rel (0) target = $region25
  $region24: #{transformer_forward.12} parent=0 // pred_region
    _
  $region25: #{transformer_forward.12} parent=0 // pred_fallthru
    _

// kernel: transformer_forward.17
$region0: #{transformer_forward.17}
  #allocation0 [shape = 'u32[]', space=smem, size = 0x4, offset = 0x4, fixed_abs, tag = 'smem constant byte address 0x4 - core index']
  #allocation1 [shape = 'u32[144,128]{1,0:T(1,128)}', space=vmem, size = 0x12000, scoped, tag = 'internal scratch']
  %s0 = inlined_call_operand.vmem [shape: bf16[16,5], index: 0, kind: input, shape index: {}]
  %s1 = inlined_call_operand.vmem [shape: f32[16,32], index: 1, kind: input, shape index: {}]
  %s2 = inlined_call_operand.vmem [shape: bf16[5,32], index: 2, kind: input, shape index: {}]
  %s3 = inlined_call_operand.vmem [shape: f32[1,32], index: 3, kind: input, shape index: {}]
  %s4 = inlined_call_operand.vmem [shape: bf16[16,32], index: 4, kind: output, shape index: {}]
  %s5 = sld [smem:[#allocation0]]
  $region26: #{transformer_forward.17} parent=0
    _
  %s7 = ssub.s32 1, %s5
  %s8 = scalar_select 0, %s7, %s5
  // Predicated region
  $region2: #{transformer_forward.17} parent=0 // pred_check
    _
  $region3: #{transformer_forward.17} parent=0 // pred_check_branch
    %10 = sbr.rel (0) target = $region5
  $region4: #{transformer_forward.17} parent=0 // pred_region
    _
  $region5: #{transformer_forward.17} parent=0 // pred_fallthru
    _
  // Predicated region
  $region6: #{transformer_forward.17} parent=0 // pred_check
    _
  $region7: #{transformer_forward.17} parent=0 // pred_check_branch
    %12 = sbr.rel (0) target = $region9
  $region8: #{transformer_forward.17} parent=0 // pred_region
    _
  $region9: #{transformer_forward.17} parent=0 // pred_fallthru
    _
  // Predicated region
  $region10: #{transformer_forward.17} parent=0 // pred_check
    _
  $region11: #{transformer_forward.17} parent=0 // pred_check_branch
    %14 = sbr.rel (0) target = $region13
  $region12: #{transformer_forward.17} parent=0 // pred_region
    _
  $region13: #{transformer_forward.17} parent=0 // pred_fallthru
    _
  // Predicated region
  $region14: #{transformer_forward.17} parent=0 // pred_check
    _
  $region15: #{transformer_forward.17} parent=0 // pred_check_branch
    %16 = sbr.rel (0) target = $region17
  $region16: #{transformer_forward.17} parent=0 // pred_region
    _
  $region17: #{transformer_forward.17} parent=0 // pred_fallthru
    _
  %v18 = vld [vmem:[%s0] sm:$0xf]
  %v19 = vld [vmem:[%s0 + $0x4] sm:$0xf]
  %v20 = vld [vmem:[%s2] sm:$0x7]
  %v21 = vld [vmem:[%s3] sm:$0x1]
  %v23 = vlaneseq
  %v24 = vshrl.u32 %v23, 7
  %v25 = vsub.s32 0, %v24
  %v26 = vrot.slane %v21, %v25
  %v30 = vunpack.c.l.b16 %v18
  %v31 = vunpack.c.l.b16 %v19
  %v32 = vpack.c.b16 %v31, %v30
  %vm33 = vcmask 39936
  %v35 = vsel %vm33, %v32, 0
  %vm37 = vcmask 1041408
  %vm38 = vcmask 1042432
  %v39 = vsel %vm37, 4294967295, 65535
  %v40 = vsel %vm38, %v39, 0
  %v42 = vand.u32 %v20, %v40
  %44 = vmatprep.subr.bf16.mxu0 0
  %45 = vmatpush1.bf16.msra.mxu0 0
  %46 = vmatprep.subr.bf16.mxu0 0
  %47 = vmatpush1.bf16.msra.mxu0 0
  %48 = vmatprep.subr.bf16.mxu0 0
  %49 = vmatpush1.bf16.msra.mxu0 0
  %50 = vmatprep.subr.bf16.mxu0 0
  %51 = vmatpush1.bf16.msra.mxu0 0
  %52 = vmatprep.subr.bf16.mxu0 0
  %53 = vmatpush1.bf16.msra.mxu0 0
  %54 = vmatprep.subr.bf16.mxu0 0
  %55 = vmatpush1.bf16.msra.mxu0 0
  %56 = vmatprep.subr.bf16.mxu0 0
  %57 = vmatpush1.bf16.msra.mxu0 0
  %58 = vmatprep.subr.bf16.mxu0 0
  %59 = vmatpush1.bf16.msra.mxu0 %v42
  %60 = vmatprep.subr.bf16.mxu0 0
  %61 = vmatpush2.bf16.msra.mxu0 0
  %62 = vmatprep.subr.bf16.mxu0 0
  %63 = vmatpush2.bf16.msra.mxu0 0
  %64 = vmatprep.subr.bf16.mxu0 0
  %65 = vmatpush2.bf16.msra.mxu0 0
  %66 = vmatprep.subr.bf16.mxu0 0
  %67 = vmatpush2.bf16.msra.mxu0 0
  %68 = vmatprep.subr.bf16.mxu0 0
  %69 = vmatpush2.bf16.msra.mxu0 0
  %70 = vmatprep.subr.bf16.mxu0 0
  %71 = vmatpush2.bf16.msra.mxu0 0
  %72 = vmatprep.subr.bf16.mxu0 0
  %73 = vmatpush2.bf16.msra.mxu0 0
  %74 = vmatprep.subr.bf16.mxu0 0
  %75 = vmatpush2.bf16.msra.mxu0 0
  %76 = vmatprep.mubr.bf16.mxu0 0
  %77 = vmatmul.mubr.bf16.gmra.mxu0 %v35
  %v78 = vpop.f32.mrf.mxu0
  %v79 = vadd.f32 %v26, %v78
  %v80 = vpop.f32.mrf.mxu0
  %v81 = vpop.f32.mrf.mxu0
  %v82 = vadd.f32 %v26, %v81
  %v83 = vpop.f32.mrf.mxu0
  %84 = vdwg.mxu0
  %v85 = vld [vmem:[%s1] sm:$0xff]
  %v86 = vld [vmem:[%s1 + $0x8] sm:$0xff]
  %v87 = vadd.f32 %v79, %v85
  %v88 = vadd.f32 %v82, %v86
  %v89 = vpack.c.bf16 %v88, %v87
  %v91 = vunpack.c.l.b16 %v89
  %v92 = vunpack.c.h.b16 %v89
  %v93 = vpack.c.b16 %v91, %v91
  %v94 = vpack.c.b16 %v92, %v92
  %vm97 = vcmask 257024
  %98 = vst.msk [vmem:[%s4] sm:$0xf] %vm97, %v93
  %99 = vst.msk [vmem:[%s4 + $0x4] sm:$0xf] %vm97, %v94
  // Predicated region
  $region18: #{transformer_forward.17} parent=0 // pred_check
    _
  $region19: #{transformer_forward.17} parent=0 // pred_check_branch
    %101 = sbr.rel (0) target = $region21
  $region20: #{transformer_forward.17} parent=0 // pred_region
    _
  $region21: #{transformer_forward.17} parent=0 // pred_fallthru
    _
  // Predicated region
  $region22: #{transformer_forward.17} parent=0 // pred_check
    _
  $region23: #{transformer_forward.17} parent=0 // pred_check_branch
    %103 = sbr.rel (0) target = $region25
  $region24: #{transformer_forward.17} parent=0 // pred_region
    _
  $region25: #{transformer_forward.17} parent=0 // pred_fallthru
    _

// kernel: transformer_forward.14
$region0: #{transformer_forward.14}
  #allocation0 [shape = 'u32[]', space=smem, size = 0x4, offset = 0x4, fixed_abs, tag = 'smem constant byte address 0x4 - core index']
  #allocation1 [shape = 'u32[144,128]{1,0:T(1,128)}', space=vmem, size = 0x12000, scoped, tag = 'internal scratch']
  %s0 = inlined_call_operand.vmem [shape: bf16[16,32], index: 0, kind: input, shape index: {}]
  %s1 = inlined_call_operand.vmem [shape: f32[16,1], index: 1, kind: input, shape index: {}]
  %s2 = inlined_call_operand.vmem [shape: bf16[32,64], index: 2, kind: input, shape index: {}]
  %s3 = inlined_call_operand.vmem [shape: f32[1,64], index: 3, kind: input, shape index: {}]
  %s4 = inlined_call_operand.vmem [shape: bf16[64,32], index: 4, kind: input, shape index: {}]
  %s5 = inlined_call_operand.vmem [shape: f32[1,32], index: 5, kind: input, shape index: {}]
  %s6 = inlined_call_operand.vmem [shape: f32[1,32], index: 6, kind: input, shape index: {}]
  %s7 = inlined_call_operand.vmem [shape: f32[1,32], index: 7, kind: input, shape index: {}]
  %s8 = inlined_call_operand.vmem [shape: bf16[16,32], index: 8, kind: output, shape index: {}]
  %s9 = sld [smem:[#allocation0]]
  $region42: #{transformer_forward.14} parent=0
    _
  %s11 = ssub.s32 1, %s9
  %s12 = scalar_select 0, %s11, %s9
  // Predicated region
  $region2: #{transformer_forward.14} parent=0 // pred_check
    _
  $region3: #{transformer_forward.14} parent=0 // pred_check_branch
    %14 = sbr.rel (0) target = $region5
  $region4: #{transformer_forward.14} parent=0 // pred_region
    _
  $region5: #{transformer_forward.14} parent=0 // pred_fallthru
    _
  // Predicated region
  $region6: #{transformer_forward.14} parent=0 // pred_check
    _
  $region7: #{transformer_forward.14} parent=0 // pred_check_branch
    %16 = sbr.rel (0) target = $region9
  $region8: #{transformer_forward.14} parent=0 // pred_region
    _
  $region9: #{transformer_forward.14} parent=0 // pred_fallthru
    _
  // Predicated region
  $region10: #{transformer_forward.14} parent=0 // pred_check
    _
  $region11: #{transformer_forward.14} parent=0 // pred_check_branch
    %18 = sbr.rel (0) target = $region13
  $region12: #{transformer_forward.14} parent=0 // pred_region
    _
  $region13: #{transformer_forward.14} parent=0 // pred_fallthru
    _
  // Predicated region
  $region14: #{transformer_forward.14} parent=0 // pred_check
    _
  $region15: #{transformer_forward.14} parent=0 // pred_check_branch
    %20 = sbr.rel (0) target = $region17
  $region16: #{transformer_forward.14} parent=0 // pred_region
    _
  $region17: #{transformer_forward.14} parent=0 // pred_fallthru
    _
  // Predicated region
  $region18: #{transformer_forward.14} parent=0 // pred_check
    _
  $region19: #{transformer_forward.14} parent=0 // pred_check_branch
    %22 = sbr.rel (0) target = $region21
  $region20: #{transformer_forward.14} parent=0 // pred_region
    _
  $region21: #{transformer_forward.14} parent=0 // pred_fallthru
    _
  // Predicated region
  $region22: #{transformer_forward.14} parent=0 // pred_check
    _
  $region23: #{transformer_forward.14} parent=0 // pred_check_branch
    %24 = sbr.rel (0) target = $region25
  $region24: #{transformer_forward.14} parent=0 // pred_region
    _
  $region25: #{transformer_forward.14} parent=0 // pred_fallthru
    _
  // Predicated region
  $region26: #{transformer_forward.14} parent=0 // pred_check
    _
  $region27: #{transformer_forward.14} parent=0 // pred_check_branch
    %26 = sbr.rel (0) target = $region29
  $region28: #{transformer_forward.14} parent=0 // pred_region
    _
  $region29: #{transformer_forward.14} parent=0 // pred_fallthru
    _
  // Predicated region
  $region30: #{transformer_forward.14} parent=0 // pred_check
    _
  $region31: #{transformer_forward.14} parent=0 // pred_check_branch
    %28 = sbr.rel (0) target = $region33
  $region32: #{transformer_forward.14} parent=0 // pred_region
    _
  $region33: #{transformer_forward.14} parent=0 // pred_fallthru
    _
  %v30 = vld [vmem:[%s0] sm:$0xf]
  %v31 = vld [vmem:[%s0 + $0x4] sm:$0xf]
  %v32 = vld [vmem:[%s2] sm:$0xf]
  %v33 = vld [vmem:[%s2 + $0x4] sm:$0xf]
  %v34 = vld [vmem:[%s2 + $0x8] sm:$0xf]
  %v35 = vld [vmem:[%s2 + $0xc] sm:$0xf]
  %v36 = vld [vmem:[%s3] sm:$0x1]
  %v38 = vlaneseq
  %v39 = vshrl.u32 %v38, 7
  %v40 = vsub.s32 0, %v39
  %v41 = vrot.slane %v36, %v40
  %v45 = vunpack.c.l.b16 %v30
  %v46 = vunpack.c.l.b16 %v31
  %v47 = vpack.c.b16 %v46, %v45
  %v52 = vunpack.c.l.b16 %v32
  %v53 = vunpack.c.l.b16 %v33
  %v54 = vunpack.c.l.b16 %v34
  %v55 = vunpack.c.l.b16 %v35
  %v56 = vpack.c.b16 %v53, %v52
  %v57 = vpack.c.b16 %v55, %v54
  %vm60 = vcmask 261120
  %v62 = vsel %vm60, %v47, 0
  %64 = vmatprep.subr.bf16.mxu0 0
  %65 = vmatpush1.bf16.msra.mxu0 0
  %66 = vmatprep.subr.bf16.mxu0 0
  %67 = vmatpush1.bf16.msra.mxu0 0
  %68 = vmatprep.subr.bf16.mxu0 0
  %69 = vmatpush1.bf16.msra.mxu0 0
  %70 = vmatprep.subr.bf16.mxu0 0
  %71 = vmatpush1.bf16.msra.mxu0 0
  %72 = vmatprep.subr.bf16.mxu0 0
  %73 = vmatpush1.bf16.msra.mxu0 0
  %74 = vmatprep.subr.bf16.mxu0 0
  %75 = vmatpush1.bf16.msra.mxu0 0
  %76 = vmatprep.subr.bf16.mxu0 0
  %77 = vmatpush1.bf16.msra.mxu0 %v57
  %78 = vmatprep.subr.bf16.mxu0 0
  %79 = vmatpush1.bf16.msra.mxu0 %v56
  %80 = vmatprep.subr.bf16.mxu0 0
  %81 = vmatpush2.bf16.msra.mxu0 0
  %82 = vmatprep.subr.bf16.mxu0 0
  %83 = vmatpush2.bf16.msra.mxu0 0
  %84 = vmatprep.subr.bf16.mxu0 0
  %85 = vmatpush2.bf16.msra.mxu0 0
  %86 = vmatprep.subr.bf16.mxu0 0
  %87 = vmatpush2.bf16.msra.mxu0 0
  %88 = vmatprep.subr.bf16.mxu0 0
  %89 = vmatpush2.bf16.msra.mxu0 0
  %90 = vmatprep.subr.bf16.mxu0 0
  %91 = vmatpush2.bf16.msra.mxu0 0
  %92 = vmatprep.subr.bf16.mxu0 0
  %93 = vmatpush2.bf16.msra.mxu0 0
  %94 = vmatprep.subr.bf16.mxu0 0
  %95 = vmatpush2.bf16.msra.mxu0 0
  %96 = vmatprep.mubr.bf16.mxu0 0
  %97 = vmatmul.mubr.bf16.gmra.mxu0 %v62
  %v98 = vpop.f32.mrf.mxu0
  %v99 = vadd.f32 %v41, %v98
  %v100 = vpop.f32.mrf.mxu0
  %v101 = vpop.f32.mrf.mxu0
  %v102 = vadd.f32 %v41, %v101
  %v103 = vpop.f32.mrf.mxu0
  %104 = vdwg.mxu0
  %v105 = vmax.f32 %v99, 0.0
  %v106 = vmax.f32 %v102, 0.0
  %v107 = vpack.c.bf16 %v106, %v105
  %v108 = vld [vmem:[%s4] sm:$0xf]
  %v109 = vld [vmem:[%s4 + $0x4] sm:$0xf]
  %v110 = vld [vmem:[%s4 + $0x8] sm:$0xf]
  %v111 = vld [vmem:[%s4 + $0xc] sm:$0xf]
  %v112 = vld [vmem:[%s4 + $0x10] sm:$0xf]
  %v113 = vld [vmem:[%s4 + $0x14] sm:$0xf]
  %v114 = vld [vmem:[%s4 + $0x18] sm:$0xf]
  %v115 = vld [vmem:[%s4 + $0x1c] sm:$0xf]
  %v116 = vld [vmem:[%s5] sm:$0x1]
  %v118 = vlaneseq
  %v119 = vshrl.u32 %v118, 7
  %v120 = vsub.s32 0, %v119
  %v121 = vrot.slane %v116, %v120
  %v131 = vunpack.c.l.b16 %v108
  %v132 = vunpack.c.l.b16 %v109
  %v133 = vunpack.c.l.b16 %v110
  %v134 = vunpack.c.l.b16 %v111
  %v135 = vunpack.c.l.b16 %v112
  %v136 = vunpack.c.l.b16 %v113
  %v137 = vunpack.c.l.b16 %v114
  %v138 = vunpack.c.l.b16 %v115
  %v139 = vpack.c.b16 %v132, %v131
  %v140 = vpack.c.b16 %v134, %v133
  %v141 = vpack.c.b16 %v136, %v135
  %v142 = vpack.c.b16 %v138, %v137
  %vm147 = vcmask 523264
  %v149 = vsel %vm147, %v107, 0
  %151 = vmatprep.subr.bf16.mxu0 0
  %152 = vmatpush1.bf16.msra.mxu0 0
  %153 = vmatprep.subr.bf16.mxu0 0
  %154 = vmatpush1.bf16.msra.mxu0 0
  %155 = vmatprep.subr.bf16.mxu0 0
  %156 = vmatpush1.bf16.msra.mxu0 0
  %157 = vmatprep.subr.bf16.mxu0 0
  %158 = vmatpush1.bf16.msra.mxu0 0
  %159 = vmatprep.subr.bf16.mxu0 0
  %160 = vmatpush1.bf16.msra.mxu0 %v142
  %161 = vmatprep.subr.bf16.mxu0 0
  %162 = vmatpush1.bf16.msra.mxu0 %v141
  %163 = vmatprep.subr.bf16.mxu0 0
  %164 = vmatpush1.bf16.msra.mxu0 %v140
  %165 = vmatprep.subr.bf16.mxu0 0
  %166 = vmatpush1.bf16.msra.mxu0 %v139
  %167 = vmatprep.subr.bf16.mxu0 0
  %168 = vmatpush2.bf16.msra.mxu0 0
  %169 = vmatprep.subr.bf16.mxu0 0
  %170 = vmatpush2.bf16.msra.mxu0 0
  %171 = vmatprep.subr.bf16.mxu0 0
  %172 = vmatpush2.bf16.msra.mxu0 0
  %173 = vmatprep.subr.bf16.mxu0 0
  %174 = vmatpush2.bf16.msra.mxu0 0
  %175 = vmatprep.subr.bf16.mxu0 0
  %176 = vmatpush2.bf16.msra.mxu0 0
  %177 = vmatprep.subr.bf16.mxu0 0
  %178 = vmatpush2.bf16.msra.mxu0 0
  %179 = vmatprep.subr.bf16.mxu0 0
  %180 = vmatpush2.bf16.msra.mxu0 0
  %181 = vmatprep.subr.bf16.mxu0 0
  %182 = vmatpush2.bf16.msra.mxu0 0
  %183 = vmatprep.mubr.bf16.mxu0 0
  %184 = vmatmul.mubr.bf16.gmra.mxu0 %v149
  %v185 = vpop.f32.mrf.mxu0
  %v186 = vadd.f32 %v121, %v185
  %v187 = vpop.f32.mrf.mxu0
  %v188 = vpop.f32.mrf.mxu0
  %v189 = vadd.f32 %v121, %v188
  %v190 = vpop.f32.mrf.mxu0
  %191 = vdwg.mxu0
  %v192 = vunpack.c.l.bf16 %v30
  %v193 = vunpack.c.l.bf16 %v31
  %v194 = vadd.f32 %v186, %v192
  %v195 = vadd.f32 %v189, %v193
  %v196 = vsel %vm60, %v194, 0.0
  %197 = vadd.xlane.f32.xlu0 %v196
  %v198 = vpop.xlane.xlu0 %197
  %v199 = vsel %vm60, %v195, 0.0
  %200 = vadd.xlane.f32.xlu0 %v199
  %v201 = vpop.xlane.xlu0 %200
  %v202 = vrcp.pop 32.0
  %v203 = vmul.f32 %v198, %v202
  %v204 = vmul.f32 %v201, %v202
  %v205 = vsub.f32 %v194, %v203
  %v206 = vsub.f32 %v195, %v204
  %v207 = vmul.f32 %v205, %v205
  %v208 = vmul.f32 %v206, %v206
  %v209 = vsel %vm60, %v207, 0.0
  %210 = vadd.xlane.f32.xlu0 %v209
  %v211 = vpop.xlane.xlu0 %210
  %v212 = vsel %vm60, %v208, 0.0
  %213 = vadd.xlane.f32.xlu0 %v212
  %v214 = vpop.xlane.xlu0 %213
  %v215 = vmul.f32 %v211, %v202
  %v216 = vmul.f32 %v214, %v202
  %v217 = vadd.f32 %v215, 1e-05
  %v218 = vadd.f32 %v216, 1e-05
  %v219 = vrsqrt.pop %v217
  %v220 = vrsqrt.pop %v218
  %v221 = vmul.f32 %v205, %v219
  %v222 = vmul.f32 %v206, %v220
  %v223 = vld [vmem:[%s6] sm:$0x1]
  %v225 = vlaneseq
  %v226 = vshrl.u32 %v225, 7
  %v227 = vsub.s32 0, %v226
  %v228 = vrot.slane %v223, %v227
  %v230 = vmul.f32 %v221, %v228
  %v231 = vmul.f32 %v222, %v228
  %v232 = vld [vmem:[%s7] sm:$0x1]
  %v234 = vlaneseq
  %v235 = vshrl.u32 %v234, 7
  %v236 = vsub.s32 0, %v235
  %v237 = vrot.slane %v232, %v236
  %v239 = vadd.f32 %v230, %v237
  %v240 = vadd.f32 %v231, %v237
  %v241 = vld [vmem:[%s1] sm:$0xff]
  %v242 = vld [vmem:[%s1 + $0x8] sm:$0xff]
  %244 = vset.pattern.permute.xlu0 0
  %245 = vperm.xlu0 %244, %v241
  %v246 = vpop.permute.xlu0 %245
  %249 = vset.pattern.permute.xlu0 0
  %250 = vperm.xlu0 %249, %v242
  %v251 = vpop.permute.xlu0 %250
  %v253 = vmul.f32 %v239, %v246
  %v254 = vmul.f32 %v240, %v251
  %v255 = vpack.c.bf16 %v254, %v253
  %v257 = vunpack.c.l.b16 %v255
  %v258 = vunpack.c.h.b16 %v255
  %v259 = vpack.c.b16 %v257, %v257
  %v260 = vpack.c.b16 %v258, %v258
  %vm263 = vcmask 257024
  %264 = vst.msk [vmem:[%s8] sm:$0xf] %vm263, %v259
  %265 = vst.msk [vmem:[%s8 + $0x4] sm:$0xf] %vm263, %v260
  // Predicated region
  $region34: #{transformer_forward.14} parent=0 // pred_check
    _
  $region35: #{transformer_forward.14} parent=0 // pred_check_branch
    %267 = sbr.rel (0) target = $region37
  $region36: #{transformer_forward.14} parent=0 // pred_region
    _
  $region37: #{transformer_forward.14} parent=0 // pred_fallthru
    _
  // Predicated region
  $region38: #{transformer_forward.14} parent=0 // pred_check
    _
  $region39: #{transformer_forward.14} parent=0 // pred_check_branch
    %269 = sbr.rel (0) target = $region41
  $region40: #{transformer_forward.14} parent=0 // pred_region
    _
  $region41: #{transformer_forward.14} parent=0 // pred_fallthru
    _

// kernel: transformer_forward.13
$region0: #{transformer_forward.13}
  #allocation0 [shape = 'u32[]', space=smem, size = 0x4, offset = 0x4, fixed_abs, tag = 'smem constant byte address 0x4 - core index']
  #allocation1 [shape = 'u32[144,128]{1,0:T(1,128)}', space=vmem, size = 0x12000, scoped, tag = 'internal scratch']
  #allocation2 [shape = 'bf16[16,32]{1,0:T(8,128)(2,1)}', space=vmem, size = 0x1000, scoped, tag = 'scratch operand']
  %s0 = inlined_call_operand.vmem [shape: bf16[2,8,32], index: 0, kind: input, shape index: {}]
  %s1 = inlined_call_operand.vmem [shape: f32[2,1,8], index: 1, kind: input, shape index: {}]
  %s2 = inlined_call_operand.vmem [shape: f32[2,8,1], index: 2, kind: input, shape index: {}]
  %s3 = inlined_call_operand.vmem [shape: bf16[32,96], index: 3, kind: input, shape index: {}]
  %s4 = inlined_call_operand.vmem [shape: f32[1,96], index: 4, kind: input, shape index: {}]
  %s5 = inlined_call_operand.vmem [shape: bf16[32,32], index: 5, kind: input, shape index: {}]
  %s6 = inlined_call_operand.vmem [shape: f32[1,32], index: 6, kind: input, shape index: {}]
  %s7 = inlined_call_operand.vmem [shape: f32[1,32], index: 7, kind: input, shape index: {}]
  %s8 = inlined_call_operand.vmem [shape: f32[1,32], index: 8, kind: input, shape index: {}]
  %s9 = inlined_call_operand.vmem [shape: bf16[2,8,32], index: 9, kind: output, shape index: {}]
  %s10 = sld [smem:[#allocation0]]
  $region46: #{transformer_forward.13} parent=0
    _
  %s12 = ssub.s32 1, %s10
  %s13 = scalar_select 0, %s12, %s10
  // Predicated region
  $region2: #{transformer_forward.13} parent=0 // pred_check
    _
  $region3: #{transformer_forward.13} parent=0 // pred_check_branch
    %15 = sbr.rel (0) target = $region5
  $region4: #{transformer_forward.13} parent=0 // pred_region
    _
  $region5: #{transformer_forward.13} parent=0 // pred_fallthru
    _
  // Predicated region
  $region6: #{transformer_forward.13} parent=0 // pred_check
    _
  $region7: #{transformer_forward.13} parent=0 // pred_check_branch
    %17 = sbr.rel (0) target = $region9
  $region8: #{transformer_forward.13} parent=0 // pred_region
    _
  $region9: #{transformer_forward.13} parent=0 // pred_fallthru
    _
  // Predicated region
  $region10: #{transformer_forward.13} parent=0 // pred_check
    _
  $region11: #{transformer_forward.13} parent=0 // pred_check_branch
    %19 = sbr.rel (0) target = $region13
  $region12: #{transformer_forward.13} parent=0 // pred_region
    _
  $region13: #{transformer_forward.13} parent=0 // pred_fallthru
    _
  // Predicated region
  $region14: #{transformer_forward.13} parent=0 // pred_check
    _
  $region15: #{transformer_forward.13} parent=0 // pred_check_branch
    %21 = sbr.rel (0) target = $region17
  $region16: #{transformer_forward.13} parent=0 // pred_region
    _
  $region17: #{transformer_forward.13} parent=0 // pred_fallthru
    _
  // Predicated region
  $region18: #{transformer_forward.13} parent=0 // pred_check
    _
  $region19: #{transformer_forward.13} parent=0 // pred_check_branch
    %23 = sbr.rel (0) target = $region21
  $region20: #{transformer_forward.13} parent=0 // pred_region
    _
  $region21: #{transformer_forward.13} parent=0 // pred_fallthru
    _
  // Predicated region
  $region22: #{transformer_forward.13} parent=0 // pred_check
    _
  $region23: #{transformer_forward.13} parent=0 // pred_check_branch
    %25 = sbr.rel (0) target = $region25
  $region24: #{transformer_forward.13} parent=0 // pred_region
    _
  $region25: #{transformer_forward.13} parent=0 // pred_fallthru
    _
  // Predicated region
  $region26: #{transformer_forward.13} parent=0 // pred_check
    _
  $region27: #{transformer_forward.13} parent=0 // pred_check_branch
    %27 = sbr.rel (0) target = $region29
  $region28: #{transformer_forward.13} parent=0 // pred_region
    _
  $region29: #{transformer_forward.13} parent=0 // pred_fallthru
    _
  // Predicated region
  $region30: #{transformer_forward.13} parent=0 // pred_check
    _
  $region31: #{transformer_forward.13} parent=0 // pred_check_branch
    %29 = sbr.rel (0) target = $region33
  $region32: #{transformer_forward.13} parent=0 // pred_region
    _
  $region33: #{transformer_forward.13} parent=0 // pred_fallthru
    _
  // Predicated region
  $region34: #{transformer_forward.13} parent=0 // pred_check
    _
  $region35: #{transformer_forward.13} parent=0 // pred_check_branch
    %31 = sbr.rel (0) target = $region37
  $region36: #{transformer_forward.13} parent=0 // pred_region
    _
  $region37: #{transformer_forward.13} parent=0 // pred_fallthru
    _
  %v33 = vld [vmem:[%s0] sm:$0xf]
  %v34 = vld [vmem:[%s0 + $0x4] sm:$0xf]
  %v35 = vld [vmem:[%s3] sm:$0xf]
  %v36 = vld [vmem:[%s3 + $0x4] sm:$0xf]
  %v37 = vld [vmem:[%s3 + $0x8] sm:$0xf]
  %v38 = vld [vmem:[%s3 + $0xc] sm:$0xf]
  %v39 = vld [vmem:[%s4] sm:$0x1]
  %v41 = vlaneseq
  %v42 = vshrl.u32 %v41, 7
  %v43 = vsub.s32 0, %v42
  %v44 = vrot.slane %v39, %v43
  %v48 = vunpack.c.l.b16 %v33
  %v49 = vunpack.c.l.b16 %v34
  %v50 = vpack.c.b16 %v49, %v48
  %v55 = vunpack.c.l.b16 %v35
  %v56 = vunpack.c.l.b16 %v36
  %v57 = vunpack.c.l.b16 %v37
  %v58 = vunpack.c.l.b16 %v38
  %v59 = vpack.c.b16 %v56, %v55
  %v60 = vpack.c.b16 %v58, %v57
  %vm63 = vcmask 261120
  %v65 = vsel %vm63, %v50, 0
  %67 = vmatprep.subr.bf16.mxu0 0
  %68 = vmatpush1.bf16.msra.mxu0 0
  %69 = vmatprep.subr.bf16.mxu0 0
  %70 = vmatpush1.bf16.msra.mxu0 0
  %71 = vmatprep.subr.bf16.mxu0 0
  %72 = vmatpush1.bf16.msra.mxu0 0
  %73 = vmatprep.subr.bf16.mxu0 0
  %74 = vmatpush1.bf16.msra.mxu0 0
  %75 = vmatprep.subr.bf16.mxu0 0
  %76 = vmatpush1.bf16.msra.mxu0 0
  %77 = vmatprep.subr.bf16.mxu0 0
  %78 = vmatpush1.bf16.msra.mxu0 0
  %79 = vmatprep.subr.bf16.mxu0 0
  %80 = vmatpush1.bf16.msra.mxu0 %v60
  %81 = vmatprep.subr.bf16.mxu0 0
  %82 = vmatpush1.bf16.msra.mxu0 %v59
  %83 = vmatprep.subr.bf16.mxu0 0
  %84 = vmatpush2.bf16.msra.mxu0 0
  %85 = vmatprep.subr.bf16.mxu0 0
  %86 = vmatpush2.bf16.msra.mxu0 0
  %87 = vmatprep.subr.bf16.mxu0 0
  %88 = vmatpush2.bf16.msra.mxu0 0
  %89 = vmatprep.subr.bf16.mxu0 0
  %90 = vmatpush2.bf16.msra.mxu0 0
  %91 = vmatprep.subr.bf16.mxu0 0
  %92 = vmatpush2.bf16.msra.mxu0 0
  %93 = vmatprep.subr.bf16.mxu0 0
  %94 = vmatpush2.bf16.msra.mxu0 0
  %95 = vmatprep.subr.bf16.mxu0 0
  %96 = vmatpush2.bf16.msra.mxu0 0
  %97 = vmatprep.subr.bf16.mxu0 0
  %98 = vmatpush2.bf16.msra.mxu0 0
  %99 = vmatprep.mubr.bf16.mxu0 0
  %100 = vmatmul.mubr.bf16.gmra.mxu0 %v65
  %v101 = vpop.f32.mrf.mxu0
  %v102 = vadd.f32 %v44, %v101
  %v103 = vpop.f32.mrf.mxu0
  %v104 = vpop.f32.mrf.mxu0
  %v105 = vadd.f32 %v44, %v104
  %v106 = vpop.f32.mrf.mxu0
  %107 = vdwg.mxu0
  %v108 = vld [vmem:[%s1] sm:$0x1]
  %v109 = vld [vmem:[%s1 + $0x1] sm:$0x1]
  %v112 = vlaneseq
  %v113 = vshrl.u32 %v112, 7
  %v114 = vsub.s32 0, %v113
  %v115 = vrot.slane %v108, %v114
  %v116 = vlaneseq
  %v117 = vshrl.u32 %v116, 7
  %v118 = vsub.s32 0, %v117
  %v119 = vrot.slane %v109, %v118
  %v122 = vpack.c.bf16 %v102, %v102
  %v123 = vpack.c.bf16 %v105, %v105
  %125 = vrot.lane.b32.xlu0 %v122, 96
  %v126 = vpop.permute.xlu0 %125
  %vm127 = vcmask 130048
  %v129 = vsel %vm127, %v122, 0
  %v132 = vsel %vm127, %v126, 0
  %134 = vmatprep.subr.bf16.mxu0 0
  %135 = vmatpush1.bf16.xpose.msra.mxu0 0
  %136 = vmatprep.subr.bf16.mxu0 0
  %137 = vmatpush1.bf16.xpose.msra.mxu0 0
  %138 = vmatprep.subr.bf16.mxu0 0
  %139 = vmatpush1.bf16.xpose.msra.mxu0 0
  %140 = vmatprep.subr.bf16.mxu0 0
  %141 = vmatpush1.bf16.xpose.msra.mxu0 0
  %142 = vmatprep.subr.bf16.mxu0 0
  %143 = vmatpush1.bf16.xpose.msra.mxu0 0
  %144 = vmatprep.subr.bf16.mxu0 0
  %145 = vmatpush1.bf16.xpose.msra.mxu0 0
  %146 = vmatprep.subr.bf16.mxu0 0
  %147 = vmatpush1.bf16.xpose.msra.mxu0 0
  %148 = vmatprep.subr.bf16.mxu0 0
  %149 = vmatpush1.bf16.xpose.msra.mxu0 %v132
  %150 = vmatprep.subr.bf16.mxu0 0
  %151 = vmatpush2.bf16.xpose.msra.mxu0 0
  %152 = vmatprep.subr.bf16.mxu0 0
  %153 = vmatpush2.bf16.xpose.msra.mxu0 0
  %154 = vmatprep.subr.bf16.mxu0 0
  %155 = vmatpush2.bf16.xpose.msra.mxu0 0
  %156 = vmatprep.subr.bf16.mxu0 0
  %157 = vmatpush2.bf16.xpose.msra.mxu0 0
  %158 = vmatprep.subr.bf16.mxu0 0
  %159 = vmatpush2.bf16.xpose.msra.mxu0 0
  %160 = vmatprep.subr.bf16.mxu0 0
  %161 = vmatpush2.bf16.xpose.msra.mxu0 0
  %162 = vmatprep.subr.bf16.mxu0 0
  %163 = vmatpush2.bf16.xpose.msra.mxu0 0
  %164 = vmatprep.subr.bf16.mxu0 0
  %165 = vmatpush2.bf16.xpose.msra.mxu0 0
  %166 = vmatprep.mubr.bf16.mxu0 0
  %167 = vmatmul.mubr.bf16.gmra.mxu0 %v129
  %v168 = vpop.f32.mrf.mxu0
  %v169 = vadd.f32 0.0, %v168
  %v170 = vpop.f32.mrf.mxu0
  %v171 = vpop.f32.mrf.mxu0
  %v172 = vpop.f32.mrf.mxu0
  %173 = vdwg.mxu0
  %175 = vrot.lane.b32.xlu0 %v123, 96
  %v176 = vpop.permute.xlu0 %175
  %v178 = vsel %vm127, %v123, 0
  %v181 = vsel %vm127, %v176, 0
  %183 = vmatprep.subr.bf16.mxu0 0
  %184 = vmatpush1.bf16.xpose.msra.mxu0 0
  %185 = vmatprep.subr.bf16.mxu0 0
  %186 = vmatpush1.bf16.xpose.msra.mxu0 0
  %187 = vmatprep.subr.bf16.mxu0 0
  %188 = vmatpush1.bf16.xpose.msra.mxu0 0
  %189 = vmatprep.subr.bf16.mxu0 0
  %190 = vmatpush1.bf16.xpose.msra.mxu0 0
  %191 = vmatprep.subr.bf16.mxu0 0
  %192 = vmatpush1.bf16.xpose.msra.mxu0 0
  %193 = vmatprep.subr.bf16.mxu0 0
  %194 = vmatpush1.bf16.xpose.msra.mxu0 0
  %195 = vmatprep.subr.bf16.mxu0 0
  %196 = vmatpush1.bf16.xpose.msra.mxu0 0
  %197 = vmatprep.subr.bf16.mxu0 0
  %198 = vmatpush1.bf16.xpose.msra.mxu0 %v181
  %199 = vmatprep.subr.bf16.mxu0 0
  %200 = vmatpush2.bf16.xpose.msra.mxu0 0
  %201 = vmatprep.subr.bf16.mxu0 0
  %202 = vmatpush2.bf16.xpose.msra.mxu0 0
  %203 = vmatprep.subr.bf16.mxu0 0
  %204 = vmatpush2.bf16.xpose.msra.mxu0 0
  %205 = vmatprep.subr.bf16.mxu0 0
  %206 = vmatpush2.bf16.xpose.msra.mxu0 0
  %207 = vmatprep.subr.bf16.mxu0 0
  %208 = vmatpush2.bf16.xpose.msra.mxu0 0
  %209 = vmatprep.subr.bf16.mxu0 0
  %210 = vmatpush2.bf16.xpose.msra.mxu0 0
  %211 = vmatprep.subr.bf16.mxu0 0
  %212 = vmatpush2.bf16.xpose.msra.mxu0 0
  %213 = vmatprep.subr.bf16.mxu0 0
  %214 = vmatpush2.bf16.xpose.msra.mxu0 0
  %215 = vmatprep.mubr.bf16.mxu0 0
  %216 = vmatmul.mubr.bf16.gmra.mxu0 %v178
  %v217 = vpop.f32.mrf.mxu0
  %v218 = vadd.f32 0.0, %v217
  %v219 = vpop.f32.mrf.mxu0
  %v220 = vpop.f32.mrf.mxu0
  %v221 = vpop.f32.mrf.mxu0
  %222 = vdwg.mxu0
  %v223 = vmul.f32 %v169, 0.25
  %v224 = vmul.f32 %v218, 0.25
  %v225 = vadd.f32 %v223, %v115
  %v226 = vadd.f32 %v224, %v119
  %vm227 = vcmask 64512
  %v228 = vsel %vm227, %v225, -inf
  %229 = vmax.xlane.f32.xlu0 %v228
  %v230 = vpop.xlane.xlu0 %229
  %v231 = vsel %vm227, %v226, -inf
  %232 = vmax.xlane.f32.xlu0 %v231
  %v233 = vpop.xlane.xlu0 %232
  %v234 = vsub.f32 %v225, %v230
  %v235 = vsub.f32 %v226, %v233
  %v236 = vmul.f32 %v234, 1.442695
  %v237 = vpow.pop %v236
  %v238 = vmul.f32 %v235, 1.442695
  %v239 = vpow.pop %v238
  %v240 = vsel %vm227, %v237, 0.0
  %241 = vadd.xlane.f32.xlu0 %v240
  %v242 = vpop.xlane.xlu0 %241
  %v243 = vsel %vm227, %v239, 0.0
  %244 = vadd.xlane.f32.xlu0 %v243
  %v245 = vpop.xlane.xlu0 %244
  %v246 = vrcp.pop %v242
  %v247 = vrcp.pop %v245
  %v248 = vmul.f32 %v237, %v246
  %v249 = vmul.f32 %v239, %v247
  %v250 = vpack.c.bf16 %v248, %v248
  %v251 = vpack.c.bf16 %v249, %v249
  %252 = vrot.lane.b32.xlu0 %v122, 64
  %v253 = vpop.permute.xlu0 %252
  %v255 = vsel %vm227, %v250, 0
  %vm257 = vcmask 1043456
  %v259 = vsel %vm257, %v253, 0
  %261 = vmatprep.subr.bf16.mxu0 0
  %262 = vmatpush1.bf16.msra.mxu0 0
  %263 = vmatprep.subr.bf16.mxu0 0
  %264 = vmatpush1.bf16.msra.mxu0 0
  %265 = vmatprep.subr.bf16.mxu0 0
  %266 = vmatpush1.bf16.msra.mxu0 0
  %267 = vmatprep.subr.bf16.mxu0 0
  %268 = vmatpush1.bf16.msra.mxu0 0
  %269 = vmatprep.subr.bf16.mxu0 0
  %270 = vmatpush1.bf16.msra.mxu0 0
  %271 = vmatprep.subr.bf16.mxu0 0
  %272 = vmatpush1.bf16.msra.mxu0 0
  %273 = vmatprep.subr.bf16.mxu0 0
  %274 = vmatpush1.bf16.msra.mxu0 0
  %275 = vmatprep.subr.bf16.mxu0 0
  %276 = vmatpush1.bf16.msra.mxu0 %v259
  %277 = vmatprep.subr.bf16.mxu0 0
  %278 = vmatpush2.bf16.msra.mxu0 0
  %279 = vmatprep.subr.bf16.mxu0 0
  %280 = vmatpush2.bf16.msra.mxu0 0
  %281 = vmatprep.subr.bf16.mxu0 0
  %282 = vmatpush2.bf16.msra.mxu0 0
  %283 = vmatprep.subr.bf16.mxu0 0
  %284 = vmatpush2.bf16.msra.mxu0 0
  %285 = vmatprep.subr.bf16.mxu0 0
  %286 = vmatpush2.bf16.msra.mxu0 0
  %287 = vmatprep.subr.bf16.mxu0 0
  %288 = vmatpush2.bf16.msra.mxu0 0
  %289 = vmatprep.subr.bf16.mxu0 0
  %290 = vmatpush2.bf16.msra.mxu0 0
  %291 = vmatprep.subr.bf16.mxu0 0
  %292 = vmatpush2.bf16.msra.mxu0 0
  %293 = vmatprep.mubr.bf16.mxu0 0
  %294 = vmatmul.mubr.bf16.gmra.mxu0 %v255
  %v295 = vpop.f32.mrf.mxu0
  %v296 = vadd.f32 0.0, %v295
  %v297 = vpop.f32.mrf.mxu0
  %v298 = vpop.f32.mrf.mxu0
  %v299 = vpop.f32.mrf.mxu0
  %300 = vdwg.mxu0
  %301 = vrot.lane.b32.xlu0 %v123, 64
  %v302 = vpop.permute.xlu0 %301
  %v304 = vsel %vm227, %v251, 0
  %v307 = vsel %vm257, %v302, 0
  %309 = vmatprep.subr.bf16.mxu0 0
  %310 = vmatpush1.bf16.msra.mxu0 0
  %311 = vmatprep.subr.bf16.mxu0 0
  %312 = vmatpush1.bf16.msra.mxu0 0
  %313 = vmatprep.subr.bf16.mxu0 0
  %314 = vmatpush1.bf16.msra.mxu0 0
  %315 = vmatprep.subr.bf16.mxu0 0
  %316 = vmatpush1.bf16.msra.mxu0 0
  %317 = vmatprep.subr.bf16.mxu0 0
  %318 = vmatpush1.bf16.msra.mxu0 0
  %319 = vmatprep.subr.bf16.mxu0 0
  %320 = vmatpush1.bf16.msra.mxu0 0
  %321 = vmatprep.subr.bf16.mxu0 0
  %322 = vmatpush1.bf16.msra.mxu0 0
  %323 = vmatprep.subr.bf16.mxu0 0
  %324 = vmatpush1.bf16.msra.mxu0 %v307
  %325 = vmatprep.subr.bf16.mxu0 0
  %326 = vmatpush2.bf16.msra.mxu0 0
  %327 = vmatprep.subr.bf16.mxu0 0
  %328 = vmatpush2.bf16.msra.mxu0 0
  %329 = vmatprep.subr.bf16.mxu0 0
  %330 = vmatpush2.bf16.msra.mxu0 0
  %331 = vmatprep.subr.bf16.mxu0 0
  %332 = vmatpush2.bf16.msra.mxu0 0
  %333 = vmatprep.subr.bf16.mxu0 0
  %334 = vmatpush2.bf16.msra.mxu0 0
  %335 = vmatprep.subr.bf16.mxu0 0
  %336 = vmatpush2.bf16.msra.mxu0 0
  %337 = vmatprep.subr.bf16.mxu0 0
  %338 = vmatpush2.bf16.msra.mxu0 0
  %339 = vmatprep.subr.bf16.mxu0 0
  %340 = vmatpush2.bf16.msra.mxu0 0
  %341 = vmatprep.mubr.bf16.mxu0 0
  %342 = vmatmul.mubr.bf16.gmra.mxu0 %v304
  %v343 = vpop.f32.mrf.mxu0
  %v344 = vadd.f32 0.0, %v343
  %v345 = vpop.f32.mrf.mxu0
  %v346 = vpop.f32.mrf.mxu0
  %v347 = vpop.f32.mrf.mxu0
  %348 = vdwg.mxu0
  %v349 = vpack.c.bf16 %v344, %v296
  %v351 = vunpack.c.l.b16 %v349
  %v352 = vunpack.c.h.b16 %v349
  %v353 = vpack.c.b16 %v351, %v351
  %v354 = vpack.c.b16 %v352, %v352
  %vm357 = vcmask 125952
  %358 = vst.msk [vmem:[#allocation2] sm:$0xf] %vm357, %v353
  %359 = vst.msk [vmem:[#allocation2 + $0x4] sm:$0xf] %vm357, %v354
  %360 = vrot.lane.b32.xlu0 %v122, 112
  %v361 = vpop.permute.xlu0 %360
  %362 = vrot.lane.b32.xlu0 %v122, 80
  %v363 = vpop.permute.xlu0 %362
  %v365 = vsel %vm127, %v361, 0
  %v368 = vsel %vm127, %v363, 0
  %370 = vmatprep.subr.bf16.mxu0 0
  %371 = vmatpush1.bf16.xpose.msra.mxu0 0
  %372 = vmatprep.subr.bf16.mxu0 0
  %373 = vmatpush1.bf16.xpose.msra.mxu0 0
  %374 = vmatprep.subr.bf16.mxu0 0
  %375 = vmatpush1.bf16.xpose.msra.mxu0 0
  %376 = vmatprep.subr.bf16.mxu0 0
  %377 = vmatpush1.bf16.xpose.msra.mxu0 0
  %378 = vmatprep.subr.bf16.mxu0 0
  %379 = vmatpush1.bf16.xpose.msra.mxu0 0
  %380 = vmatprep.subr.bf16.mxu0 0
  %381 = vmatpush1.bf16.xpose.msra.mxu0 0
  %382 = vmatprep.subr.bf16.mxu0 0
  %383 = vmatpush1.bf16.xpose.msra.mxu0 0
  %384 = vmatprep.subr.bf16.mxu0 0
  %385 = vmatpush1.bf16.xpose.msra.mxu0 %v368
  %386 = vmatprep.subr.bf16.mxu0 0
  %387 = vmatpush2.bf16.xpose.msra.mxu0 0
  %388 = vmatprep.subr.bf16.mxu0 0
  %389 = vmatpush2.bf16.xpose.msra.mxu0 0
  %390 = vmatprep.subr.bf16.mxu0 0
  %391 = vmatpush2.bf16.xpose.msra.mxu0 0
  %392 = vmatprep.subr.bf16.mxu0 0
  %393 = vmatpush2.bf16.xpose.msra.mxu0 0
  %394 = vmatprep.subr.bf16.mxu0 0
  %395 = vmatpush2.bf16.xpose.msra.mxu0 0
  %396 = vmatprep.subr.bf16.mxu0 0
  %397 = vmatpush2.bf16.xpose.msra.mxu0 0
  %398 = vmatprep.subr.bf16.mxu0 0
  %399 = vmatpush2.bf16.xpose.msra.mxu0 0
  %400 = vmatprep.subr.bf16.mxu0 0
  %401 = vmatpush2.bf16.xpose.msra.mxu0 0
  %402 = vmatprep.mubr.bf16.mxu0 0
  %403 = vmatmul.mubr.bf16.gmra.mxu0 %v365
  %v404 = vpop.f32.mrf.mxu0
  %v405 = vadd.f32 0.0, %v404
  %v406 = vpop.f32.mrf.mxu0
  %v407 = vpop.f32.mrf.mxu0
  %v408 = vpop.f32.mrf.mxu0
  %409 = vdwg.mxu0
  %410 = vrot.lane.b32.xlu0 %v123, 112
  %v411 = vpop.permute.xlu0 %410
  %412 = vrot.lane.b32.xlu0 %v123, 80
  %v413 = vpop.permute.xlu0 %412
  %v415 = vsel %vm127, %v411, 0
  %v418 = vsel %vm127, %v413, 0
  %420 = vmatprep.subr.bf16.mxu0 0
  %421 = vmatpush1.bf16.xpose.msra.mxu0 0
  %422 = vmatprep.subr.bf16.mxu0 0
  %423 = vmatpush1.bf16.xpose.msra.mxu0 0
  %424 = vmatprep.subr.bf16.mxu0 0
  %425 = vmatpush1.bf16.xpose.msra.mxu0 0
  %426 = vmatprep.subr.bf16.mxu0 0
  %427 = vmatpush1.bf16.xpose.msra.mxu0 0
  %428 = vmatprep.subr.bf16.mxu0 0
  %429 = vmatpush1.bf16.xpose.msra.mxu0 0
  %430 = vmatprep.subr.bf16.mxu0 0
  %431 = vmatpush1.bf16.xpose.msra.mxu0 0
  %432 = vmatprep.subr.bf16.mxu0 0
  %433 = vmatpush1.bf16.xpose.msra.mxu0 0
  %434 = vmatprep.subr.bf16.mxu0 0
  %435 = vmatpush1.bf16.xpose.msra.mxu0 %v418
  %436 = vmatprep.subr.bf16.mxu0 0
  %437 = vmatpush2.bf16.xpose.msra.mxu0 0
  %438 = vmatprep.subr.bf16.mxu0 0
  %439 = vmatpush2.bf16.xpose.msra.mxu0 0
  %440 = vmatprep.subr.bf16.mxu0 0
  %441 = vmatpush2.bf16.xpose.msra.mxu0 0
  %442 = vmatprep.subr.bf16.mxu0 0
  %443 = vmatpush2.bf16.xpose.msra.mxu0 0
  %444 = vmatprep.subr.bf16.mxu0 0
  %445 = vmatpush2.bf16.xpose.msra.mxu0 0
  %446 = vmatprep.subr.bf16.mxu0 0
  %447 = vmatpush2.bf16.xpose.msra.mxu0 0
  %448 = vmatprep.subr.bf16.mxu0 0
  %449 = vmatpush2.bf16.xpose.msra.mxu0 0
  %450 = vmatprep.subr.bf16.mxu0 0
  %451 = vmatpush2.bf16.xpose.msra.mxu0 0
  %452 = vmatprep.mubr.bf16.mxu0 0
  %453 = vmatmul.mubr.bf16.gmra.mxu0 %v415
  %v454 = vpop.f32.mrf.mxu0
  %v455 = vadd.f32 0.0, %v454
  %v456 = vpop.f32.mrf.mxu0
  %v457 = vpop.f32.mrf.mxu0
  %v458 = vpop.f32.mrf.mxu0
  %459 = vdwg.mxu0
  %v460 = vmul.f32 %v405, 0.25
  %v461 = vmul.f32 %v455, 0.25
  %v462 = vadd.f32 %v460, %v115
  %v463 = vadd.f32 %v461, %v119
  %v464 = vsel %vm227, %v462, -inf
  %465 = vmax.xlane.f32.xlu0 %v464
  %v466 = vpop.xlane.xlu0 %465
  %v467 = vsel %vm227, %v463, -inf
  %468 = vmax.xlane.f32.xlu0 %v467
  %v469 = vpop.xlane.xlu0 %468
  %v470 = vsub.f32 %v462, %v466
  %v471 = vsub.f32 %v463, %v469
  %v472 = vmul.f32 %v470, 1.442695
  %v473 = vpow.pop %v472
  %v474 = vmul.f32 %v471, 1.442695
  %v475 = vpow.pop %v474
  %v476 = vsel %vm227, %v473, 0.0
  %477 = vadd.xlane.f32.xlu0 %v476
  %v478 = vpop.xlane.xlu0 %477
  %v479 = vsel %vm227, %v475, 0.0
  %480 = vadd.xlane.f32.xlu0 %v479
  %v481 = vpop.xlane.xlu0 %480
  %v482 = vrcp.pop %v478
  %v483 = vrcp.pop %v481
  %v484 = vmul.f32 %v473, %v482
  %v485 = vmul.f32 %v475, %v483
  %v486 = vpack.c.bf16 %v484, %v484
  %v487 = vpack.c.bf16 %v485, %v485
  %488 = vrot.lane.b32.xlu0 %v122, 48
  %v489 = vpop.permute.xlu0 %488
  %v491 = vsel %vm227, %v486, 0
  %v494 = vsel %vm257, %v489, 0
  %496 = vmatprep.subr.bf16.mxu0 0
  %497 = vmatpush1.bf16.msra.mxu0 0
  %498 = vmatprep.subr.bf16.mxu0 0
  %499 = vmatpush1.bf16.msra.mxu0 0
  %500 = vmatprep.subr.bf16.mxu0 0
  %501 = vmatpush1.bf16.msra.mxu0 0
  %502 = vmatprep.subr.bf16.mxu0 0
  %503 = vmatpush1.bf16.msra.mxu0 0
  %504 = vmatprep.subr.bf16.mxu0 0
  %505 = vmatpush1.bf16.msra.mxu0 0
  %506 = vmatprep.subr.bf16.mxu0 0
  %507 = vmatpush1.bf16.msra.mxu0 0
  %508 = vmatprep.subr.bf16.mxu0 0
  %509 = vmatpush1.bf16.msra.mxu0 0
  %510 = vmatprep.subr.bf16.mxu0 0
  %511 = vmatpush1.bf16.msra.mxu0 %v494
  %512 = vmatprep.subr.bf16.mxu0 0
  %513 = vmatpush2.bf16.msra.mxu0 0
  %514 = vmatprep.subr.bf16.mxu0 0
  %515 = vmatpush2.bf16.msra.mxu0 0
  %516 = vmatprep.subr.bf16.mxu0 0
  %517 = vmatpush2.bf16.msra.mxu0 0
  %518 = vmatprep.subr.bf16.mxu0 0
  %519 = vmatpush2.bf16.msra.mxu0 0
  %520 = vmatprep.subr.bf16.mxu0 0
  %521 = vmatpush2.bf16.msra.mxu0 0
  %522 = vmatprep.subr.bf16.mxu0 0
  %523 = vmatpush2.bf16.msra.mxu0 0
  %524 = vmatprep.subr.bf16.mxu0 0
  %525 = vmatpush2.bf16.msra.mxu0 0
  %526 = vmatprep.subr.bf16.mxu0 0
  %527 = vmatpush2.bf16.msra.mxu0 0
  %528 = vmatprep.mubr.bf16.mxu0 0
  %529 = vmatmul.mubr.bf16.gmra.mxu0 %v491
  %v530 = vpop.f32.mrf.mxu0
  %v531 = vadd.f32 0.0, %v530
  %v532 = vpop.f32.mrf.mxu0
  %v533 = vpop.f32.mrf.mxu0
  %v534 = vpop.f32.mrf.mxu0
  %535 = vdwg.mxu0
  %536 = vrot.lane.b32.xlu0 %v123, 48
  %v537 = vpop.permute.xlu0 %536
  %v539 = vsel %vm227, %v487, 0
  %v542 = vsel %vm257, %v537, 0
  %544 = vmatprep.subr.bf16.mxu0 0
  %545 = vmatpush1.bf16.msra.mxu0 0
  %546 = vmatprep.subr.bf16.mxu0 0
  %547 = vmatpush1.bf16.msra.mxu0 0
  %548 = vmatprep.subr.bf16.mxu0 0
  %549 = vmatpush1.bf16.msra.mxu0 0
  %550 = vmatprep.subr.bf16.mxu0 0
  %551 = vmatpush1.bf16.msra.mxu0 0
  %552 = vmatprep.subr.bf16.mxu0 0
  %553 = vmatpush1.bf16.msra.mxu0 0
  %554 = vmatprep.subr.bf16.mxu0 0
  %555 = vmatpush1.bf16.msra.mxu0 0
  %556 = vmatprep.subr.bf16.mxu0 0
  %557 = vmatpush1.bf16.msra.mxu0 0
  %558 = vmatprep.subr.bf16.mxu0 0
  %559 = vmatpush1.bf16.msra.mxu0 %v542
  %560 = vmatprep.subr.bf16.mxu0 0
  %561 = vmatpush2.bf16.msra.mxu0 0
  %562 = vmatprep.subr.bf16.mxu0 0
  %563 = vmatpush2.bf16.msra.mxu0 0
  %564 = vmatprep.subr.bf16.mxu0 0
  %565 = vmatpush2.bf16.msra.mxu0 0
  %566 = vmatprep.subr.bf16.mxu0 0
  %567 = vmatpush2.bf16.msra.mxu0 0
  %568 = vmatprep.subr.bf16.mxu0 0
  %569 = vmatpush2.bf16.msra.mxu0 0
  %570 = vmatprep.subr.bf16.mxu0 0
  %571 = vmatpush2.bf16.msra.mxu0 0
  %572 = vmatprep.subr.bf16.mxu0 0
  %573 = vmatpush2.bf16.msra.mxu0 0
  %574 = vmatprep.subr.bf16.mxu0 0
  %575 = vmatpush2.bf16.msra.mxu0 0
  %576 = vmatprep.mubr.bf16.mxu0 0
  %577 = vmatmul.mubr.bf16.gmra.mxu0 %v539
  %v578 = vpop.f32.mrf.mxu0
  %v579 = vadd.f32 0.0, %v578
  %v580 = vpop.f32.mrf.mxu0
  %v581 = vpop.f32.mrf.mxu0
  %v582 = vpop.f32.mrf.mxu0
  %583 = vdwg.mxu0
  %v584 = vpack.c.bf16 %v579, %v531
  %v586 = vunpack.c.l.b16 %v584
  %v587 = vunpack.c.h.b16 %v584
  %v588 = vpack.c.b16 %v586, %v586
  %v589 = vpack.c.b16 %v587, %v587
  %590 = vrot.lane.b32.xlu0 %v588, 16
  %v591 = vpop.permute.xlu0 %590
  %592 = vrot.lane.b32.xlu0 %v589, 16
  %v593 = vpop.permute.xlu0 %592
  %vm596 = vcmask 257152
  %597 = vst.msk [vmem:[#allocation2] sm:$0xf] %vm596, %v591
  %598 = vst.msk [vmem:[#allocation2 + $0x4] sm:$0xf] %vm596, %v593
  %v599 = vunpack.c.l.bf16 %v33
  %v600 = vunpack.c.l.bf16 %v34
  %v601 = vld [vmem:[%s2] sm:$0xff]
  %v602 = vld [vmem:[%s2 + $0x8] sm:$0xff]
  %v603 = vld [vmem:[#allocation2] sm:$0xf]
  %v604 = vld [vmem:[#allocation2 + $0x4] sm:$0xf]
  %v605 = vld [vmem:[%s5] sm:$0xf]
  %v606 = vld [vmem:[%s5 + $0x4] sm:$0xf]
  %v607 = vld [vmem:[%s5 + $0x8] sm:$0xf]
  %v608 = vld [vmem:[%s5 + $0xc] sm:$0xf]
  %v609 = vld [vmem:[%s6] sm:$0x1]
  %v611 = vlaneseq
  %v612 = vshrl.u32 %v611, 7
  %v613 = vsub.s32 0, %v612
  %v614 = vrot.slane %v609, %v613
  %v618 = vunpack.c.l.b16 %v603
  %v619 = vunpack.c.l.b16 %v604
  %v620 = vpack.c.b16 %v619, %v618
  %v625 = vunpack.c.l.b16 %v605
  %v626 = vunpack.c.l.b16 %v606
  %v627 = vunpack.c.l.b16 %v607
  %v628 = vunpack.c.l.b16 %v608
  %v629 = vpack.c.b16 %v626, %v625
  %v630 = vpack.c.b16 %v628, %v627
  %v634 = vsel %vm63, %v620, 0
  %636 = vmatprep.subr.bf16.mxu0 0
  %637 = vmatpush1.bf16.msra.mxu0 0
  %638 = vmatprep.subr.bf16.mxu0 0
  %639 = vmatpush1.bf16.msra.mxu0 0
  %640 = vmatprep.subr.bf16.mxu0 0
  %641 = vmatpush1.bf16.msra.mxu0 0
  %642 = vmatprep.subr.bf16.mxu0 0
  %643 = vmatpush1.bf16.msra.mxu0 0
  %644 = vmatprep.subr.bf16.mxu0 0
  %645 = vmatpush1.bf16.msra.mxu0 0
  %646 = vmatprep.subr.bf16.mxu0 0
  %647 = vmatpush1.bf16.msra.mxu0 0
  %648 = vmatprep.subr.bf16.mxu0 0
  %649 = vmatpush1.bf16.msra.mxu0 %v630
  %650 = vmatprep.subr.bf16.mxu0 0
  %651 = vmatpush1.bf16.msra.mxu0 %v629
  %652 = vmatprep.subr.bf16.mxu0 0
  %653 = vmatpush2.bf16.msra.mxu0 0
  %654 = vmatprep.subr.bf16.mxu0 0
  %655 = vmatpush2.bf16.msra.mxu0 0
  %656 = vmatprep.subr.bf16.mxu0 0
  %657 = vmatpush2.bf16.msra.mxu0 0
  %658 = vmatprep.subr.bf16.mxu0 0
  %659 = vmatpush2.bf16.msra.mxu0 0
  %660 = vmatprep.subr.bf16.mxu0 0
  %661 = vmatpush2.bf16.msra.mxu0 0
  %662 = vmatprep.subr.bf16.mxu0 0
  %663 = vmatpush2.bf16.msra.mxu0 0
  %664 = vmatprep.subr.bf16.mxu0 0
  %665 = vmatpush2.bf16.msra.mxu0 0
  %666 = vmatprep.subr.bf16.mxu0 0
  %667 = vmatpush2.bf16.msra.mxu0 0
  %668 = vmatprep.mubr.bf16.mxu0 0
  %669 = vmatmul.mubr.bf16.gmra.mxu0 %v634
  %v670 = vpop.f32.mrf.mxu0
  %v671 = vadd.f32 %v614, %v670
  %v672 = vpop.f32.mrf.mxu0
  %v673 = vpop.f32.mrf.mxu0
  %v674 = vadd.f32 %v614, %v673
  %v675 = vpop.f32.mrf.mxu0
  %676 = vdwg.mxu0
  %v677 = vadd.f32 %v671, %v599
  %v678 = vadd.f32 %v674, %v600
  %v679 = vsel %vm63, %v677, 0.0
  %680 = vadd.xlane.f32.xlu0 %v679
  %v681 = vpop.xlane.xlu0 %680
  %v682 = vsel %vm63, %v678, 0.0
  %683 = vadd.xlane.f32.xlu0 %v682
  %v684 = vpop.xlane.xlu0 %683
  %v685 = vrcp.pop 32.0
  %v686 = vmul.f32 %v681, %v685
  %v687 = vmul.f32 %v684, %v685
  %v688 = vsub.f32 %v677, %v686
  %v689 = vsub.f32 %v678, %v687
  %v690 = vmul.f32 %v688, %v688
  %v691 = vmul.f32 %v689, %v689
  %v692 = vsel %vm63, %v690, 0.0
  %693 = vadd.xlane.f32.xlu0 %v692
  %v694 = vpop.xlane.xlu0 %693
  %v695 = vsel %vm63, %v691, 0.0
  %696 = vadd.xlane.f32.xlu0 %v695
  %v697 = vpop.xlane.xlu0 %696
  %v698 = vmul.f32 %v694, %v685
  %v699 = vmul.f32 %v697, %v685
  %v700 = vadd.f32 %v698, 1e-05
  %v701 = vadd.f32 %v699, 1e-05
  %v702 = vrsqrt.pop %v700
  %v703 = vrsqrt.pop %v701
  %v704 = vmul.f32 %v688, %v702
  %v705 = vmul.f32 %v689, %v703
  %v706 = vld [vmem:[%s7] sm:$0x1]
  %v708 = vlaneseq
  %v709 = vshrl.u32 %v708, 7
  %v710 = vsub.s32 0, %v709
  %v711 = vrot.slane %v706, %v710
  %v713 = vmul.f32 %v704, %v711
  %v714 = vmul.f32 %v705, %v711
  %v715 = vld [vmem:[%s8] sm:$0x1]
  %v717 = vlaneseq
  %v718 = vshrl.u32 %v717, 7
  %v719 = vsub.s32 0, %v718
  %v720 = vrot.slane %v715, %v719
  %v722 = vadd.f32 %v713, %v720
  %v723 = vadd.f32 %v714, %v720
  %725 = vset.pattern.permute.xlu0 0
  %726 = vperm.xlu0 %725, %v601
  %v727 = vpop.permute.xlu0 %726
  %730 = vset.pattern.permute.xlu0 0
  %731 = vperm.xlu0 %730, %v602
  %v732 = vpop.permute.xlu0 %731
  %v734 = vmul.f32 %v722, %v727
  %v735 = vmul.f32 %v723, %v732
  %v736 = vpack.c.bf16 %v734, %v734
  %v737 = vpack.c.bf16 %v735, %v735
  %vm738 = vcmask 257024
  %739 = vst.msk [vmem:[%s9] sm:$0xf] %vm738, %v736
  %740 = vst.msk [vmem:[%s9 + $0x4] sm:$0xf] %vm738, %v737
  // Predicated region
  $region38: #{transformer_forward.13} parent=0 // pred_check
    _
  $region39: #{transformer_forward.13} parent=0 // pred_check_branch
    %742 = sbr.rel (0) target = $region41
  $region40: #{transformer_forward.13} parent=0 // pred_region
    _
  $region41: #{transformer_forward.13} parent=0 // pred_fallthru
    _
  // Predicated region
  $region42: #{transformer_forward.13} parent=0 // pred_check
    _
  $region43: #{transformer_forward.13} parent=0 // pred_check_branch
    %744 = sbr.rel (0) target = $region45
  $region44: #{transformer_forward.13} parent=0 // pred_region
    _
  $region45: #{transformer_forward.13} parent=0 // pred_fallthru
    _

// kernel: transformer_forward.18
$region0: #{transformer_forward.18}
  #allocation0 [shape = 'u32[]', space=smem, size = 0x4, offset = 0x4, fixed_abs, tag = 'smem constant byte address 0x4 - core index']
  #allocation1 [shape = 'u32[144,128]{1,0:T(1,128)}', space=vmem, size = 0x12000, scoped, tag = 'internal scratch']
  #allocation2 [shape = 'bf16[16,32]{1,0:T(8,128)(2,1)}', space=vmem, size = 0x1000, scoped, tag = 'scratch operand']
  %s0 = inlined_call_operand.vmem [shape: bf16[2,8,32], index: 0, kind: input, shape index: {}]
  %s1 = inlined_call_operand.vmem [shape: f32[2,1,8], index: 1, kind: input, shape index: {}]
  %s2 = inlined_call_operand.vmem [shape: f32[2,8,1], index: 2, kind: input, shape index: {}]
  %s3 = inlined_call_operand.vmem [shape: bf16[32,96], index: 3, kind: input, shape index: {}]
  %s4 = inlined_call_operand.vmem [shape: f32[1,96], index: 4, kind: input, shape index: {}]
  %s5 = inlined_call_operand.vmem [shape: bf16[32,32], index: 5, kind: input, shape index: {}]
  %s6 = inlined_call_operand.vmem [shape: f32[1,32], index: 6, kind: input, shape index: {}]
  %s7 = inlined_call_operand.vmem [shape: f32[1,32], index: 7, kind: input, shape index: {}]
  %s8 = inlined_call_operand.vmem [shape: f32[1,32], index: 8, kind: input, shape index: {}]
  %s9 = inlined_call_operand.vmem [shape: bf16[2,8,32], index: 9, kind: output, shape index: {}]
  %s10 = sld [smem:[#allocation0]]
  $region46: #{transformer_forward.18} parent=0
    _
  %s12 = ssub.s32 1, %s10
  %s13 = scalar_select 0, %s12, %s10
  // Predicated region
  $region2: #{transformer_forward.18} parent=0 // pred_check
    _
  $region3: #{transformer_forward.18} parent=0 // pred_check_branch
    %15 = sbr.rel (0) target = $region5
  $region4: #{transformer_forward.18} parent=0 // pred_region
    _
  $region5: #{transformer_forward.18} parent=0 // pred_fallthru
    _
  // Predicated region
  $region6: #{transformer_forward.18} parent=0 // pred_check
    _
  $region7: #{transformer_forward.18} parent=0 // pred_check_branch
    %17 = sbr.rel (0) target = $region9
  $region8: #{transformer_forward.18} parent=0 // pred_region
    _
  $region9: #{transformer_forward.18} parent=0 // pred_fallthru
    _
  // Predicated region
  $region10: #{transformer_forward.18} parent=0 // pred_check
    _
  $region11: #{transformer_forward.18} parent=0 // pred_check_branch
    %19 = sbr.rel (0) target = $region13
  $region12: #{transformer_forward.18} parent=0 // pred_region
    _
  $region13: #{transformer_forward.18} parent=0 // pred_fallthru
    _
  // Predicated region
  $region14: #{transformer_forward.18} parent=0 // pred_check
    _
  $region15: #{transformer_forward.18} parent=0 // pred_check_branch
    %21 = sbr.rel (0) target = $region17
  $region16: #{transformer_forward.18} parent=0 // pred_region
    _
  $region17: #{transformer_forward.18} parent=0 // pred_fallthru
    _
  // Predicated region
  $region18: #{transformer_forward.18} parent=0 // pred_check
    _
  $region19: #{transformer_forward.18} parent=0 // pred_check_branch
    %23 = sbr.rel (0) target = $region21
  $region20: #{transformer_forward.18} parent=0 // pred_region
    _
  $region21: #{transformer_forward.18} parent=0 // pred_fallthru
    _
  // Predicated region
  $region22: #{transformer_forward.18} parent=0 // pred_check
    _
  $region23: #{transformer_forward.18} parent=0 // pred_check_branch
    %25 = sbr.rel (0) target = $region25
  $region24: #{transformer_forward.18} parent=0 // pred_region
    _
  $region25: #{transformer_forward.18} parent=0 // pred_fallthru
    _
  // Predicated region
  $region26: #{transformer_forward.18} parent=0 // pred_check
    _
  $region27: #{transformer_forward.18} parent=0 // pred_check_branch
    %27 = sbr.rel (0) target = $region29
  $region28: #{transformer_forward.18} parent=0 // pred_region
    _
  $region29: #{transformer_forward.18} parent=0 // pred_fallthru
    _
  // Predicated region
  $region30: #{transformer_forward.18} parent=0 // pred_check
    _
  $region31: #{transformer_forward.18} parent=0 // pred_check_branch
    %29 = sbr.rel (0) target = $region33
  $region32: #{transformer_forward.18} parent=0 // pred_region
    _
  $region33: #{transformer_forward.18} parent=0 // pred_fallthru
    _
  // Predicated region
  $region34: #{transformer_forward.18} parent=0 // pred_check
    _
  $region35: #{transformer_forward.18} parent=0 // pred_check_branch
    %31 = sbr.rel (0) target = $region37
  $region36: #{transformer_forward.18} parent=0 // pred_region
    _
  $region37: #{transformer_forward.18} parent=0 // pred_fallthru
    _
  %v33 = vld [vmem:[%s0] sm:$0xf]
  %v34 = vld [vmem:[%s0 + $0x4] sm:$0xf]
  %v35 = vld [vmem:[%s3] sm:$0xf]
  %v36 = vld [vmem:[%s3 + $0x4] sm:$0xf]
  %v37 = vld [vmem:[%s3 + $0x8] sm:$0xf]
  %v38 = vld [vmem:[%s3 + $0xc] sm:$0xf]
  %v39 = vld [vmem:[%s4] sm:$0x1]
  %v41 = vlaneseq
  %v42 = vshrl.u32 %v41, 7
  %v43 = vsub.s32 0, %v42
  %v44 = vrot.slane %v39, %v43
  %v48 = vunpack.c.l.b16 %v33
  %v49 = vunpack.c.l.b16 %v34
  %v50 = vpack.c.b16 %v49, %v48
  %v55 = vunpack.c.l.b16 %v35
  %v56 = vunpack.c.l.b16 %v36
  %v57 = vunpack.c.l.b16 %v37
  %v58 = vunpack.c.l.b16 %v38
  %v59 = vpack.c.b16 %v56, %v55
  %v60 = vpack.c.b16 %v58, %v57
  %vm63 = vcmask 261120
  %v65 = vsel %vm63, %v50, 0
  %67 = vmatprep.subr.bf16.mxu0 0
  %68 = vmatpush1.bf16.msra.mxu0 0
  %69 = vmatprep.subr.bf16.mxu0 0
  %70 = vmatpush1.bf16.msra.mxu0 0
  %71 = vmatprep.subr.bf16.mxu0 0
  %72 = vmatpush1.bf16.msra.mxu0 0
  %73 = vmatprep.subr.bf16.mxu0 0
  %74 = vmatpush1.bf16.msra.mxu0 0
  %75 = vmatprep.subr.bf16.mxu0 0
  %76 = vmatpush1.bf16.msra.mxu0 0
  %77 = vmatprep.subr.bf16.mxu0 0
  %78 = vmatpush1.bf16.msra.mxu0 0
  %79 = vmatprep.subr.bf16.mxu0 0
  %80 = vmatpush1.bf16.msra.mxu0 %v60
  %81 = vmatprep.subr.bf16.mxu0 0
  %82 = vmatpush1.bf16.msra.mxu0 %v59
  %83 = vmatprep.subr.bf16.mxu0 0
  %84 = vmatpush2.bf16.msra.mxu0 0
  %85 = vmatprep.subr.bf16.mxu0 0
  %86 = vmatpush2.bf16.msra.mxu0 0
  %87 = vmatprep.subr.bf16.mxu0 0
  %88 = vmatpush2.bf16.msra.mxu0 0
  %89 = vmatprep.subr.bf16.mxu0 0
  %90 = vmatpush2.bf16.msra.mxu0 0
  %91 = vmatprep.subr.bf16.mxu0 0
  %92 = vmatpush2.bf16.msra.mxu0 0
  %93 = vmatprep.subr.bf16.mxu0 0
  %94 = vmatpush2.bf16.msra.mxu0 0
  %95 = vmatprep.subr.bf16.mxu0 0
  %96 = vmatpush2.bf16.msra.mxu0 0
  %97 = vmatprep.subr.bf16.mxu0 0
  %98 = vmatpush2.bf16.msra.mxu0 0
  %99 = vmatprep.mubr.bf16.mxu0 0
  %100 = vmatmul.mubr.bf16.gmra.mxu0 %v65
  %v101 = vpop.f32.mrf.mxu0
  %v102 = vadd.f32 %v44, %v101
  %v103 = vpop.f32.mrf.mxu0
  %v104 = vpop.f32.mrf.mxu0
  %v105 = vadd.f32 %v44, %v104
  %v106 = vpop.f32.mrf.mxu0
  %107 = vdwg.mxu0
  %v108 = vld [vmem:[%s1] sm:$0x1]
  %v109 = vld [vmem:[%s1 + $0x1] sm:$0x1]
  %v112 = vlaneseq
  %v113 = vshrl.u32 %v112, 7
  %v114 = vsub.s32 0, %v113
  %v115 = vrot.slane %v108, %v114
  %v116 = vlaneseq
  %v117 = vshrl.u32 %v116, 7
  %v118 = vsub.s32 0, %v117
  %v119 = vrot.slane %v109, %v118
  %v122 = vlaneseq
  %v123 = vshrl.u32 %v122, 7
  %v124 = vlaneseq
  %v125 = vand.u32 %v124, 127
  %vm126 = vcmp.gt.s32.totalorder %v125, %v123
  %v127 = vsel %vm126, -1e+09, 0.0
  %v128 = vadd.f32 %v115, %v127
  %v129 = vadd.f32 %v119, %v127
  %v130 = vpack.c.bf16 %v102, %v102
  %v131 = vpack.c.bf16 %v105, %v105
  %133 = vrot.lane.b32.xlu0 %v130, 96
  %v134 = vpop.permute.xlu0 %133
  %vm135 = vcmask 130048
  %v137 = vsel %vm135, %v130, 0
  %v140 = vsel %vm135, %v134, 0
  %142 = vmatprep.subr.bf16.mxu0 0
  %143 = vmatpush1.bf16.xpose.msra.mxu0 0
  %144 = vmatprep.subr.bf16.mxu0 0
  %145 = vmatpush1.bf16.xpose.msra.mxu0 0
  %146 = vmatprep.subr.bf16.mxu0 0
  %147 = vmatpush1.bf16.xpose.msra.mxu0 0
  %148 = vmatprep.subr.bf16.mxu0 0
  %149 = vmatpush1.bf16.xpose.msra.mxu0 0
  %150 = vmatprep.subr.bf16.mxu0 0
  %151 = vmatpush1.bf16.xpose.msra.mxu0 0
  %152 = vmatprep.subr.bf16.mxu0 0
  %153 = vmatpush1.bf16.xpose.msra.mxu0 0
  %154 = vmatprep.subr.bf16.mxu0 0
  %155 = vmatpush1.bf16.xpose.msra.mxu0 0
  %156 = vmatprep.subr.bf16.mxu0 0
  %157 = vmatpush1.bf16.xpose.msra.mxu0 %v140
  %158 = vmatprep.subr.bf16.mxu0 0
  %159 = vmatpush2.bf16.xpose.msra.mxu0 0
  %160 = vmatprep.subr.bf16.mxu0 0
  %161 = vmatpush2.bf16.xpose.msra.mxu0 0
  %162 = vmatprep.subr.bf16.mxu0 0
  %163 = vmatpush2.bf16.xpose.msra.mxu0 0
  %164 = vmatprep.subr.bf16.mxu0 0
  %165 = vmatpush2.bf16.xpose.msra.mxu0 0
  %166 = vmatprep.subr.bf16.mxu0 0
  %167 = vmatpush2.bf16.xpose.msra.mxu0 0
  %168 = vmatprep.subr.bf16.mxu0 0
  %169 = vmatpush2.bf16.xpose.msra.mxu0 0
  %170 = vmatprep.subr.bf16.mxu0 0
  %171 = vmatpush2.bf16.xpose.msra.mxu0 0
  %172 = vmatprep.subr.bf16.mxu0 0
  %173 = vmatpush2.bf16.xpose.msra.mxu0 0
  %174 = vmatprep.mubr.bf16.mxu0 0
  %175 = vmatmul.mubr.bf16.gmra.mxu0 %v137
  %v176 = vpop.f32.mrf.mxu0
  %v177 = vadd.f32 0.0, %v176
  %v178 = vpop.f32.mrf.mxu0
  %v179 = vpop.f32.mrf.mxu0
  %v180 = vpop.f32.mrf.mxu0
  %181 = vdwg.mxu0
  %183 = vrot.lane.b32.xlu0 %v131, 96
  %v184 = vpop.permute.xlu0 %183
  %v186 = vsel %vm135, %v131, 0
  %v189 = vsel %vm135, %v184, 0
  %191 = vmatprep.subr.bf16.mxu0 0
  %192 = vmatpush1.bf16.xpose.msra.mxu0 0
  %193 = vmatprep.subr.bf16.mxu0 0
  %194 = vmatpush1.bf16.xpose.msra.mxu0 0
  %195 = vmatprep.subr.bf16.mxu0 0
  %196 = vmatpush1.bf16.xpose.msra.mxu0 0
  %197 = vmatprep.subr.bf16.mxu0 0
  %198 = vmatpush1.bf16.xpose.msra.mxu0 0
  %199 = vmatprep.subr.bf16.mxu0 0
  %200 = vmatpush1.bf16.xpose.msra.mxu0 0
  %201 = vmatprep.subr.bf16.mxu0 0
  %202 = vmatpush1.bf16.xpose.msra.mxu0 0
  %203 = vmatprep.subr.bf16.mxu0 0
  %204 = vmatpush1.bf16.xpose.msra.mxu0 0
  %205 = vmatprep.subr.bf16.mxu0 0
  %206 = vmatpush1.bf16.xpose.msra.mxu0 %v189
  %207 = vmatprep.subr.bf16.mxu0 0
  %208 = vmatpush2.bf16.xpose.msra.mxu0 0
  %209 = vmatprep.subr.bf16.mxu0 0
  %210 = vmatpush2.bf16.xpose.msra.mxu0 0
  %211 = vmatprep.subr.bf16.mxu0 0
  %212 = vmatpush2.bf16.xpose.msra.mxu0 0
  %213 = vmatprep.subr.bf16.mxu0 0
  %214 = vmatpush2.bf16.xpose.msra.mxu0 0
  %215 = vmatprep.subr.bf16.mxu0 0
  %216 = vmatpush2.bf16.xpose.msra.mxu0 0
  %217 = vmatprep.subr.bf16.mxu0 0
  %218 = vmatpush2.bf16.xpose.msra.mxu0 0
  %219 = vmatprep.subr.bf16.mxu0 0
  %220 = vmatpush2.bf16.xpose.msra.mxu0 0
  %221 = vmatprep.subr.bf16.mxu0 0
  %222 = vmatpush2.bf16.xpose.msra.mxu0 0
  %223 = vmatprep.mubr.bf16.mxu0 0
  %224 = vmatmul.mubr.bf16.gmra.mxu0 %v186
  %v225 = vpop.f32.mrf.mxu0
  %v226 = vadd.f32 0.0, %v225
  %v227 = vpop.f32.mrf.mxu0
  %v228 = vpop.f32.mrf.mxu0
  %v229 = vpop.f32.mrf.mxu0
  %230 = vdwg.mxu0
  %v231 = vmul.f32 %v177, 0.25
  %v232 = vmul.f32 %v226, 0.25
  %v233 = vadd.f32 %v231, %v128
  %v234 = vadd.f32 %v232, %v129
  %vm235 = vcmask 64512
  %v236 = vsel %vm235, %v233, -inf
  %237 = vmax.xlane.f32.xlu0 %v236
  %v238 = vpop.xlane.xlu0 %237
  %v239 = vsel %vm235, %v234, -inf
  %240 = vmax.xlane.f32.xlu0 %v239
  %v241 = vpop.xlane.xlu0 %240
  %v242 = vsub.f32 %v233, %v238
  %v243 = vsub.f32 %v234, %v241
  %v244 = vmul.f32 %v242, 1.442695
  %v245 = vpow.pop %v244
  %v246 = vmul.f32 %v243, 1.442695
  %v247 = vpow.pop %v246
  %v248 = vsel %vm235, %v245, 0.0
  %249 = vadd.xlane.f32.xlu0 %v248
  %v250 = vpop.xlane.xlu0 %249
  %v251 = vsel %vm235, %v247, 0.0
  %252 = vadd.xlane.f32.xlu0 %v251
  %v253 = vpop.xlane.xlu0 %252
  %v254 = vrcp.pop %v250
  %v255 = vrcp.pop %v253
  %v256 = vmul.f32 %v245, %v254
  %v257 = vmul.f32 %v247, %v255
  %v258 = vpack.c.bf16 %v256, %v256
  %v259 = vpack.c.bf16 %v257, %v257
  %260 = vrot.lane.b32.xlu0 %v130, 64
  %v261 = vpop.permute.xlu0 %260
  %v263 = vsel %vm235, %v258, 0
  %vm265 = vcmask 1043456
  %v267 = vsel %vm265, %v261, 0
  %269 = vmatprep.subr.bf16.mxu0 0
  %270 = vmatpush1.bf16.msra.mxu0 0
  %271 = vmatprep.subr.bf16.mxu0 0
  %272 = vmatpush1.bf16.msra.mxu0 0
  %273 = vmatprep.subr.bf16.mxu0 0
  %274 = vmatpush1.bf16.msra.mxu0 0
  %275 = vmatprep.subr.bf16.mxu0 0
  %276 = vmatpush1.bf16.msra.mxu0 0
  %277 = vmatprep.subr.bf16.mxu0 0
  %278 = vmatpush1.bf16.msra.mxu0 0
  %279 = vmatprep.subr.bf16.mxu0 0
  %280 = vmatpush1.bf16.msra.mxu0 0
  %281 = vmatprep.subr.bf16.mxu0 0
  %282 = vmatpush1.bf16.msra.mxu0 0
  %283 = vmatprep.subr.bf16.mxu0 0
  %284 = vmatpush1.bf16.msra.mxu0 %v267
  %285 = vmatprep.subr.bf16.mxu0 0
  %286 = vmatpush2.bf16.msra.mxu0 0
  %287 = vmatprep.subr.bf16.mxu0 0
  %288 = vmatpush2.bf16.msra.mxu0 0
  %289 = vmatprep.subr.bf16.mxu0 0
  %290 = vmatpush2.bf16.msra.mxu0 0
  %291 = vmatprep.subr.bf16.mxu0 0
  %292 = vmatpush2.bf16.msra.mxu0 0
  %293 = vmatprep.subr.bf16.mxu0 0
  %294 = vmatpush2.bf16.msra.mxu0 0
  %295 = vmatprep.subr.bf16.mxu0 0
  %296 = vmatpush2.bf16.msra.mxu0 0
  %297 = vmatprep.subr.bf16.mxu0 0
  %298 = vmatpush2.bf16.msra.mxu0 0
  %299 = vmatprep.subr.bf16.mxu0 0
  %300 = vmatpush2.bf16.msra.mxu0 0
  %301 = vmatprep.mubr.bf16.mxu0 0
  %302 = vmatmul.mubr.bf16.gmra.mxu0 %v263
  %v303 = vpop.f32.mrf.mxu0
  %v304 = vadd.f32 0.0, %v303
  %v305 = vpop.f32.mrf.mxu0
  %v306 = vpop.f32.mrf.mxu0
  %v307 = vpop.f32.mrf.mxu0
  %308 = vdwg.mxu0
  %309 = vrot.lane.b32.xlu0 %v131, 64
  %v310 = vpop.permute.xlu0 %309
  %v312 = vsel %vm235, %v259, 0
  %v315 = vsel %vm265, %v310, 0
  %317 = vmatprep.subr.bf16.mxu0 0
  %318 = vmatpush1.bf16.msra.mxu0 0
  %319 = vmatprep.subr.bf16.mxu0 0
  %320 = vmatpush1.bf16.msra.mxu0 0
  %321 = vmatprep.subr.bf16.mxu0 0
  %322 = vmatpush1.bf16.msra.mxu0 0
  %323 = vmatprep.subr.bf16.mxu0 0
  %324 = vmatpush1.bf16.msra.mxu0 0
  %325 = vmatprep.subr.bf16.mxu0 0
  %326 = vmatpush1.bf16.msra.mxu0 0
  %327 = vmatprep.subr.bf16.mxu0 0
  %328 = vmatpush1.bf16.msra.mxu0 0
  %329 = vmatprep.subr.bf16.mxu0 0
  %330 = vmatpush1.bf16.msra.mxu0 0
  %331 = vmatprep.subr.bf16.mxu0 0
  %332 = vmatpush1.bf16.msra.mxu0 %v315
  %333 = vmatprep.subr.bf16.mxu0 0
  %334 = vmatpush2.bf16.msra.mxu0 0
  %335 = vmatprep.subr.bf16.mxu0 0
  %336 = vmatpush2.bf16.msra.mxu0 0
  %337 = vmatprep.subr.bf16.mxu0 0
  %338 = vmatpush2.bf16.msra.mxu0 0
  %339 = vmatprep.subr.bf16.mxu0 0
  %340 = vmatpush2.bf16.msra.mxu0 0
  %341 = vmatprep.subr.bf16.mxu0 0
  %342 = vmatpush2.bf16.msra.mxu0 0
  %343 = vmatprep.subr.bf16.mxu0 0
  %344 = vmatpush2.bf16.msra.mxu0 0
  %345 = vmatprep.subr.bf16.mxu0 0
  %346 = vmatpush2.bf16.msra.mxu0 0
  %347 = vmatprep.subr.bf16.mxu0 0
  %348 = vmatpush2.bf16.msra.mxu0 0
  %349 = vmatprep.mubr.bf16.mxu0 0
  %350 = vmatmul.mubr.bf16.gmra.mxu0 %v312
  %v351 = vpop.f32.mrf.mxu0
  %v352 = vadd.f32 0.0, %v351
  %v353 = vpop.f32.mrf.mxu0
  %v354 = vpop.f32.mrf.mxu0
  %v355 = vpop.f32.mrf.mxu0
  %356 = vdwg.mxu0
  %v357 = vpack.c.bf16 %v352, %v304
  %v359 = vunpack.c.l.b16 %v357
  %v360 = vunpack.c.h.b16 %v357
  %v361 = vpack.c.b16 %v359, %v359
  %v362 = vpack.c.b16 %v360, %v360
  %vm365 = vcmask 125952
  %366 = vst.msk [vmem:[#allocation2] sm:$0xf] %vm365, %v361
  %367 = vst.msk [vmem:[#allocation2 + $0x4] sm:$0xf] %vm365, %v362
  %368 = vrot.lane.b32.xlu0 %v130, 112
  %v369 = vpop.permute.xlu0 %368
  %370 = vrot.lane.b32.xlu0 %v130, 80
  %v371 = vpop.permute.xlu0 %370
  %v373 = vsel %vm135, %v369, 0
  %v376 = vsel %vm135, %v371, 0
  %378 = vmatprep.subr.bf16.mxu0 0
  %379 = vmatpush1.bf16.xpose.msra.mxu0 0
  %380 = vmatprep.subr.bf16.mxu0 0
  %381 = vmatpush1.bf16.xpose.msra.mxu0 0
  %382 = vmatprep.subr.bf16.mxu0 0
  %383 = vmatpush1.bf16.xpose.msra.mxu0 0
  %384 = vmatprep.subr.bf16.mxu0 0
  %385 = vmatpush1.bf16.xpose.msra.mxu0 0
  %386 = vmatprep.subr.bf16.mxu0 0
  %387 = vmatpush1.bf16.xpose.msra.mxu0 0
  %388 = vmatprep.subr.bf16.mxu0 0
  %389 = vmatpush1.bf16.xpose.msra.mxu0 0
  %390 = vmatprep.subr.bf16.mxu0 0
  %391 = vmatpush1.bf16.xpose.msra.mxu0 0
  %392 = vmatprep.subr.bf16.mxu0 0
  %393 = vmatpush1.bf16.xpose.msra.mxu0 %v376
  %394 = vmatprep.subr.bf16.mxu0 0
  %395 = vmatpush2.bf16.xpose.msra.mxu0 0
  %396 = vmatprep.subr.bf16.mxu0 0
  %397 = vmatpush2.bf16.xpose.msra.mxu0 0
  %398 = vmatprep.subr.bf16.mxu0 0
  %399 = vmatpush2.bf16.xpose.msra.mxu0 0
  %400 = vmatprep.subr.bf16.mxu0 0
  %401 = vmatpush2.bf16.xpose.msra.mxu0 0
  %402 = vmatprep.subr.bf16.mxu0 0
  %403 = vmatpush2.bf16.xpose.msra.mxu0 0
  %404 = vmatprep.subr.bf16.mxu0 0
  %405 = vmatpush2.bf16.xpose.msra.mxu0 0
  %406 = vmatprep.subr.bf16.mxu0 0
  %407 = vmatpush2.bf16.xpose.msra.mxu0 0
  %408 = vmatprep.subr.bf16.mxu0 0
  %409 = vmatpush2.bf16.xpose.msra.mxu0 0
  %410 = vmatprep.mubr.bf16.mxu0 0
  %411 = vmatmul.mubr.bf16.gmra.mxu0 %v373
  %v412 = vpop.f32.mrf.mxu0
  %v413 = vadd.f32 0.0, %v412
  %v414 = vpop.f32.mrf.mxu0
  %v415 = vpop.f32.mrf.mxu0
  %v416 = vpop.f32.mrf.mxu0
  %417 = vdwg.mxu0
  %418 = vrot.lane.b32.xlu0 %v131, 112
  %v419 = vpop.permute.xlu0 %418
  %420 = vrot.lane.b32.xlu0 %v131, 80
  %v421 = vpop.permute.xlu0 %420
  %v423 = vsel %vm135, %v419, 0
  %v426 = vsel %vm135, %v421, 0
  %428 = vmatprep.subr.bf16.mxu0 0
  %429 = vmatpush1.bf16.xpose.msra.mxu0 0
  %430 = vmatprep.subr.bf16.mxu0 0
  %431 = vmatpush1.bf16.xpose.msra.mxu0 0
  %432 = vmatprep.subr.bf16.mxu0 0
  %433 = vmatpush1.bf16.xpose.msra.mxu0 0
  %434 = vmatprep.subr.bf16.mxu0 0
  %435 = vmatpush1.bf16.xpose.msra.mxu0 0
  %436 = vmatprep.subr.bf16.mxu0 0
  %437 = vmatpush1.bf16.xpose.msra.mxu0 0
  %438 = vmatprep.subr.bf16.mxu0 0
  %439 = vmatpush1.bf16.xpose.msra.mxu0 0
  %440 = vmatprep.subr.bf16.mxu0 0
  %441 = vmatpush1.bf16.xpose.msra.mxu0 0
  %442 = vmatprep.subr.bf16.mxu0 0
  %443 = vmatpush1.bf16.xpose.msra.mxu0 %v426
  %444 = vmatprep.subr.bf16.mxu0 0
  %445 = vmatpush2.bf16.xpose.msra.mxu0 0
  %446 = vmatprep.subr.bf16.mxu0 0
  %447 = vmatpush2.bf16.xpose.msra.mxu0 0
  %448 = vmatprep.subr.bf16.mxu0 0
  %449 = vmatpush2.bf16.xpose.msra.mxu0 0
  %450 = vmatprep.subr.bf16.mxu0 0
  %451 = vmatpush2.bf16.xpose.msra.mxu0 0
  %452 = vmatprep.subr.bf16.mxu0 0
  %453 = vmatpush2.bf16.xpose.msra.mxu0 0
  %454 = vmatprep.subr.bf16.mxu0 0
  %455 = vmatpush2.bf16.xpose.msra.mxu0 0
  %456 = vmatprep.subr.bf16.mxu0 0
  %457 = vmatpush2.bf16.xpose.msra.mxu0 0
  %458 = vmatprep.subr.bf16.mxu0 0
  %459 = vmatpush2.bf16.xpose.msra.mxu0 0
  %460 = vmatprep.mubr.bf16.mxu0 0
  %461 = vmatmul.mubr.bf16.gmra.mxu0 %v423
  %v462 = vpop.f32.mrf.mxu0
  %v463 = vadd.f32 0.0, %v462
  %v464 = vpop.f32.mrf.mxu0
  %v465 = vpop.f32.mrf.mxu0
  %v466 = vpop.f32.mrf.mxu0
  %467 = vdwg.mxu0
  %v468 = vmul.f32 %v413, 0.25
  %v469 = vmul.f32 %v463, 0.25
  %v470 = vadd.f32 %v468, %v128
  %v471 = vadd.f32 %v469, %v129
  %v472 = vsel %vm235, %v470, -inf
  %473 = vmax.xlane.f32.xlu0 %v472
  %v474 = vpop.xlane.xlu0 %473
  %v475 = vsel %vm235, %v471, -inf
  %476 = vmax.xlane.f32.xlu0 %v475
  %v477 = vpop.xlane.xlu0 %476
  %v478 = vsub.f32 %v470, %v474
  %v479 = vsub.f32 %v471, %v477
  %v480 = vmul.f32 %v478, 1.442695
  %v481 = vpow.pop %v480
  %v482 = vmul.f32 %v479, 1.442695
  %v483 = vpow.pop %v482
  %v484 = vsel %vm235, %v481, 0.0
  %485 = vadd.xlane.f32.xlu0 %v484
  %v486 = vpop.xlane.xlu0 %485
  %v487 = vsel %vm235, %v483, 0.0
  %488 = vadd.xlane.f32.xlu0 %v487
  %v489 = vpop.xlane.xlu0 %488
  %v490 = vrcp.pop %v486
  %v491 = vrcp.pop %v489
  %v492 = vmul.f32 %v481, %v490
  %v493 = vmul.f32 %v483, %v491
  %v494 = vpack.c.bf16 %v492, %v492
  %v495 = vpack.c.bf16 %v493, %v493
  %496 = vrot.lane.b32.xlu0 %v130, 48
  %v497 = vpop.permute.xlu0 %496
  %v499 = vsel %vm235, %v494, 0
  %v502 = vsel %vm265, %v497, 0
  %504 = vmatprep.subr.bf16.mxu0 0
  %505 = vmatpush1.bf16.msra.mxu0 0
  %506 = vmatprep.subr.bf16.mxu0 0
  %507 = vmatpush1.bf16.msra.mxu0 0
  %508 = vmatprep.subr.bf16.mxu0 0
  %509 = vmatpush1.bf16.msra.mxu0 0
  %510 = vmatprep.subr.bf16.mxu0 0
  %511 = vmatpush1.bf16.msra.mxu0 0
  %512 = vmatprep.subr.bf16.mxu0 0
  %513 = vmatpush1.bf16.msra.mxu0 0
  %514 = vmatprep.subr.bf16.mxu0 0
  %515 = vmatpush1.bf16.msra.mxu0 0
  %516 = vmatprep.subr.bf16.mxu0 0
  %517 = vmatpush1.bf16.msra.mxu0 0
  %518 = vmatprep.subr.bf16.mxu0 0
  %519 = vmatpush1.bf16.msra.mxu0 %v502
  %520 = vmatprep.subr.bf16.mxu0 0
  %521 = vmatpush2.bf16.msra.mxu0 0
  %522 = vmatprep.subr.bf16.mxu0 0
  %523 = vmatpush2.bf16.msra.mxu0 0
  %524 = vmatprep.subr.bf16.mxu0 0
  %525 = vmatpush2.bf16.msra.mxu0 0
  %526 = vmatprep.subr.bf16.mxu0 0
  %527 = vmatpush2.bf16.msra.mxu0 0
  %528 = vmatprep.subr.bf16.mxu0 0
  %529 = vmatpush2.bf16.msra.mxu0 0
  %530 = vmatprep.subr.bf16.mxu0 0
  %531 = vmatpush2.bf16.msra.mxu0 0
  %532 = vmatprep.subr.bf16.mxu0 0
  %533 = vmatpush2.bf16.msra.mxu0 0
  %534 = vmatprep.subr.bf16.mxu0 0
  %535 = vmatpush2.bf16.msra.mxu0 0
  %536 = vmatprep.mubr.bf16.mxu0 0
  %537 = vmatmul.mubr.bf16.gmra.mxu0 %v499
  %v538 = vpop.f32.mrf.mxu0
  %v539 = vadd.f32 0.0, %v538
  %v540 = vpop.f32.mrf.mxu0
  %v541 = vpop.f32.mrf.mxu0
  %v542 = vpop.f32.mrf.mxu0
  %543 = vdwg.mxu0
  %544 = vrot.lane.b32.xlu0 %v131, 48
  %v545 = vpop.permute.xlu0 %544
  %v547 = vsel %vm235, %v495, 0
  %v550 = vsel %vm265, %v545, 0
  %552 = vmatprep.subr.bf16.mxu0 0
  %553 = vmatpush1.bf16.msra.mxu0 0
  %554 = vmatprep.subr.bf16.mxu0 0
  %555 = vmatpush1.bf16.msra.mxu0 0
  %556 = vmatprep.subr.bf16.mxu0 0
  %557 = vmatpush1.bf16.msra.mxu0 0
  %558 = vmatprep.subr.bf16.mxu0 0
  %559 = vmatpush1.bf16.msra.mxu0 0
  %560 = vmatprep.subr.bf16.mxu0 0
  %561 = vmatpush1.bf16.msra.mxu0 0
  %562 = vmatprep.subr.bf16.mxu0 0
  %563 = vmatpush1.bf16.msra.mxu0 0
  %564 = vmatprep.subr.bf16.mxu0 0
  %565 = vmatpush1.bf16.msra.mxu0 0
  %566 = vmatprep.subr.bf16.mxu0 0
  %567 = vmatpush1.bf16.msra.mxu0 %v550
  %568 = vmatprep.subr.bf16.mxu0 0
  %569 = vmatpush2.bf16.msra.mxu0 0
  %570 = vmatprep.subr.bf16.mxu0 0
  %571 = vmatpush2.bf16.msra.mxu0 0
  %572 = vmatprep.subr.bf16.mxu0 0
  %573 = vmatpush2.bf16.msra.mxu0 0
  %574 = vmatprep.subr.bf16.mxu0 0
  %575 = vmatpush2.bf16.msra.mxu0 0
  %576 = vmatprep.subr.bf16.mxu0 0
  %577 = vmatpush2.bf16.msra.mxu0 0
  %578 = vmatprep.subr.bf16.mxu0 0
  %579 = vmatpush2.bf16.msra.mxu0 0
  %580 = vmatprep.subr.bf16.mxu0 0
  %581 = vmatpush2.bf16.msra.mxu0 0
  %582 = vmatprep.subr.bf16.mxu0 0
  %583 = vmatpush2.bf16.msra.mxu0 0
  %584 = vmatprep.mubr.bf16.mxu0 0
  %585 = vmatmul.mubr.bf16.gmra.mxu0 %v547
  %v586 = vpop.f32.mrf.mxu0
  %v587 = vadd.f32 0.0, %v586
  %v588 = vpop.f32.mrf.mxu0
  %v589 = vpop.f32.mrf.mxu0
  %v590 = vpop.f32.mrf.mxu0
  %591 = vdwg.mxu0
  %v592 = vpack.c.bf16 %v587, %v539
  %v594 = vunpack.c.l.b16 %v592
  %v595 = vunpack.c.h.b16 %v592
  %v596 = vpack.c.b16 %v594, %v594
  %v597 = vpack.c.b16 %v595, %v595
  %598 = vrot.lane.b32.xlu0 %v596, 16
  %v599 = vpop.permute.xlu0 %598
  %600 = vrot.lane.b32.xlu0 %v597, 16
  %v601 = vpop.permute.xlu0 %600
  %vm604 = vcmask 257152
  %605 = vst.msk [vmem:[#allocation2] sm:$0xf] %vm604, %v599
  %606 = vst.msk [vmem:[#allocation2 + $0x4] sm:$0xf] %vm604, %v601
  %v607 = vunpack.c.l.bf16 %v33
  %v608 = vunpack.c.l.bf16 %v34
  %v609 = vld [vmem:[%s2] sm:$0xff]
  %v610 = vld [vmem:[%s2 + $0x8] sm:$0xff]
  %v611 = vld [vmem:[#allocation2] sm:$0xf]
  %v612 = vld [vmem:[#allocation2 + $0x4] sm:$0xf]
  %v613 = vld [vmem:[%s5] sm:$0xf]
  %v614 = vld [vmem:[%s5 + $0x4] sm:$0xf]
  %v615 = vld [vmem:[%s5 + $0x8] sm:$0xf]
  %v616 = vld [vmem:[%s5 + $0xc] sm:$0xf]
  %v617 = vld [vmem:[%s6] sm:$0x1]
  %v619 = vlaneseq
  %v620 = vshrl.u32 %v619, 7
  %v621 = vsub.s32 0, %v620
  %v622 = vrot.slane %v617, %v621
  %v626 = vunpack.c.l.b16 %v611
  %v627 = vunpack.c.l.b16 %v612
  %v628 = vpack.c.b16 %v627, %v626
  %v633 = vunpack.c.l.b16 %v613
  %v634 = vunpack.c.l.b16 %v614
  %v635 = vunpack.c.l.b16 %v615
  %v636 = vunpack.c.l.b16 %v616
  %v637 = vpack.c.b16 %v634, %v633
  %v638 = vpack.c.b16 %v636, %v635
  %v642 = vsel %vm63, %v628, 0
  %644 = vmatprep.subr.bf16.mxu0 0
  %645 = vmatpush1.bf16.msra.mxu0 0
  %646 = vmatprep.subr.bf16.mxu0 0
  %647 = vmatpush1.bf16.msra.mxu0 0
  %648 = vmatprep.subr.bf16.mxu0 0
  %649 = vmatpush1.bf16.msra.mxu0 0
  %650 = vmatprep.subr.bf16.mxu0 0
  %651 = vmatpush1.bf16.msra.mxu0 0
  %652 = vmatprep.subr.bf16.mxu0 0
  %653 = vmatpush1.bf16.msra.mxu0 0
  %654 = vmatprep.subr.bf16.mxu0 0
  %655 = vmatpush1.bf16.msra.mxu0 0
  %656 = vmatprep.subr.bf16.mxu0 0
  %657 = vmatpush1.bf16.msra.mxu0 %v638
  %658 = vmatprep.subr.bf16.mxu0 0
  %659 = vmatpush1.bf16.msra.mxu0 %v637
  %660 = vmatprep.subr.bf16.mxu0 0
  %661 = vmatpush2.bf16.msra.mxu0 0
  %662 = vmatprep.subr.bf16.mxu0 0
  %663 = vmatpush2.bf16.msra.mxu0 0
  %664 = vmatprep.subr.bf16.mxu0 0
  %665 = vmatpush2.bf16.msra.mxu0 0
  %666 = vmatprep.subr.bf16.mxu0 0
  %667 = vmatpush2.bf16.msra.mxu0 0
  %668 = vmatprep.subr.bf16.mxu0 0
  %669 = vmatpush2.bf16.msra.mxu0 0
  %670 = vmatprep.subr.bf16.mxu0 0
  %671 = vmatpush2.bf16.msra.mxu0 0
  %672 = vmatprep.subr.bf16.mxu0 0
  %673 = vmatpush2.bf16.msra.mxu0 0
  %674 = vmatprep.subr.bf16.mxu0 0
  %675 = vmatpush2.bf16.msra.mxu0 0
  %676 = vmatprep.mubr.bf16.mxu0 0
  %677 = vmatmul.mubr.bf16.gmra.mxu0 %v642
  %v678 = vpop.f32.mrf.mxu0
  %v679 = vadd.f32 %v622, %v678
  %v680 = vpop.f32.mrf.mxu0
  %v681 = vpop.f32.mrf.mxu0
  %v682 = vadd.f32 %v622, %v681
  %v683 = vpop.f32.mrf.mxu0
  %684 = vdwg.mxu0
  %v685 = vadd.f32 %v679, %v607
  %v686 = vadd.f32 %v682, %v608
  %v687 = vsel %vm63, %v685, 0.0
  %688 = vadd.xlane.f32.xlu0 %v687
  %v689 = vpop.xlane.xlu0 %688
  %v690 = vsel %vm63, %v686, 0.0
  %691 = vadd.xlane.f32.xlu0 %v690
  %v692 = vpop.xlane.xlu0 %691
  %v693 = vrcp.pop 32.0
  %v694 = vmul.f32 %v689, %v693
  %v695 = vmul.f32 %v692, %v693
  %v696 = vsub.f32 %v685, %v694
  %v697 = vsub.f32 %v686, %v695
  %v698 = vmul.f32 %v696, %v696
  %v699 = vmul.f32 %v697, %v697
  %v700 = vsel %vm63, %v698, 0.0
  %701 = vadd.xlane.f32.xlu0 %v700
  %v702 = vpop.xlane.xlu0 %701
  %v703 = vsel %vm63, %v699, 0.0
  %704 = vadd.xlane.f32.xlu0 %v703
  %v705 = vpop.xlane.xlu0 %704
  %v706 = vmul.f32 %v702, %v693
  %v707 = vmul.f32 %v705, %v693
  %v708 = vadd.f32 %v706, 1e-05
  %v709 = vadd.f32 %v707, 1e-05
  %v710 = vrsqrt.pop %v708
  %v711 = vrsqrt.pop %v709
  %v712 = vmul.f32 %v696, %v710
  %v713 = vmul.f32 %v697, %v711
  %v714 = vld [vmem:[%s7] sm:$0x1]
  %v716 = vlaneseq
  %v717 = vshrl.u32 %v716, 7
  %v718 = vsub.s32 0, %v717
  %v719 = vrot.slane %v714, %v718
  %v721 = vmul.f32 %v712, %v719
  %v722 = vmul.f32 %v713, %v719
  %v723 = vld [vmem:[%s8] sm:$0x1]
  %v725 = vlaneseq
  %v726 = vshrl.u32 %v725, 7
  %v727 = vsub.s32 0, %v726
  %v728 = vrot.slane %v723, %v727
  %v730 = vadd.f32 %v721, %v728
  %v731 = vadd.f32 %v722, %v728
  %733 = vset.pattern.permute.xlu0 0
  %734 = vperm.xlu0 %733, %v609
  %v735 = vpop.permute.xlu0 %734
  %738 = vset.pattern.permute.xlu0 0
  %739 = vperm.xlu0 %738, %v610
  %v740 = vpop.permute.xlu0 %739
  %v742 = vmul.f32 %v730, %v735
  %v743 = vmul.f32 %v731, %v740
  %v744 = vpack.c.bf16 %v742, %v742
  %v745 = vpack.c.bf16 %v743, %v743
  %vm746 = vcmask 257024
  %747 = vst.msk [vmem:[%s9] sm:$0xf] %vm746, %v744
  %748 = vst.msk [vmem:[%s9 + $0x4] sm:$0xf] %vm746, %v745
  // Predicated region
  $region38: #{transformer_forward.18} parent=0 // pred_check
    _
  $region39: #{transformer_forward.18} parent=0 // pred_check_branch
    %750 = sbr.rel (0) target = $region41
  $region40: #{transformer_forward.18} parent=0 // pred_region
    _
  $region41: #{transformer_forward.18} parent=0 // pred_fallthru
    _
  // Predicated region
  $region42: #{transformer_forward.18} parent=0 // pred_check
    _
  $region43: #{transformer_forward.18} parent=0 // pred_check_branch
    %752 = sbr.rel (0) target = $region45
  $region44: #{transformer_forward.18} parent=0 // pred_region
    _
  $region45: #{transformer_forward.18} parent=0 // pred_fallthru
    _

// kernel: transformer_forward.19
$region0: #{transformer_forward.19}
  #allocation0 [shape = 'u32[]', space=smem, size = 0x4, offset = 0x4, fixed_abs, tag = 'smem constant byte address 0x4 - core index']
  #allocation1 [shape = 'u32[144,128]{1,0:T(1,128)}', space=vmem, size = 0x12000, scoped, tag = 'internal scratch']
  #allocation2 [shape = 'bf16[16,32]{1,0:T(8,128)(2,1)}', space=vmem, size = 0x1000, scoped, tag = 'scratch operand']
  %s0 = inlined_call_operand.vmem [shape: bf16[2,8,32], index: 0, kind: input, shape index: {}]
  %s1 = inlined_call_operand.vmem [shape: bf16[2,8,32], index: 1, kind: input, shape index: {}]
  %s2 = inlined_call_operand.vmem [shape: f32[2,1,8], index: 2, kind: input, shape index: {}]
  %s3 = inlined_call_operand.vmem [shape: f32[2,8,1], index: 3, kind: input, shape index: {}]
  %s4 = inlined_call_operand.vmem [shape: bf16[32,32], index: 4, kind: input, shape index: {}]
  %s5 = inlined_call_operand.vmem [shape: f32[1,32], index: 5, kind: input, shape index: {}]
  %s6 = inlined_call_operand.vmem [shape: bf16[32,64], index: 6, kind: input, shape index: {}]
  %s7 = inlined_call_operand.vmem [shape: f32[1,64], index: 7, kind: input, shape index: {}]
  %s8 = inlined_call_operand.vmem [shape: bf16[32,32], index: 8, kind: input, shape index: {}]
  %s9 = inlined_call_operand.vmem [shape: f32[1,32], index: 9, kind: input, shape index: {}]
  %s10 = inlined_call_operand.vmem [shape: f32[1,32], index: 10, kind: input, shape index: {}]
  %s11 = inlined_call_operand.vmem [shape: f32[1,32], index: 11, kind: input, shape index: {}]
  %s12 = inlined_call_operand.vmem [shape: bf16[2,8,32], index: 12, kind: output, shape index: {}]
  %s13 = sld [smem:[#allocation0]]
  $region58: #{transformer_forward.19} parent=0
    _
  %s15 = ssub.s32 1, %s13
  %s16 = scalar_select 0, %s15, %s13
  // Predicated region
  $region2: #{transformer_forward.19} parent=0 // pred_check
    _
  $region3: #{transformer_forward.19} parent=0 // pred_check_branch
    %18 = sbr.rel (0) target = $region5
  $region4: #{transformer_forward.19} parent=0 // pred_region
    _
  $region5: #{transformer_forward.19} parent=0 // pred_fallthru
    _
  // Predicated region
  $region6: #{transformer_forward.19} parent=0 // pred_check
    _
  $region7: #{transformer_forward.19} parent=0 // pred_check_branch
    %20 = sbr.rel (0) target = $region9
  $region8: #{transformer_forward.19} parent=0 // pred_region
    _
  $region9: #{transformer_forward.19} parent=0 // pred_fallthru
    _
  // Predicated region
  $region10: #{transformer_forward.19} parent=0 // pred_check
    _
  $region11: #{transformer_forward.19} parent=0 // pred_check_branch
    %22 = sbr.rel (0) target = $region13
  $region12: #{transformer_forward.19} parent=0 // pred_region
    _
  $region13: #{transformer_forward.19} parent=0 // pred_fallthru
    _
  // Predicated region
  $region14: #{transformer_forward.19} parent=0 // pred_check
    _
  $region15: #{transformer_forward.19} parent=0 // pred_check_branch
    %24 = sbr.rel (0) target = $region17
  $region16: #{transformer_forward.19} parent=0 // pred_region
    _
  $region17: #{transformer_forward.19} parent=0 // pred_fallthru
    _
  // Predicated region
  $region18: #{transformer_forward.19} parent=0 // pred_check
    _
  $region19: #{transformer_forward.19} parent=0 // pred_check_branch
    %26 = sbr.rel (0) target = $region21
  $region20: #{transformer_forward.19} parent=0 // pred_region
    _
  $region21: #{transformer_forward.19} parent=0 // pred_fallthru
    _
  // Predicated region
  $region22: #{transformer_forward.19} parent=0 // pred_check
    _
  $region23: #{transformer_forward.19} parent=0 // pred_check_branch
    %28 = sbr.rel (0) target = $region25
  $region24: #{transformer_forward.19} parent=0 // pred_region
    _
  $region25: #{transformer_forward.19} parent=0 // pred_fallthru
    _
  // Predicated region
  $region26: #{transformer_forward.19} parent=0 // pred_check
    _
  $region27: #{transformer_forward.19} parent=0 // pred_check_branch
    %30 = sbr.rel (0) target = $region29
  $region28: #{transformer_forward.19} parent=0 // pred_region
    _
  $region29: #{transformer_forward.19} parent=0 // pred_fallthru
    _
  // Predicated region
  $region30: #{transformer_forward.19} parent=0 // pred_check
    _
  $region31: #{transformer_forward.19} parent=0 // pred_check_branch
    %32 = sbr.rel (0) target = $region33
  $region32: #{transformer_forward.19} parent=0 // pred_region
    _
  $region33: #{transformer_forward.19} parent=0 // pred_fallthru
    _
  // Predicated region
  $region34: #{transformer_forward.19} parent=0 // pred_check
    _
  $region35: #{transformer_forward.19} parent=0 // pred_check_branch
    %34 = sbr.rel (0) target = $region37
  $region36: #{transformer_forward.19} parent=0 // pred_region
    _
  $region37: #{transformer_forward.19} parent=0 // pred_fallthru
    _
  // Predicated region
  $region38: #{transformer_forward.19} parent=0 // pred_check
    _
  $region39: #{transformer_forward.19} parent=0 // pred_check_branch
    %36 = sbr.rel (0) target = $region41
  $region40: #{transformer_forward.19} parent=0 // pred_region
    _
  $region41: #{transformer_forward.19} parent=0 // pred_fallthru
    _
  // Predicated region
  $region42: #{transformer_forward.19} parent=0 // pred_check
    _
  $region43: #{transformer_forward.19} parent=0 // pred_check_branch
    %38 = sbr.rel (0) target = $region45
  $region44: #{transformer_forward.19} parent=0 // pred_region
    _
  $region45: #{transformer_forward.19} parent=0 // pred_fallthru
    _
  // Predicated region
  $region46: #{transformer_forward.19} parent=0 // pred_check
    _
  $region47: #{transformer_forward.19} parent=0 // pred_check_branch
    %40 = sbr.rel (0) target = $region49
  $region48: #{transformer_forward.19} parent=0 // pred_region
    _
  $region49: #{transformer_forward.19} parent=0 // pred_fallthru
    _
  %v42 = vld [vmem:[%s0] sm:$0xf]
  %v43 = vld [vmem:[%s0 + $0x4] sm:$0xf]
  %v44 = vld [vmem:[%s1] sm:$0xf]
  %v45 = vld [vmem:[%s1 + $0x4] sm:$0xf]
  %v46 = vld [vmem:[%s4] sm:$0xf]
  %v47 = vld [vmem:[%s4 + $0x4] sm:$0xf]
  %v48 = vld [vmem:[%s4 + $0x8] sm:$0xf]
  %v49 = vld [vmem:[%s4 + $0xc] sm:$0xf]
  %v50 = vld [vmem:[%s5] sm:$0x1]
  %v52 = vlaneseq
  %v53 = vshrl.u32 %v52, 7
  %v54 = vsub.s32 0, %v53
  %v55 = vrot.slane %v50, %v54
  %v59 = vunpack.c.l.b16 %v42
  %v60 = vunpack.c.l.b16 %v43
  %v61 = vpack.c.b16 %v60, %v59
  %v66 = vunpack.c.l.b16 %v46
  %v67 = vunpack.c.l.b16 %v47
  %v68 = vunpack.c.l.b16 %v48
  %v69 = vunpack.c.l.b16 %v49
  %v70 = vpack.c.b16 %v67, %v66
  %v71 = vpack.c.b16 %v69, %v68
  %vm74 = vcmask 261120
  %v76 = vsel %vm74, %v61, 0
  %78 = vmatprep.subr.bf16.mxu0 0
  %79 = vmatpush1.bf16.msra.mxu0 0
  %80 = vmatprep.subr.bf16.mxu0 0
  %81 = vmatpush1.bf16.msra.mxu0 0
  %82 = vmatprep.subr.bf16.mxu0 0
  %83 = vmatpush1.bf16.msra.mxu0 0
  %84 = vmatprep.subr.bf16.mxu0 0
  %85 = vmatpush1.bf16.msra.mxu0 0
  %86 = vmatprep.subr.bf16.mxu0 0
  %87 = vmatpush1.bf16.msra.mxu0 0
  %88 = vmatprep.subr.bf16.mxu0 0
  %89 = vmatpush1.bf16.msra.mxu0 0
  %90 = vmatprep.subr.bf16.mxu0 0
  %91 = vmatpush1.bf16.msra.mxu0 %v71
  %92 = vmatprep.subr.bf16.mxu0 0
  %93 = vmatpush1.bf16.msra.mxu0 %v70
  %94 = vmatprep.subr.bf16.mxu0 0
  %95 = vmatpush2.bf16.msra.mxu0 0
  %96 = vmatprep.subr.bf16.mxu0 0
  %97 = vmatpush2.bf16.msra.mxu0 0
  %98 = vmatprep.subr.bf16.mxu0 0
  %99 = vmatpush2.bf16.msra.mxu0 0
  %100 = vmatprep.subr.bf16.mxu0 0
  %101 = vmatpush2.bf16.msra.mxu0 0
  %102 = vmatprep.subr.bf16.mxu0 0
  %103 = vmatpush2.bf16.msra.mxu0 0
  %104 = vmatprep.subr.bf16.mxu0 0
  %105 = vmatpush2.bf16.msra.mxu0 0
  %106 = vmatprep.subr.bf16.mxu0 0
  %107 = vmatpush2.bf16.msra.mxu0 0
  %108 = vmatprep.subr.bf16.mxu0 0
  %109 = vmatpush2.bf16.msra.mxu0 0
  %110 = vmatprep.mubr.bf16.mxu0 0
  %111 = vmatmul.mubr.bf16.gmra.mxu0 %v76
  %v112 = vpop.f32.mrf.mxu0
  %v113 = vadd.f32 %v55, %v112
  %v114 = vpop.f32.mrf.mxu0
  %v115 = vpop.f32.mrf.mxu0
  %v116 = vadd.f32 %v55, %v115
  %v117 = vpop.f32.mrf.mxu0
  %118 = vdwg.mxu0
  %v119 = vld [vmem:[%s6] sm:$0xf]
  %v120 = vld [vmem:[%s6 + $0x4] sm:$0xf]
  %v121 = vld [vmem:[%s6 + $0x8] sm:$0xf]
  %v122 = vld [vmem:[%s6 + $0xc] sm:$0xf]
  %v123 = vld [vmem:[%s7] sm:$0x1]
  %v125 = vlaneseq
  %v126 = vshrl.u32 %v125, 7
  %v127 = vsub.s32 0, %v126
  %v128 = vrot.slane %v123, %v127
  %v132 = vunpack.c.l.b16 %v44
  %v133 = vunpack.c.l.b16 %v45
  %v134 = vpack.c.b16 %v133, %v132
  %v139 = vunpack.c.l.b16 %v119
  %v140 = vunpack.c.l.b16 %v120
  %v141 = vunpack.c.l.b16 %v121
  %v142 = vunpack.c.l.b16 %v122
  %v143 = vpack.c.b16 %v140, %v139
  %v144 = vpack.c.b16 %v142, %v141
  %v148 = vsel %vm74, %v134, 0
  %150 = vmatprep.subr.bf16.mxu0 0
  %151 = vmatpush1.bf16.msra.mxu0 0
  %152 = vmatprep.subr.bf16.mxu0 0
  %153 = vmatpush1.bf16.msra.mxu0 0
  %154 = vmatprep.subr.bf16.mxu0 0
  %155 = vmatpush1.bf16.msra.mxu0 0
  %156 = vmatprep.subr.bf16.mxu0 0
  %157 = vmatpush1.bf16.msra.mxu0 0
  %158 = vmatprep.subr.bf16.mxu0 0
  %159 = vmatpush1.bf16.msra.mxu0 0
  %160 = vmatprep.subr.bf16.mxu0 0
  %161 = vmatpush1.bf16.msra.mxu0 0
  %162 = vmatprep.subr.bf16.mxu0 0
  %163 = vmatpush1.bf16.msra.mxu0 %v144
  %164 = vmatprep.subr.bf16.mxu0 0
  %165 = vmatpush1.bf16.msra.mxu0 %v143
  %166 = vmatprep.subr.bf16.mxu0 0
  %167 = vmatpush2.bf16.msra.mxu0 0
  %168 = vmatprep.subr.bf16.mxu0 0
  %169 = vmatpush2.bf16.msra.mxu0 0
  %170 = vmatprep.subr.bf16.mxu0 0
  %171 = vmatpush2.bf16.msra.mxu0 0
  %172 = vmatprep.subr.bf16.mxu0 0
  %173 = vmatpush2.bf16.msra.mxu0 0
  %174 = vmatprep.subr.bf16.mxu0 0
  %175 = vmatpush2.bf16.msra.mxu0 0
  %176 = vmatprep.subr.bf16.mxu0 0
  %177 = vmatpush2.bf16.msra.mxu0 0
  %178 = vmatprep.subr.bf16.mxu0 0
  %179 = vmatpush2.bf16.msra.mxu0 0
  %180 = vmatprep.subr.bf16.mxu0 0
  %181 = vmatpush2.bf16.msra.mxu0 0
  %182 = vmatprep.mubr.bf16.mxu0 0
  %183 = vmatmul.mubr.bf16.gmra.mxu0 %v148
  %v184 = vpop.f32.mrf.mxu0
  %v185 = vadd.f32 %v128, %v184
  %v186 = vpop.f32.mrf.mxu0
  %v187 = vpop.f32.mrf.mxu0
  %v188 = vadd.f32 %v128, %v187
  %v189 = vpop.f32.mrf.mxu0
  %190 = vdwg.mxu0
  %v191 = vld [vmem:[%s2] sm:$0x1]
  %v192 = vld [vmem:[%s2 + $0x1] sm:$0x1]
  %v195 = vlaneseq
  %v196 = vshrl.u32 %v195, 7
  %v197 = vsub.s32 0, %v196
  %v198 = vrot.slane %v191, %v197
  %v199 = vlaneseq
  %v200 = vshrl.u32 %v199, 7
  %v201 = vsub.s32 0, %v200
  %v202 = vrot.slane %v192, %v201
  %v205 = vpack.c.bf16 %v113, %v113
  %v206 = vpack.c.bf16 %v116, %v116
  %v207 = vpack.c.bf16 %v185, %v185
  %v208 = vpack.c.bf16 %v188, %v188
  %vm209 = vcmask 130048
  %v211 = vsel %vm209, %v205, 0
  %v214 = vsel %vm209, %v207, 0
  %216 = vmatprep.subr.bf16.mxu0 0
  %217 = vmatpush1.bf16.xpose.msra.mxu0 0
  %218 = vmatprep.subr.bf16.mxu0 0
  %219 = vmatpush1.bf16.xpose.msra.mxu0 0
  %220 = vmatprep.subr.bf16.mxu0 0
  %221 = vmatpush1.bf16.xpose.msra.mxu0 0
  %222 = vmatprep.subr.bf16.mxu0 0
  %223 = vmatpush1.bf16.xpose.msra.mxu0 0
  %224 = vmatprep.subr.bf16.mxu0 0
  %225 = vmatpush1.bf16.xpose.msra.mxu0 0
  %226 = vmatprep.subr.bf16.mxu0 0
  %227 = vmatpush1.bf16.xpose.msra.mxu0 0
  %228 = vmatprep.subr.bf16.mxu0 0
  %229 = vmatpush1.bf16.xpose.msra.mxu0 0
  %230 = vmatprep.subr.bf16.mxu0 0
  %231 = vmatpush1.bf16.xpose.msra.mxu0 %v214
  %232 = vmatprep.subr.bf16.mxu0 0
  %233 = vmatpush2.bf16.xpose.msra.mxu0 0
  %234 = vmatprep.subr.bf16.mxu0 0
  %235 = vmatpush2.bf16.xpose.msra.mxu0 0
  %236 = vmatprep.subr.bf16.mxu0 0
  %237 = vmatpush2.bf16.xpose.msra.mxu0 0
  %238 = vmatprep.subr.bf16.mxu0 0
  %239 = vmatpush2.bf16.xpose.msra.mxu0 0
  %240 = vmatprep.subr.bf16.mxu0 0
  %241 = vmatpush2.bf16.xpose.msra.mxu0 0
  %242 = vmatprep.subr.bf16.mxu0 0
  %243 = vmatpush2.bf16.xpose.msra.mxu0 0
  %244 = vmatprep.subr.bf16.mxu0 0
  %245 = vmatpush2.bf16.xpose.msra.mxu0 0
  %246 = vmatprep.subr.bf16.mxu0 0
  %247 = vmatpush2.bf16.xpose.msra.mxu0 0
  %248 = vmatprep.mubr.bf16.mxu0 0
  %249 = vmatmul.mubr.bf16.gmra.mxu0 %v211
  %v250 = vpop.f32.mrf.mxu0
  %v251 = vadd.f32 0.0, %v250
  %v252 = vpop.f32.mrf.mxu0
  %v253 = vpop.f32.mrf.mxu0
  %v254 = vpop.f32.mrf.mxu0
  %255 = vdwg.mxu0
  %v257 = vsel %vm209, %v206, 0
  %v260 = vsel %vm209, %v208, 0
  %262 = vmatprep.subr.bf16.mxu0 0
  %263 = vmatpush1.bf16.xpose.msra.mxu0 0
  %264 = vmatprep.subr.bf16.mxu0 0
  %265 = vmatpush1.bf16.xpose.msra.mxu0 0
  %266 = vmatprep.subr.bf16.mxu0 0
  %267 = vmatpush1.bf16.xpose.msra.mxu0 0
  %268 = vmatprep.subr.bf16.mxu0 0
  %269 = vmatpush1.bf16.xpose.msra.mxu0 0
  %270 = vmatprep.subr.bf16.mxu0 0
  %271 = vmatpush1.bf16.xpose.msra.mxu0 0
  %272 = vmatprep.subr.bf16.mxu0 0
  %273 = vmatpush1.bf16.xpose.msra.mxu0 0
  %274 = vmatprep.subr.bf16.mxu0 0
  %275 = vmatpush1.bf16.xpose.msra.mxu0 0
  %276 = vmatprep.subr.bf16.mxu0 0
  %277 = vmatpush1.bf16.xpose.msra.mxu0 %v260
  %278 = vmatprep.subr.bf16.mxu0 0
  %279 = vmatpush2.bf16.xpose.msra.mxu0 0
  %280 = vmatprep.subr.bf16.mxu0 0
  %281 = vmatpush2.bf16.xpose.msra.mxu0 0
  %282 = vmatprep.subr.bf16.mxu0 0
  %283 = vmatpush2.bf16.xpose.msra.mxu0 0
  %284 = vmatprep.subr.bf16.mxu0 0
  %285 = vmatpush2.bf16.xpose.msra.mxu0 0
  %286 = vmatprep.subr.bf16.mxu0 0
  %287 = vmatpush2.bf16.xpose.msra.mxu0 0
  %288 = vmatprep.subr.bf16.mxu0 0
  %289 = vmatpush2.bf16.xpose.msra.mxu0 0
  %290 = vmatprep.subr.bf16.mxu0 0
  %291 = vmatpush2.bf16.xpose.msra.mxu0 0
  %292 = vmatprep.subr.bf16.mxu0 0
  %293 = vmatpush2.bf16.xpose.msra.mxu0 0
  %294 = vmatprep.mubr.bf16.mxu0 0
  %295 = vmatmul.mubr.bf16.gmra.mxu0 %v257
  %v296 = vpop.f32.mrf.mxu0
  %v297 = vadd.f32 0.0, %v296
  %v298 = vpop.f32.mrf.mxu0
  %v299 = vpop.f32.mrf.mxu0
  %v300 = vpop.f32.mrf.mxu0
  %301 = vdwg.mxu0
  %v302 = vmul.f32 %v251, 0.25
  %v303 = vmul.f32 %v297, 0.25
  %v304 = vadd.f32 %v302, %v198
  %v305 = vadd.f32 %v303, %v202
  %vm306 = vcmask 64512
  %v307 = vsel %vm306, %v304, -inf
  %308 = vmax.xlane.f32.xlu0 %v307
  %v309 = vpop.xlane.xlu0 %308
  %v310 = vsel %vm306, %v305, -inf
  %311 = vmax.xlane.f32.xlu0 %v310
  %v312 = vpop.xlane.xlu0 %311
  %v313 = vsub.f32 %v304, %v309
  %v314 = vsub.f32 %v305, %v312
  %v315 = vmul.f32 %v313, 1.442695
  %v316 = vpow.pop %v315
  %v317 = vmul.f32 %v314, 1.442695
  %v318 = vpow.pop %v317
  %v319 = vsel %vm306, %v316, 0.0
  %320 = vadd.xlane.f32.xlu0 %v319
  %v321 = vpop.xlane.xlu0 %320
  %v322 = vsel %vm306, %v318, 0.0
  %323 = vadd.xlane.f32.xlu0 %v322
  %v324 = vpop.xlane.xlu0 %323
  %v325 = vrcp.pop %v321
  %v326 = vrcp.pop %v324
  %v327 = vmul.f32 %v316, %v325
  %v328 = vmul.f32 %v318, %v326
  %v329 = vpack.c.bf16 %v327, %v327
  %v330 = vpack.c.bf16 %v328, %v328
  %332 = vrot.lane.b32.xlu0 %v207, 96
  %v333 = vpop.permute.xlu0 %332
  %v335 = vsel %vm306, %v329, 0
  %vm337 = vcmask 1043456
  %v339 = vsel %vm337, %v333, 0
  %341 = vmatprep.subr.bf16.mxu0 0
  %342 = vmatpush1.bf16.msra.mxu0 0
  %343 = vmatprep.subr.bf16.mxu0 0
  %344 = vmatpush1.bf16.msra.mxu0 0
  %345 = vmatprep.subr.bf16.mxu0 0
  %346 = vmatpush1.bf16.msra.mxu0 0
  %347 = vmatprep.subr.bf16.mxu0 0
  %348 = vmatpush1.bf16.msra.mxu0 0
  %349 = vmatprep.subr.bf16.mxu0 0
  %350 = vmatpush1.bf16.msra.mxu0 0
  %351 = vmatprep.subr.bf16.mxu0 0
  %352 = vmatpush1.bf16.msra.mxu0 0
  %353 = vmatprep.subr.bf16.mxu0 0
  %354 = vmatpush1.bf16.msra.mxu0 0
  %355 = vmatprep.subr.bf16.mxu0 0
  %356 = vmatpush1.bf16.msra.mxu0 %v339
  %357 = vmatprep.subr.bf16.mxu0 0
  %358 = vmatpush2.bf16.msra.mxu0 0
  %359 = vmatprep.subr.bf16.mxu0 0
  %360 = vmatpush2.bf16.msra.mxu0 0
  %361 = vmatprep.subr.bf16.mxu0 0
  %362 = vmatpush2.bf16.msra.mxu0 0
  %363 = vmatprep.subr.bf16.mxu0 0
  %364 = vmatpush2.bf16.msra.mxu0 0
  %365 = vmatprep.subr.bf16.mxu0 0
  %366 = vmatpush2.bf16.msra.mxu0 0
  %367 = vmatprep.subr.bf16.mxu0 0
  %368 = vmatpush2.bf16.msra.mxu0 0
  %369 = vmatprep.subr.bf16.mxu0 0
  %370 = vmatpush2.bf16.msra.mxu0 0
  %371 = vmatprep.subr.bf16.mxu0 0
  %372 = vmatpush2.bf16.msra.mxu0 0
  %373 = vmatprep.mubr.bf16.mxu0 0
  %374 = vmatmul.mubr.bf16.gmra.mxu0 %v335
  %v375 = vpop.f32.mrf.mxu0
  %v376 = vadd.f32 0.0, %v375
  %v377 = vpop.f32.mrf.mxu0
  %v378 = vpop.f32.mrf.mxu0
  %v379 = vpop.f32.mrf.mxu0
  %380 = vdwg.mxu0
  %382 = vrot.lane.b32.xlu0 %v208, 96
  %v383 = vpop.permute.xlu0 %382
  %v385 = vsel %vm306, %v330, 0
  %v388 = vsel %vm337, %v383, 0
  %390 = vmatprep.subr.bf16.mxu0 0
  %391 = vmatpush1.bf16.msra.mxu0 0
  %392 = vmatprep.subr.bf16.mxu0 0
  %393 = vmatpush1.bf16.msra.mxu0 0
  %394 = vmatprep.subr.bf16.mxu0 0
  %395 = vmatpush1.bf16.msra.mxu0 0
  %396 = vmatprep.subr.bf16.mxu0 0
  %397 = vmatpush1.bf16.msra.mxu0 0
  %398 = vmatprep.subr.bf16.mxu0 0
  %399 = vmatpush1.bf16.msra.mxu0 0
  %400 = vmatprep.subr.bf16.mxu0 0
  %401 = vmatpush1.bf16.msra.mxu0 0
  %402 = vmatprep.subr.bf16.mxu0 0
  %403 = vmatpush1.bf16.msra.mxu0 0
  %404 = vmatprep.subr.bf16.mxu0 0
  %405 = vmatpush1.bf16.msra.mxu0 %v388
  %406 = vmatprep.subr.bf16.mxu0 0
  %407 = vmatpush2.bf16.msra.mxu0 0
  %408 = vmatprep.subr.bf16.mxu0 0
  %409 = vmatpush2.bf16.msra.mxu0 0
  %410 = vmatprep.subr.bf16.mxu0 0
  %411 = vmatpush2.bf16.msra.mxu0 0
  %412 = vmatprep.subr.bf16.mxu0 0
  %413 = vmatpush2.bf16.msra.mxu0 0
  %414 = vmatprep.subr.bf16.mxu0 0
  %415 = vmatpush2.bf16.msra.mxu0 0
  %416 = vmatprep.subr.bf16.mxu0 0
  %417 = vmatpush2.bf16.msra.mxu0 0
  %418 = vmatprep.subr.bf16.mxu0 0
  %419 = vmatpush2.bf16.msra.mxu0 0
  %420 = vmatprep.subr.bf16.mxu0 0
  %421 = vmatpush2.bf16.msra.mxu0 0
  %422 = vmatprep.mubr.bf16.mxu0 0
  %423 = vmatmul.mubr.bf16.gmra.mxu0 %v385
  %v424 = vpop.f32.mrf.mxu0
  %v425 = vadd.f32 0.0, %v424
  %v426 = vpop.f32.mrf.mxu0
  %v427 = vpop.f32.mrf.mxu0
  %v428 = vpop.f32.mrf.mxu0
  %429 = vdwg.mxu0
  %v430 = vpack.c.bf16 %v425, %v376
  %v432 = vunpack.c.l.b16 %v430
  %v433 = vunpack.c.h.b16 %v430
  %v434 = vpack.c.b16 %v432, %v432
  %v435 = vpack.c.b16 %v433, %v433
  %vm438 = vcmask 125952
  %439 = vst.msk [vmem:[#allocation2] sm:$0xf] %vm438, %v434
  %440 = vst.msk [vmem:[#allocation2 + $0x4] sm:$0xf] %vm438, %v435
  %442 = vrot.lane.b32.xlu0 %v205, 112
  %v443 = vpop.permute.xlu0 %442
  %444 = vrot.lane.b32.xlu0 %v207, 112
  %v445 = vpop.permute.xlu0 %444
  %v447 = vsel %vm209, %v443, 0
  %v450 = vsel %vm209, %v445, 0
  %452 = vmatprep.subr.bf16.mxu0 0
  %453 = vmatpush1.bf16.xpose.msra.mxu0 0
  %454 = vmatprep.subr.bf16.mxu0 0
  %455 = vmatpush1.bf16.xpose.msra.mxu0 0
  %456 = vmatprep.subr.bf16.mxu0 0
  %457 = vmatpush1.bf16.xpose.msra.mxu0 0
  %458 = vmatprep.subr.bf16.mxu0 0
  %459 = vmatpush1.bf16.xpose.msra.mxu0 0
  %460 = vmatprep.subr.bf16.mxu0 0
  %461 = vmatpush1.bf16.xpose.msra.mxu0 0
  %462 = vmatprep.subr.bf16.mxu0 0
  %463 = vmatpush1.bf16.xpose.msra.mxu0 0
  %464 = vmatprep.subr.bf16.mxu0 0
  %465 = vmatpush1.bf16.xpose.msra.mxu0 0
  %466 = vmatprep.subr.bf16.mxu0 0
  %467 = vmatpush1.bf16.xpose.msra.mxu0 %v450
  %468 = vmatprep.subr.bf16.mxu0 0
  %469 = vmatpush2.bf16.xpose.msra.mxu0 0
  %470 = vmatprep.subr.bf16.mxu0 0
  %471 = vmatpush2.bf16.xpose.msra.mxu0 0
  %472 = vmatprep.subr.bf16.mxu0 0
  %473 = vmatpush2.bf16.xpose.msra.mxu0 0
  %474 = vmatprep.subr.bf16.mxu0 0
  %475 = vmatpush2.bf16.xpose.msra.mxu0 0
  %476 = vmatprep.subr.bf16.mxu0 0
  %477 = vmatpush2.bf16.xpose.msra.mxu0 0
  %478 = vmatprep.subr.bf16.mxu0 0
  %479 = vmatpush2.bf16.xpose.msra.mxu0 0
  %480 = vmatprep.subr.bf16.mxu0 0
  %481 = vmatpush2.bf16.xpose.msra.mxu0 0
  %482 = vmatprep.subr.bf16.mxu0 0
  %483 = vmatpush2.bf16.xpose.msra.mxu0 0
  %484 = vmatprep.mubr.bf16.mxu0 0
  %485 = vmatmul.mubr.bf16.gmra.mxu0 %v447
  %v486 = vpop.f32.mrf.mxu0
  %v487 = vadd.f32 0.0, %v486
  %v488 = vpop.f32.mrf.mxu0
  %v489 = vpop.f32.mrf.mxu0
  %v490 = vpop.f32.mrf.mxu0
  %491 = vdwg.mxu0
  %493 = vrot.lane.b32.xlu0 %v206, 112
  %v494 = vpop.permute.xlu0 %493
  %495 = vrot.lane.b32.xlu0 %v208, 112
  %v496 = vpop.permute.xlu0 %495
  %v498 = vsel %vm209, %v494, 0
  %v501 = vsel %vm209, %v496, 0
  %503 = vmatprep.subr.bf16.mxu0 0
  %504 = vmatpush1.bf16.xpose.msra.mxu0 0
  %505 = vmatprep.subr.bf16.mxu0 0
  %506 = vmatpush1.bf16.xpose.msra.mxu0 0
  %507 = vmatprep.subr.bf16.mxu0 0
  %508 = vmatpush1.bf16.xpose.msra.mxu0 0
  %509 = vmatprep.subr.bf16.mxu0 0
  %510 = vmatpush1.bf16.xpose.msra.mxu0 0
  %511 = vmatprep.subr.bf16.mxu0 0
  %512 = vmatpush1.bf16.xpose.msra.mxu0 0
  %513 = vmatprep.subr.bf16.mxu0 0
  %514 = vmatpush1.bf16.xpose.msra.mxu0 0
  %515 = vmatprep.subr.bf16.mxu0 0
  %516 = vmatpush1.bf16.xpose.msra.mxu0 0
  %517 = vmatprep.subr.bf16.mxu0 0
  %518 = vmatpush1.bf16.xpose.msra.mxu0 %v501
  %519 = vmatprep.subr.bf16.mxu0 0
  %520 = vmatpush2.bf16.xpose.msra.mxu0 0
  %521 = vmatprep.subr.bf16.mxu0 0
  %522 = vmatpush2.bf16.xpose.msra.mxu0 0
  %523 = vmatprep.subr.bf16.mxu0 0
  %524 = vmatpush2.bf16.xpose.msra.mxu0 0
  %525 = vmatprep.subr.bf16.mxu0 0
  %526 = vmatpush2.bf16.xpose.msra.mxu0 0
  %527 = vmatprep.subr.bf16.mxu0 0
  %528 = vmatpush2.bf16.xpose.msra.mxu0 0
  %529 = vmatprep.subr.bf16.mxu0 0
  %530 = vmatpush2.bf16.xpose.msra.mxu0 0
  %531 = vmatprep.subr.bf16.mxu0 0
  %532 = vmatpush2.bf16.xpose.msra.mxu0 0
  %533 = vmatprep.subr.bf16.mxu0 0
  %534 = vmatpush2.bf16.xpose.msra.mxu0 0
  %535 = vmatprep.mubr.bf16.mxu0 0
  %536 = vmatmul.mubr.bf16.gmra.mxu0 %v498
  %v537 = vpop.f32.mrf.mxu0
  %v538 = vadd.f32 0.0, %v537
  %v539 = vpop.f32.mrf.mxu0
  %v540 = vpop.f32.mrf.mxu0
  %v541 = vpop.f32.mrf.mxu0
  %542 = vdwg.mxu0
  %v543 = vmul.f32 %v487, 0.25
  %v544 = vmul.f32 %v538, 0.25
  %v545 = vadd.f32 %v543, %v198
  %v546 = vadd.f32 %v544, %v202
  %v547 = vsel %vm306, %v545, -inf
  %548 = vmax.xlane.f32.xlu0 %v547
  %v549 = vpop.xlane.xlu0 %548
  %v550 = vsel %vm306, %v546, -inf
  %551 = vmax.xlane.f32.xlu0 %v550
  %v552 = vpop.xlane.xlu0 %551
  %v553 = vsub.f32 %v545, %v549
  %v554 = vsub.f32 %v546, %v552
  %v555 = vmul.f32 %v553, 1.442695
  %v556 = vpow.pop %v555
  %v557 = vmul.f32 %v554, 1.442695
  %v558 = vpow.pop %v557
  %v559 = vsel %vm306, %v556, 0.0
  %560 = vadd.xlane.f32.xlu0 %v559
  %v561 = vpop.xlane.xlu0 %560
  %v562 = vsel %vm306, %v558, 0.0
  %563 = vadd.xlane.f32.xlu0 %v562
  %v564 = vpop.xlane.xlu0 %563
  %v565 = vrcp.pop %v561
  %v566 = vrcp.pop %v564
  %v567 = vmul.f32 %v556, %v565
  %v568 = vmul.f32 %v558, %v566
  %v569 = vpack.c.bf16 %v567, %v567
  %v570 = vpack.c.bf16 %v568, %v568
  %571 = vrot.lane.b32.xlu0 %v207, 80
  %v572 = vpop.permute.xlu0 %571
  %v574 = vsel %vm306, %v569, 0
  %v577 = vsel %vm337, %v572, 0
  %579 = vmatprep.subr.bf16.mxu0 0
  %580 = vmatpush1.bf16.msra.mxu0 0
  %581 = vmatprep.subr.bf16.mxu0 0
  %582 = vmatpush1.bf16.msra.mxu0 0
  %583 = vmatprep.subr.bf16.mxu0 0
  %584 = vmatpush1.bf16.msra.mxu0 0
  %585 = vmatprep.subr.bf16.mxu0 0
  %586 = vmatpush1.bf16.msra.mxu0 0
  %587 = vmatprep.subr.bf16.mxu0 0
  %588 = vmatpush1.bf16.msra.mxu0 0
  %589 = vmatprep.subr.bf16.mxu0 0
  %590 = vmatpush1.bf16.msra.mxu0 0
  %591 = vmatprep.subr.bf16.mxu0 0
  %592 = vmatpush1.bf16.msra.mxu0 0
  %593 = vmatprep.subr.bf16.mxu0 0
  %594 = vmatpush1.bf16.msra.mxu0 %v577
  %595 = vmatprep.subr.bf16.mxu0 0
  %596 = vmatpush2.bf16.msra.mxu0 0
  %597 = vmatprep.subr.bf16.mxu0 0
  %598 = vmatpush2.bf16.msra.mxu0 0
  %599 = vmatprep.subr.bf16.mxu0 0
  %600 = vmatpush2.bf16.msra.mxu0 0
  %601 = vmatprep.subr.bf16.mxu0 0
  %602 = vmatpush2.bf16.msra.mxu0 0
  %603 = vmatprep.subr.bf16.mxu0 0
  %604 = vmatpush2.bf16.msra.mxu0 0
  %605 = vmatprep.subr.bf16.mxu0 0
  %606 = vmatpush2.bf16.msra.mxu0 0
  %607 = vmatprep.subr.bf16.mxu0 0
  %608 = vmatpush2.bf16.msra.mxu0 0
  %609 = vmatprep.subr.bf16.mxu0 0
  %610 = vmatpush2.bf16.msra.mxu0 0
  %611 = vmatprep.mubr.bf16.mxu0 0
  %612 = vmatmul.mubr.bf16.gmra.mxu0 %v574
  %v613 = vpop.f32.mrf.mxu0
  %v614 = vadd.f32 0.0, %v613
  %v615 = vpop.f32.mrf.mxu0
  %v616 = vpop.f32.mrf.mxu0
  %v617 = vpop.f32.mrf.mxu0
  %618 = vdwg.mxu0
  %619 = vrot.lane.b32.xlu0 %v208, 80
  %v620 = vpop.permute.xlu0 %619
  %v622 = vsel %vm306, %v570, 0
  %v625 = vsel %vm337, %v620, 0
  %627 = vmatprep.subr.bf16.mxu0 0
  %628 = vmatpush1.bf16.msra.mxu0 0
  %629 = vmatprep.subr.bf16.mxu0 0
  %630 = vmatpush1.bf16.msra.mxu0 0
  %631 = vmatprep.subr.bf16.mxu0 0
  %632 = vmatpush1.bf16.msra.mxu0 0
  %633 = vmatprep.subr.bf16.mxu0 0
  %634 = vmatpush1.bf16.msra.mxu0 0
  %635 = vmatprep.subr.bf16.mxu0 0
  %636 = vmatpush1.bf16.msra.mxu0 0
  %637 = vmatprep.subr.bf16.mxu0 0
  %638 = vmatpush1.bf16.msra.mxu0 0
  %639 = vmatprep.subr.bf16.mxu0 0
  %640 = vmatpush1.bf16.msra.mxu0 0
  %641 = vmatprep.subr.bf16.mxu0 0
  %642 = vmatpush1.bf16.msra.mxu0 %v625
  %643 = vmatprep.subr.bf16.mxu0 0
  %644 = vmatpush2.bf16.msra.mxu0 0
  %645 = vmatprep.subr.bf16.mxu0 0
  %646 = vmatpush2.bf16.msra.mxu0 0
  %647 = vmatprep.subr.bf16.mxu0 0
  %648 = vmatpush2.bf16.msra.mxu0 0
  %649 = vmatprep.subr.bf16.mxu0 0
  %650 = vmatpush2.bf16.msra.mxu0 0
  %651 = vmatprep.subr.bf16.mxu0 0
  %652 = vmatpush2.bf16.msra.mxu0 0
  %653 = vmatprep.subr.bf16.mxu0 0
  %654 = vmatpush2.bf16.msra.mxu0 0
  %655 = vmatprep.subr.bf16.mxu0 0
  %656 = vmatpush2.bf16.msra.mxu0 0
  %657 = vmatprep.subr.bf16.mxu0 0
  %658 = vmatpush2.bf16.msra.mxu0 0
  %659 = vmatprep.mubr.bf16.mxu0 0
  %660 = vmatmul.mubr.bf16.gmra.mxu0 %v622
  %v661 = vpop.f32.mrf.mxu0
  %v662 = vadd.f32 0.0, %v661
  %v663 = vpop.f32.mrf.mxu0
  %v664 = vpop.f32.mrf.mxu0
  %v665 = vpop.f32.mrf.mxu0
  %666 = vdwg.mxu0
  %v667 = vpack.c.bf16 %v662, %v614
  %v669 = vunpack.c.l.b16 %v667
  %v670 = vunpack.c.h.b16 %v667
  %v671 = vpack.c.b16 %v669, %v669
  %v672 = vpack.c.b16 %v670, %v670
  %673 = vrot.lane.b32.xlu0 %v671, 16
  %v674 = vpop.permute.xlu0 %673
  %675 = vrot.lane.b32.xlu0 %v672, 16
  %v676 = vpop.permute.xlu0 %675
  %vm679 = vcmask 257152
  %680 = vst.msk [vmem:[#allocation2] sm:$0xf] %vm679, %v674
  %681 = vst.msk [vmem:[#allocation2 + $0x4] sm:$0xf] %vm679, %v676
  %v682 = vunpack.c.l.bf16 %v42
  %v683 = vunpack.c.l.bf16 %v43
  %v684 = vld [vmem:[%s3] sm:$0xff]
  %v685 = vld [vmem:[%s3 + $0x8] sm:$0xff]
  %v686 = vld [vmem:[#allocation2] sm:$0xf]
  %v687 = vld [vmem:[#allocation2 + $0x4] sm:$0xf]
  %v688 = vld [vmem:[%s8] sm:$0xf]
  %v689 = vld [vmem:[%s8 + $0x4] sm:$0xf]
  %v690 = vld [vmem:[%s8 + $0x8] sm:$0xf]
  %v691 = vld [vmem:[%s8 + $0xc] sm:$0xf]
  %v692 = vld [vmem:[%s9] sm:$0x1]
  %v694 = vlaneseq
  %v695 = vshrl.u32 %v694, 7
  %v696 = vsub.s32 0, %v695
  %v697 = vrot.slane %v692, %v696
  %v701 = vunpack.c.l.b16 %v686
  %v702 = vunpack.c.l.b16 %v687
  %v703 = vpack.c.b16 %v702, %v701
  %v708 = vunpack.c.l.b16 %v688
  %v709 = vunpack.c.l.b16 %v689
  %v710 = vunpack.c.l.b16 %v690
  %v711 = vunpack.c.l.b16 %v691
  %v712 = vpack.c.b16 %v709, %v708
  %v713 = vpack.c.b16 %v711, %v710
  %v717 = vsel %vm74, %v703, 0
  %719 = vmatprep.subr.bf16.mxu0 0
  %720 = vmatpush1.bf16.msra.mxu0 0
  %721 = vmatprep.subr.bf16.mxu0 0
  %722 = vmatpush1.bf16.msra.mxu0 0
  %723 = vmatprep.subr.bf16.mxu0 0
  %724 = vmatpush1.bf16.msra.mxu0 0
  %725 = vmatprep.subr.bf16.mxu0 0
  %726 = vmatpush1.bf16.msra.mxu0 0
  %727 = vmatprep.subr.bf16.mxu0 0
  %728 = vmatpush1.bf16.msra.mxu0 0
  %729 = vmatprep.subr.bf16.mxu0 0
  %730 = vmatpush1.bf16.msra.mxu0 0
  %731 = vmatprep.subr.bf16.mxu0 0
  %732 = vmatpush1.bf16.msra.mxu0 %v713
  %733 = vmatprep.subr.bf16.mxu0 0
  %734 = vmatpush1.bf16.msra.mxu0 %v712
  %735 = vmatprep.subr.bf16.mxu0 0
  %736 = vmatpush2.bf16.msra.mxu0 0
  %737 = vmatprep.subr.bf16.mxu0 0
  %738 = vmatpush2.bf16.msra.mxu0 0
  %739 = vmatprep.subr.bf16.mxu0 0
  %740 = vmatpush2.bf16.msra.mxu0 0
  %741 = vmatprep.subr.bf16.mxu0 0
  %742 = vmatpush2.bf16.msra.mxu0 0
  %743 = vmatprep.subr.bf16.mxu0 0
  %744 = vmatpush2.bf16.msra.mxu0 0
  %745 = vmatprep.subr.bf16.mxu0 0
  %746 = vmatpush2.bf16.msra.mxu0 0
  %747 = vmatprep.subr.bf16.mxu0 0
  %748 = vmatpush2.bf16.msra.mxu0 0
  %749 = vmatprep.subr.bf16.mxu0 0
  %750 = vmatpush2.bf16.msra.mxu0 0
  %751 = vmatprep.mubr.bf16.mxu0 0
  %752 = vmatmul.mubr.bf16.gmra.mxu0 %v717
  %v753 = vpop.f32.mrf.mxu0
  %v754 = vadd.f32 %v697, %v753
  %v755 = vpop.f32.mrf.mxu0
  %v756 = vpop.f32.mrf.mxu0
  %v757 = vadd.f32 %v697, %v756
  %v758 = vpop.f32.mrf.mxu0
  %759 = vdwg.mxu0
  %v760 = vadd.f32 %v754, %v682
  %v761 = vadd.f32 %v757, %v683
  %v762 = vsel %vm74, %v760, 0.0
  %763 = vadd.xlane.f32.xlu0 %v762
  %v764 = vpop.xlane.xlu0 %763
  %v765 = vsel %vm74, %v761, 0.0
  %766 = vadd.xlane.f32.xlu0 %v765
  %v767 = vpop.xlane.xlu0 %766
  %v768 = vrcp.pop 32.0
  %v769 = vmul.f32 %v764, %v768
  %v770 = vmul.f32 %v767, %v768
  %v771 = vsub.f32 %v760, %v769
  %v772 = vsub.f32 %v761, %v770
  %v773 = vmul.f32 %v771, %v771
  %v774 = vmul.f32 %v772, %v772
  %v775 = vsel %vm74, %v773, 0.0
  %776 = vadd.xlane.f32.xlu0 %v775
  %v777 = vpop.xlane.xlu0 %776
  %v778 = vsel %vm74, %v774, 0.0
  %779 = vadd.xlane.f32.xlu0 %v778
  %v780 = vpop.xlane.xlu0 %779
  %v781 = vmul.f32 %v777, %v768
  %v782 = vmul.f32 %v780, %v768
  %v783 = vadd.f32 %v781, 1e-05
  %v784 = vadd.f32 %v782, 1e-05
  %v785 = vrsqrt.pop %v783
  %v786 = vrsqrt.pop %v784
  %v787 = vmul.f32 %v771, %v785
  %v788 = vmul.f32 %v772, %v786
  %v789 = vld [vmem:[%s10] sm:$0x1]
  %v791 = vlaneseq
  %v792 = vshrl.u32 %v791, 7
  %v793 = vsub.s32 0, %v792
  %v794 = vrot.slane %v789, %v793
  %v796 = vmul.f32 %v787, %v794
  %v797 = vmul.f32 %v788, %v794
  %v798 = vld [vmem:[%s11] sm:$0x1]
  %v800 = vlaneseq
  %v801 = vshrl.u32 %v800, 7
  %v802 = vsub.s32 0, %v801
  %v803 = vrot.slane %v798, %v802
  %v805 = vadd.f32 %v796, %v803
  %v806 = vadd.f32 %v797, %v803
  %808 = vset.pattern.permute.xlu0 0
  %809 = vperm.xlu0 %808, %v684
  %v810 = vpop.permute.xlu0 %809
  %813 = vset.pattern.permute.xlu0 0
  %814 = vperm.xlu0 %813, %v685
  %v815 = vpop.permute.xlu0 %814
  %v817 = vmul.f32 %v805, %v810
  %v818 = vmul.f32 %v806, %v815
  %v819 = vpack.c.bf16 %v817, %v817
  %v820 = vpack.c.bf16 %v818, %v818
  %vm821 = vcmask 257024
  %822 = vst.msk [vmem:[%s12] sm:$0xf] %vm821, %v819
  %823 = vst.msk [vmem:[%s12 + $0x4] sm:$0xf] %vm821, %v820
  // Predicated region
  $region50: #{transformer_forward.19} parent=0 // pred_check
    _
  $region51: #{transformer_forward.19} parent=0 // pred_check_branch
    %825 = sbr.rel (0) target = $region53
  $region52: #{transformer_forward.19} parent=0 // pred_region
    _
  $region53: #{transformer_forward.19} parent=0 // pred_fallthru
    _
  // Predicated region
  $region54: #{transformer_forward.19} parent=0 // pred_check
    _
  $region55: #{transformer_forward.19} parent=0 // pred_check_branch
    %827 = sbr.rel (0) target = $region57
  $region56: #{transformer_forward.19} parent=0 // pred_region
    _
  $region57: #{transformer_forward.19} parent=0 // pred_fallthru
    _

</llo_original>
